<compile_context>
chip_gen: v7x
topology: tpu7x:2x2x1
jax: 0.10.0
libtpu: 0.0.40
codegen_flags: <defaults>
</compile_context>

<pallas_src>
import numpy as np
import jax
import jax.numpy as jnp
from jax import lax
from jax.experimental import pallas as pl
from jax.experimental.pallas import tpu as pltpu


# Matmul / im2col-patch dtype.  f32 keeps the built-in correctness check tight
# (these toy shapes are launch/latency bound anyway); on v6e/v7x set this to
# jnp.bfloat16 (weights are pre-cast at pack time, patch scratch shrinks 2x,
# MXU rate ~2x) and relax the test tolerance.  Accumulation is always f32.
MXU_DTYPE = jnp.float32


# ----------------------------------------------------------------------------
# Fused InceptionX kernel (B batch images per grid step)
# ----------------------------------------------------------------------------
def _inception_kernel(x_ref, w1_ref, s1_ref, b1_ref, w2_ref, s2_ref, b2_ref,
                      o_ref, xp1_ref, xp2_ref, p1_ref, p2_ref):
    """B batch elements of InceptionX, fully fused in VMEM.

    x_ref : (B, H, W, Cin)                 input block (NHWC)
    w1_ref: (25*Cin, 32+Cin)               [b3_1(3x3 pad to 5x5) | b5 | avgpool]
    s1/b1 : (1, 32)                        folded BN scale / bias for stage 1
    w2_ref: (9*(16+Cin), 32+PF)            block-diag [b3_2 | branch_pool conv]
    s2/b2 : (1, 32+PF)                     folded BN scale / bias for stage 2
    o_ref : (B*H*W, 32+16+PF)              channel-concat output rows
    xp1_ref: VMEM (B, H+4, W+4, Cin)       pad-2 copy of x
    xp2_ref: VMEM (B, H+2, W+2, 16+Cin)    pad-1 stage-2 input
    p1_ref : VMEM (B*H*W, 25*Cin)          stage-1 im2col patches
    p2_ref : VMEM (B*H*W, 9*(16+Cin))      stage-2 im2col patches
    """
    B, H, W, Cin = x_ref.shape
    M = B * H * W
    C2in = xp2_ref.shape[-1]          # 16 + Cin
    f32 = jnp.float32

    # ---- pad-2 copy of x: zero only the border strips (every element of the
    #      buffer is rewritten each step -> safe under any megacore grid split)
    zr1 = jnp.zeros((B, 2, W + 4, Cin), f32)
    zc1 = jnp.zeros((B, H, 2, Cin), f32)
    xp1_ref[:, 0:2] = zr1
    xp1_ref[:, H + 2:H + 4] = zr1
    xp1_ref[:, 2:2 + H, 0:2] = zc1
    xp1_ref[:, 2:2 + H, W + 2:W + 4] = zc1
    xp1_ref[:, 2:2 + H, 2:2 + W] = x_ref[...].astype(f32)
    xp1 = xp1_ref[...]

    # ---- stage-1 im2col: one wide (M, 5*Cin) slab store per kh --------------
    for kh in range(5):
        slab = jnp.concatenate(
            [xp1[:, kh:kh + H, kw:kw + W, :] for kw in range(5)], axis=-1)
        p1_ref[:, kh * 5 * Cin:(kh + 1) * 5 * Cin] = (
            slab.reshape(M, 5 * Cin).astype(p1_ref.dtype))

    # ---- stage 1: ONE matmul -> [bn_relu(b3_1) | bn_relu(b5) | avgpool(x)] --
    acc1 = jnp.dot(p1_ref[...], w1_ref[...], preferred_element_type=f32)
    y1 = jnp.maximum(acc1[:, :32] * s1_ref[...] + b1_ref[...], 0.0)   # (M, 32)
    pooled = acc1[:, 32:]             # (M, Cin): folded avg-pool, no BN/ReLU

    # ---- stage-2 input: concat([relu(b3_1), pooled x]) with pad-1 zeros -----
    zr2 = jnp.zeros((B, 1, W + 2, C2in), f32)
    zc2 = jnp.zeros((B, H, 1, C2in), f32)
    xp2_ref[:, 0:1] = zr2
    xp2_ref[:, H + 1:H + 2] = zr2
    xp2_ref[:, 1:1 + H, 0:1] = zc2
    xp2_ref[:, 1:1 + H, W + 1:W + 2] = zc2
    xp2_ref[:, 1:1 + H, 1:1 + W, :16] = y1[:, :16].reshape(B, H, W, 16)
    xp2_ref[:, 1:1 + H, 1:1 + W, 16:] = pooled.reshape(B, H, W, Cin)
    xp2 = xp2_ref[...]

    # ---- stage-2 im2col: one wide (M, 3*C2in) slab store per kh -------------
    for kh in range(3):
        slab = jnp.concatenate(
            [xp2[:, kh:kh + H, kw:kw + W, :] for kw in range(3)], axis=-1)
        p2_ref[:, kh * 3 * C2in:(kh + 1) * 3 * C2in] = (
            slab.reshape(M, 3 * C2in).astype(p2_ref.dtype))

    # ---- stage 2: ONE matmul -> [bn_relu(b3_2) | bn_relu(branch_pool)] ------
    acc2 = jnp.dot(p2_ref[...], w2_ref[...], preferred_element_type=f32)
    y2 = jnp.maximum(acc2 * s2_ref[...] + b2_ref[...], 0.0)          # (M, 32+PF)

    # ---- single concatenated store in torch order [b3, b5, pool] ------------
    o_ref[...] = jnp.concatenate(
        [y2[:, :32], y1[:, 16:32], y2[:, 32:]], axis=-1).astype(o_ref.dtype)


# ----------------------------------------------------------------------------
# Wrapper
# ----------------------------------------------------------------------------
_RESIDENT = pl.BlockSpec(memory_space=pltpu.MemorySpace.VMEM)  # whole-array VMEM


def _pick_batch_block(n):
    """Batch images per grid step; keep >=4 grid steps (>=2 per TC on v7x)."""
    for b in (8, 4, 2):
        if n % b == 0 and n // b >= 4:
            return b
    return 1


def inception_x(x_nchw, packed, batch_block=None):
    N, Cin, H, W = x_nchw.shape
    x = jnp.transpose(x_nchw, (0, 2, 3, 1))          # NCHW -> NHWC (tiny input)
    C2in = packed["w2"].shape[0] // 9                # 16 + Cin
    C2out = packed["w2"].shape[1]                    # 32 + pool_features
    Ctot = 16 + C2out                                # 32 + 16 + pool_features
    B = _pick_batch_block(N) if batch_block is None else batch_block
    assert N % B == 0

    out2d = pl.pallas_call(
        _inception_kernel,
        out_shape=jax.ShapeDtypeStruct((N * H * W, Ctot), x.dtype),
        grid_spec=pltpu.PrefetchScalarGridSpec(
            num_scalar_prefetch=0,
            grid=(N // B,),
            in_specs=[
                pl.BlockSpec((B, H, W, Cin), lambda n: (n, 0, 0, 0)),
                _RESIDENT, _RESIDENT, _RESIDENT,      # w1, s1, b1
                _RESIDENT, _RESIDENT, _RESIDENT,      # w2, s2, b2
            ],
            out_specs=pl.BlockSpec((B * H * W, Ctot), lambda n: (n, 0)),
            scratch_shapes=[
                pltpu.VMEM((B, H + 4, W + 4, Cin), jnp.float32),   # pad-2 x
                pltpu.VMEM((B, H + 2, W + 2, C2in), jnp.float32),  # pad-1 stage-2
                pltpu.VMEM((B * H * W, 25 * Cin), MXU_DTYPE),      # stage-1 im2col
                pltpu.VMEM((B * H * W, 9 * C2in), MXU_DTYPE),      # stage-2 im2col
            ],
        ),
        compiler_params=pltpu.CompilerParams(
            dimension_semantics=("parallel",)),
    )(x, packed["w1"], packed["s1"], packed["b1"],
      packed["w2"], packed["s2"], packed["b2"])

    out = out2d.reshape(N, H, W, Ctot)
    # TODO(synk): emitting (Ctot, H*W) per image inside the kernel would delete
    # this HBM transpose; kept here because a materialized in-kernel transpose
    # of a (H*W, 56) tile is not reliably supported by Mosaic lowering.
    return jnp.transpose(out, (0, 3, 1, 2))          # NHWC -> NCHW


# ----------------------------------------------------------------------------
# Parameters (deterministic, synthetic) and packing for the fused kernel
# ----------------------------------------------------------------------------
def make_basic_conv_params(key, cin, cout, k):
    """Conv2d(no bias) + BatchNorm2d(eps=1e-3), BN folded to scale/bias.

    # TODO(synk): BatchNorm is reproduced in inference mode (running stats
    # folded into an affine); PyTorch training-mode batch statistics are not.
    """
    kw_, kg, kb, km, kv = jax.random.split(key, 5)
    fan_in = cin * k * k
    w_oihw = jax.random.normal(kw_, (cout, cin, k, k), jnp.float32) / np.sqrt(fan_in)
    gamma = 1.0 + 0.1 * jax.random.normal(kg, (cout,), jnp.float32)
    beta = 0.1 * jax.random.normal(kb, (cout,), jnp.float32)
    running_mean = 0.1 * jax.random.normal(km, (cout,), jnp.float32)
    running_var = jnp.abs(jax.random.normal(kv, (cout,), jnp.float32)) + 0.5
    eps = 1e-3
    scale = gamma / jnp.sqrt(running_var + eps)
    bias = beta - running_mean * scale
    return dict(
        w_oihw=w_oihw,                                  # PyTorch layout (O,I,Kh,Kw)
        w_kkio=jnp.transpose(w_oihw, (2, 3, 1, 0)),     # kernel layout (Kh,Kw,I,O)
        scale=scale,
        bias=bias,
    )


def pack_inception_params(params):
    """Stack per-branch weights into the two fused im2col weight matrices."""
    w_b31 = params["b3_1"]["w_kkio"]                    # (3,3,Cin,16)
    w_b5 = params["b5"]["w_kkio"]                       # (5,5,Cin,16)
    w_b32 = params["b3_2"]["w_kkio"]                    # (3,3,16,32)
    w_bp = params["bp"]["w_kkio"]                       # (3,3,Cin,PF)
    Cin = w_b31.shape[2]
    PF = w_bp.shape[3]

    # stage 1: one 5x5 conv over x -> [b3_1 (16) | b5 (16) | avgpool3x3 (Cin)]
    #  * b3_1's 3x3 kernel is zero-padded to 5x5
    #  * the 3x3 avg-pool (count_include_pad, zero pad) is folded in as Cin
    #    extra columns: 1/9 on the centre 3x3 taps of each input channel.
    #    These columns bypass BN/ReLU inside the kernel.
    w_b31_5 = jnp.pad(w_b31, ((1, 1), (1, 1), (0, 0), (0, 0)))
    eye9 = jnp.eye(Cin, dtype=jnp.float32) / 9.0
    w_pool = jnp.zeros((5, 5, Cin, Cin), jnp.float32)
    w_pool = w_pool.at[1:4, 1:4].set(jnp.broadcast_to(eye9, (3, 3, Cin, Cin)))
    w1 = jnp.concatenate([w_b31_5, w_b5, w_pool], axis=-1).reshape(25 * Cin, 32 + Cin)
    s1 = jnp.concatenate([params["b3_1"]["scale"], params["b5"]["scale"]]).reshape(1, 32)
    b1 = jnp.concatenate([params["b3_1"]["bias"], params["b5"]["bias"]]).reshape(1, 32)

    # stage 2: one 3x3 conv over concat([relu(b3_1), avgpool(x)]) (16+Cin ch)
    #          with block-diagonal weights -> [b3_2 (32) | branch_pool (PF)]
    C2in, C2out = 16 + Cin, 32 + PF
    w2 = jnp.zeros((3, 3, C2in, C2out), jnp.float32)
    w2 = w2.at[:, :, :16, :32].set(w_b32)
    w2 = w2.at[:, :, 16:, 32:].set(w_bp)
    w2 = w2.reshape(9 * C2in, C2out)
    s2 = jnp.concatenate([params["b3_2"]["scale"], params["bp"]["scale"]]).reshape(1, C2out)
    b2 = jnp.concatenate([params["b3_2"]["bias"], params["bp"]["bias"]]).reshape(1, C2out)

    # pre-cast matmul weights so the kernel has no per-step casts on residents
    return dict(w1=w1.astype(MXU_DTYPE), s1=s1, b1=b1,
                w2=w2.astype(MXU_DTYPE), s2=s2, b2=b2)


# ----------------------------------------------------------------------------
# Pure-JAX reference (for correctness check)
# ----------------------------------------------------------------------------
def _ref_conv_bn_relu(x_nchw, p, pad):
    y = lax.conv_general_dilated(
        x_nchw, p["w_oihw"], (1, 1), [(pad, pad), (pad, pad)],
        dimension_numbers=("NCHW", "OIHW", "NCHW"))
    y = y * p["scale"][None, :, None, None] + p["bias"][None, :, None, None]
    return jnp.maximum(y, 0.0)


def _ref_avgpool3(x_nchw):
    s = lax.reduce_window(x_nchw, 0.0, lax.add, (1, 1, 3, 3), (1, 1, 1, 1),
                          [(0, 0), (0, 0), (1, 1), (1, 1)])
    return s / 9.0


def _ref_inception(x, params):
    b3 = _ref_conv_bn_relu(_ref_conv_bn_relu(x, params["b3_1"], 1),
                           params["b3_2"], 1)
    b5 = _ref_conv_bn_relu(x, params["b5"], 2)
    bp = _ref_conv_bn_relu(_ref_avgpool3(x), params["bp"], 1)
    return jnp.concatenate([b3, b5, bp], axis=1)


# ----------------------------------------------------------------------------
if __name__ == "__main__":
    key = jax.random.PRNGKey(0)
    kx, k1, k2, k3, k4 = jax.random.split(key, 5)

    in_channels, pool_features = 4, 8
    N, H, W = 2, 16, 16

    x = jax.random.normal(kx, (N, in_channels, H, W), jnp.float32)

    params = {
        "b3_1": make_basic_conv_params(k1, in_channels, 16, 3),
        "b3_2": make_basic_conv_params(k2, 16, 32, 3),
        "b5":   make_basic_conv_params(k3, in_channels, 16, 5),
        "bp":   make_basic_conv_params(k4, in_channels, pool_features, 3),
    }
    packed = pack_inception_params(params)

    out = jax.jit(inception_x)(x, packed)
    out = jax.block_until_ready(out)

    assert out.shape == (N, 32 + 16 + pool_features, H, W), out.shape

    ref = _ref_inception(x, params)
    np.testing.assert_allclose(np.asarray(out), np.asarray(ref),
                               rtol=2e-3, atol=2e-3)

    print("KERNEL_OK")
</pallas_src>

<mosaic_0001>
module attributes {stable_mosaic.version = 11 : i64} {
  func.func @_inception_kernel(%arg0: i32, %arg1: memref<1x16x16x4xf32, #tpu.memory_space<vmem>>, %arg2: memref<100x36xf32, #tpu.memory_space<vmem>>, %arg3: memref<1x32xf32, #tpu.memory_space<vmem>>, %arg4: memref<1x32xf32, #tpu.memory_space<vmem>>, %arg5: memref<180x40xf32, #tpu.memory_space<vmem>>, %arg6: memref<1x40xf32, #tpu.memory_space<vmem>>, %arg7: memref<1x40xf32, #tpu.memory_space<vmem>>, %arg8: memref<256x56xf32, #tpu.memory_space<vmem>>, %arg9: memref<1x20x20x4xf32, #tpu.memory_space<vmem>>, %arg10: memref<1x18x18x20xf32, #tpu.memory_space<vmem>>, %arg11: memref<256x100xf32, #tpu.memory_space<vmem>>, %arg12: memref<256x180xf32, #tpu.memory_space<vmem>>) attributes {dimension_semantics = [#tpu.dimension_semantics<parallel>], iteration_bounds = array<i64: 2>, scalar_prefetch = 0 : i64, scratch_operands = 4 : i64, tpu.core_type = #tpu.core_type<tc>, window_params = [{transform_indices = @transform_0, window_bounds = array<i64: 1, 16, 16, 4>}, {pipeline_mode = #tpu.pipeline_mode<synchronous>, transform_indices = @transform_1, window_bounds = array<i64: 100, 36>}, {pipeline_mode = #tpu.pipeline_mode<synchronous>, transform_indices = @transform_2, window_bounds = array<i64: 1, 32>}, {pipeline_mode = #tpu.pipeline_mode<synchronous>, transform_indices = @transform_3, window_bounds = array<i64: 1, 32>}, {pipeline_mode = #tpu.pipeline_mode<synchronous>, transform_indices = @transform_4, window_bounds = array<i64: 180, 40>}, {pipeline_mode = #tpu.pipeline_mode<synchronous>, transform_indices = @transform_5, window_bounds = array<i64: 1, 40>}, {pipeline_mode = #tpu.pipeline_mode<synchronous>, transform_indices = @transform_6, window_bounds = array<i64: 1, 40>}, {transform_indices = @transform_7, window_bounds = array<i64: 256, 56>}]} {
    %cst = arith.constant 0.000000e+00 : f32
    %0 = vector.broadcast %cst : f32 to vector<1x2x20x4xf32>
    %cst_0 = arith.constant 0.000000e+00 : f32
    %1 = vector.broadcast %cst_0 : f32 to vector<1x16x2x4xf32>
    %c0 = arith.constant 0 : index
    %c0_1 = arith.constant 0 : index
    %c0_2 = arith.constant 0 : index
    %c0_3 = arith.constant 0 : index
    %2 = vector.load %arg9[%c0, %c0_1, %c0_2, %c0_3] : memref<1x20x20x4xf32, #tpu.memory_space<vmem>>, vector<1x2x20x4xf32>
    tpu.vector_store %arg9[%c0, %c0_1, %c0_2, %c0_3], %0 {strides = array<i32>} : memref<1x20x20x4xf32, #tpu.memory_space<vmem>>, vector<1x2x20x4xf32>,
    %c0_4 = arith.constant 0 : index
    %c18 = arith.constant 18 : index
    %c0_5 = arith.constant 0 : index
    %c0_6 = arith.constant 0 : index
    %3 = vector.load %arg9[%c0_4, %c18, %c0_5, %c0_6] : memref<1x20x20x4xf32, #tpu.memory_space<vmem>>, vector<1x2x20x4xf32>
    tpu.vector_store %arg9[%c0_4, %c18, %c0_5, %c0_6], %0 {strides = array<i32>} : memref<1x20x20x4xf32, #tpu.memory_space<vmem>>, vector<1x2x20x4xf32>,
    %c0_7 = arith.constant 0 : index
    %c2 = arith.constant 2 : index
    %c0_8 = arith.constant 0 : index
    %c0_9 = arith.constant 0 : index
    %4 = vector.load %arg9[%c0_7, %c2, %c0_8, %c0_9] : memref<1x20x20x4xf32, #tpu.memory_space<vmem>>, vector<1x16x2x4xf32>
    tpu.vector_store %arg9[%c0_7, %c2, %c0_8, %c0_9], %1 {strides = array<i32>} : memref<1x20x20x4xf32, #tpu.memory_space<vmem>>, vector<1x16x2x4xf32>,
    %c0_10 = arith.constant 0 : index
    %c2_11 = arith.constant 2 : index
    %c18_12 = arith.constant 18 : index
    %c0_13 = arith.constant 0 : index
    %5 = vector.load %arg9[%c0_10, %c2_11, %c18_12, %c0_13] : memref<1x20x20x4xf32, #tpu.memory_space<vmem>>, vector<1x16x2x4xf32>
    tpu.vector_store %arg9[%c0_10, %c2_11, %c18_12, %c0_13], %1 {strides = array<i32>} : memref<1x20x20x4xf32, #tpu.memory_space<vmem>>, vector<1x16x2x4xf32>,
    %c0_14 = arith.constant 0 : index
    %c0_15 = arith.constant 0 : index
    %c0_16 = arith.constant 0 : index
    %c0_17 = arith.constant 0 : index
    %6 = vector.load %arg1[%c0_14, %c0_15, %c0_16, %c0_17] : memref<1x16x16x4xf32, #tpu.memory_space<vmem>>, vector<1x16x16x4xf32>
    %c0_18 = arith.constant 0 : index
    %c2_19 = arith.constant 2 : index
    %c2_20 = arith.constant 2 : index
    %c0_21 = arith.constant 0 : index
    %7 = vector.load %arg9[%c0_18, %c2_19, %c2_20, %c0_21] : memref<1x20x20x4xf32, #tpu.memory_space<vmem>>, vector<1x16x16x4xf32>
    tpu.vector_store %arg9[%c0_18, %c2_19, %c2_20, %c0_21], %6 {strides = array<i32>} : memref<1x20x20x4xf32, #tpu.memory_space<vmem>>, vector<1x16x16x4xf32>,
    %c0_22 = arith.constant 0 : index
    %c0_23 = arith.constant 0 : index
    %c0_24 = arith.constant 0 : index
    %c0_25 = arith.constant 0 : index
    %8 = vector.load %arg9[%c0_22, %c0_23, %c0_24, %c0_25] : memref<1x20x20x4xf32, #tpu.memory_space<vmem>>, vector<1x20x20x4xf32>
    %9 = vector.extract_strided_slice %8 {offsets = [0, 0, 0, 0], sizes = [1, 16, 16, 4], strides = [1, 1, 1, 1]} : vector<1x20x20x4xf32> to vector<1x16x16x4xf32>
    %10 = vector.extract_strided_slice %8 {offsets = [0, 0, 1, 0], sizes = [1, 16, 16, 4], strides = [1, 1, 1, 1]} : vector<1x20x20x4xf32> to vector<1x16x16x4xf32>
    %11 = vector.extract_strided_slice %8 {offsets = [0, 0, 2, 0], sizes = [1, 16, 16, 4], strides = [1, 1, 1, 1]} : vector<1x20x20x4xf32> to vector<1x16x16x4xf32>
    %12 = vector.extract_strided_slice %8 {offsets = [0, 0, 3, 0], sizes = [1, 16, 16, 4], strides = [1, 1, 1, 1]} : vector<1x20x20x4xf32> to vector<1x16x16x4xf32>
    %13 = vector.extract_strided_slice %8 {offsets = [0, 0, 4, 0], sizes = [1, 16, 16, 4], strides = [1, 1, 1, 1]} : vector<1x20x20x4xf32> to vector<1x16x16x4xf32>
    %14 = tpu.concatenate %9, %10, %11, %12, %13 in 3 : vector<1x16x16x4xf32>, vector<1x16x16x4xf32>, vector<1x16x16x4xf32>, vector<1x16x16x4xf32>, vector<1x16x16x4xf32> -> vector<1x16x16x20xf32>
    %15 = vector.shape_cast %14 : vector<1x16x16x20xf32> to vector<256x20xf32>
    %c0_26 = arith.constant 0 : index
    %c0_27 = arith.constant 0 : index
    %16 = vector.load %arg11[%c0_26, %c0_27] : memref<256x100xf32, #tpu.memory_space<vmem>>, vector<256x20xf32>
    tpu.vector_store %arg11[%c0_26, %c0_27], %15 {strides = array<i32>} : memref<256x100xf32, #tpu.memory_space<vmem>>, vector<256x20xf32>,
    %17 = vector.extract_strided_slice %8 {offsets = [0, 1, 0, 0], sizes = [1, 16, 16, 4], strides = [1, 1, 1, 1]} : vector<1x20x20x4xf32> to vector<1x16x16x4xf32>
    %18 = vector.extract_strided_slice %8 {offsets = [0, 1, 1, 0], sizes = [1, 16, 16, 4], strides = [1, 1, 1, 1]} : vector<1x20x20x4xf32> to vector<1x16x16x4xf32>
    %19 = vector.extract_strided_slice %8 {offsets = [0, 1, 2, 0], sizes = [1, 16, 16, 4], strides = [1, 1, 1, 1]} : vector<1x20x20x4xf32> to vector<1x16x16x4xf32>
    %20 = vector.extract_strided_slice %8 {offsets = [0, 1, 3, 0], sizes = [1, 16, 16, 4], strides = [1, 1, 1, 1]} : vector<1x20x20x4xf32> to vector<1x16x16x4xf32>
    %21 = vector.extract_strided_slice %8 {offsets = [0, 1, 4, 0], sizes = [1, 16, 16, 4], strides = [1, 1, 1, 1]} : vector<1x20x20x4xf32> to vector<1x16x16x4xf32>
    %22 = tpu.concatenate %17, %18, %19, %20, %21 in 3 : vector<1x16x16x4xf32>, vector<1x16x16x4xf32>, vector<1x16x16x4xf32>, vector<1x16x16x4xf32>, vector<1x16x16x4xf32> -> vector<1x16x16x20xf32>
    %23 = vector.shape_cast %22 : vector<1x16x16x20xf32> to vector<256x20xf32>
    %c0_28 = arith.constant 0 : index
    %c20 = arith.constant 20 : index
    %24 = vector.load %arg11[%c0_28, %c20] : memref<256x100xf32, #tpu.memory_space<vmem>>, vector<256x20xf32>
    tpu.vector_store %arg11[%c0_28, %c20], %23 {strides = array<i32>} : memref<256x100xf32, #tpu.memory_space<vmem>>, vector<256x20xf32>,
    %25 = vector.extract_strided_slice %8 {offsets = [0, 2, 0, 0], sizes = [1, 16, 16, 4], strides = [1, 1, 1, 1]} : vector<1x20x20x4xf32> to vector<1x16x16x4xf32>
    %26 = vector.extract_strided_slice %8 {offsets = [0, 2, 1, 0], sizes = [1, 16, 16, 4], strides = [1, 1, 1, 1]} : vector<1x20x20x4xf32> to vector<1x16x16x4xf32>
    %27 = vector.extract_strided_slice %8 {offsets = [0, 2, 2, 0], sizes = [1, 16, 16, 4], strides = [1, 1, 1, 1]} : vector<1x20x20x4xf32> to vector<1x16x16x4xf32>
    %28 = vector.extract_strided_slice %8 {offsets = [0, 2, 3, 0], sizes = [1, 16, 16, 4], strides = [1, 1, 1, 1]} : vector<1x20x20x4xf32> to vector<1x16x16x4xf32>
    %29 = vector.extract_strided_slice %8 {offsets = [0, 2, 4, 0], sizes = [1, 16, 16, 4], strides = [1, 1, 1, 1]} : vector<1x20x20x4xf32> to vector<1x16x16x4xf32>
    %30 = tpu.concatenate %25, %26, %27, %28, %29 in 3 : vector<1x16x16x4xf32>, vector<1x16x16x4xf32>, vector<1x16x16x4xf32>, vector<1x16x16x4xf32>, vector<1x16x16x4xf32> -> vector<1x16x16x20xf32>
    %31 = vector.shape_cast %30 : vector<1x16x16x20xf32> to vector<256x20xf32>
    %c0_29 = arith.constant 0 : index
    %c40 = arith.constant 40 : index
    %32 = vector.load %arg11[%c0_29, %c40] : memref<256x100xf32, #tpu.memory_space<vmem>>, vector<256x20xf32>
    tpu.vector_store %arg11[%c0_29, %c40], %31 {strides = array<i32>} : memref<256x100xf32, #tpu.memory_space<vmem>>, vector<256x20xf32>,
    %33 = vector.extract_strided_slice %8 {offsets = [0, 3, 0, 0], sizes = [1, 16, 16, 4], strides = [1, 1, 1, 1]} : vector<1x20x20x4xf32> to vector<1x16x16x4xf32>
    %34 = vector.extract_strided_slice %8 {offsets = [0, 3, 1, 0], sizes = [1, 16, 16, 4], strides = [1, 1, 1, 1]} : vector<1x20x20x4xf32> to vector<1x16x16x4xf32>
    %35 = vector.extract_strided_slice %8 {offsets = [0, 3, 2, 0], sizes = [1, 16, 16, 4], strides = [1, 1, 1, 1]} : vector<1x20x20x4xf32> to vector<1x16x16x4xf32>
    %36 = vector.extract_strided_slice %8 {offsets = [0, 3, 3, 0], sizes = [1, 16, 16, 4], strides = [1, 1, 1, 1]} : vector<1x20x20x4xf32> to vector<1x16x16x4xf32>
    %37 = vector.extract_strided_slice %8 {offsets = [0, 3, 4, 0], sizes = [1, 16, 16, 4], strides = [1, 1, 1, 1]} : vector<1x20x20x4xf32> to vector<1x16x16x4xf32>
    %38 = tpu.concatenate %33, %34, %35, %36, %37 in 3 : vector<1x16x16x4xf32>, vector<1x16x16x4xf32>, vector<1x16x16x4xf32>, vector<1x16x16x4xf32>, vector<1x16x16x4xf32> -> vector<1x16x16x20xf32>
    %39 = vector.shape_cast %38 : vector<1x16x16x20xf32> to vector<256x20xf32>
    %c0_30 = arith.constant 0 : index
    %c60 = arith.constant 60 : index
    %40 = vector.load %arg11[%c0_30, %c60] : memref<256x100xf32, #tpu.memory_space<vmem>>, vector<256x20xf32>
    tpu.vector_store %arg11[%c0_30, %c60], %39 {strides = array<i32>} : memref<256x100xf32, #tpu.memory_space<vmem>>, vector<256x20xf32>,
    %41 = vector.extract_strided_slice %8 {offsets = [0, 4, 0, 0], sizes = [1, 16, 16, 4], strides = [1, 1, 1, 1]} : vector<1x20x20x4xf32> to vector<1x16x16x4xf32>
    %42 = vector.extract_strided_slice %8 {offsets = [0, 4, 1, 0], sizes = [1, 16, 16, 4], strides = [1, 1, 1, 1]} : vector<1x20x20x4xf32> to vector<1x16x16x4xf32>
    %43 = vector.extract_strided_slice %8 {offsets = [0, 4, 2, 0], sizes = [1, 16, 16, 4], strides = [1, 1, 1, 1]} : vector<1x20x20x4xf32> to vector<1x16x16x4xf32>
    %44 = vector.extract_strided_slice %8 {offsets = [0, 4, 3, 0], sizes = [1, 16, 16, 4], strides = [1, 1, 1, 1]} : vector<1x20x20x4xf32> to vector<1x16x16x4xf32>
    %45 = vector.extract_strided_slice %8 {offsets = [0, 4, 4, 0], sizes = [1, 16, 16, 4], strides = [1, 1, 1, 1]} : vector<1x20x20x4xf32> to vector<1x16x16x4xf32>
    %46 = tpu.concatenate %41, %42, %43, %44, %45 in 3 : vector<1x16x16x4xf32>, vector<1x16x16x4xf32>, vector<1x16x16x4xf32>, vector<1x16x16x4xf32>, vector<1x16x16x4xf32> -> vector<1x16x16x20xf32>
    %47 = vector.shape_cast %46 : vector<1x16x16x20xf32> to vector<256x20xf32>
    %c0_31 = arith.constant 0 : index
    %c80 = arith.constant 80 : index
    %48 = vector.load %arg11[%c0_31, %c80] : memref<256x100xf32, #tpu.memory_space<vmem>>, vector<256x20xf32>
    tpu.vector_store %arg11[%c0_31, %c80], %47 {strides = array<i32>} : memref<256x100xf32, #tpu.memory_space<vmem>>, vector<256x20xf32>,
    %c0_32 = arith.constant 0 : index
    %c0_33 = arith.constant 0 : index
    %49 = vector.load %arg11[%c0_32, %c0_33] : memref<256x100xf32, #tpu.memory_space<vmem>>, vector<256x100xf32>
    %c0_34 = arith.constant 0 : index
    %c0_35 = arith.constant 0 : index
    %50 = vector.load %arg2[%c0_34, %c0_35] : memref<100x36xf32, #tpu.memory_space<vmem>>, vector<100x36xf32>
    %cst_36 = arith.constant dense<0.000000e+00> : vector<256x36xf32>
    %51 = tpu.matmul %49, %50, %cst_36 {dimension_numbers = #tpu.dot_dimension_numbers<[1], [0], [0], [1], [0, 0, 1, 1], [], []>} : vector<256x100xf32>, vector<100x36xf32>, vector<256x36xf32> -> vector<256x36xf32>
    %52 = vector.extract_strided_slice %51 {offsets = [0, 0], sizes = [256, 32], strides = [1, 1]} : vector<256x36xf32> to vector<256x32xf32>
    %c0_37 = arith.constant 0 : index
    %c0_38 = arith.constant 0 : index
    %53 = vector.load %arg3[%c0_37, %c0_38] : memref<1x32xf32, #tpu.memory_space<vmem>>, vector<1x32xf32>
    %54 = vector.broadcast %53 : vector<1x32xf32> to vector<256x32xf32>
    %55 = arith.mulf %52, %54 : vector<256x32xf32>
    %c0_39 = arith.constant 0 : index
    %c0_40 = arith.constant 0 : index
    %56 = vector.load %arg4[%c0_39, %c0_40] : memref<1x32xf32, #tpu.memory_space<vmem>>, vector<1x32xf32>
    %57 = vector.broadcast %56 : vector<1x32xf32> to vector<256x32xf32>
    %58 = arith.addf %55, %57 : vector<256x32xf32>
    %cst_41 = arith.constant 0.000000e+00 : f32
    %59 = vector.broadcast %cst_41 : f32 to vector<256x32xf32>
    %60 = arith.maximumf %58, %59 : vector<256x32xf32>
    %61 = vector.extract_strided_slice %51 {offsets = [0, 32], sizes = [256, 4], strides = [1, 1]} : vector<256x36xf32> to vector<256x4xf32>
    %cst_42 = arith.constant 0.000000e+00 : f32
    %62 = vector.broadcast %cst_42 : f32 to vector<1x1x18x20xf32>
    %cst_43 = arith.constant 0.000000e+00 : f32
    %63 = vector.broadcast %cst_43 : f32 to vector<1x16x1x20xf32>
    %c0_44 = arith.constant 0 : index
    %c0_45 = arith.constant 0 : index
    %c0_46 = arith.constant 0 : index
    %c0_47 = arith.constant 0 : index
    %64 = vector.load %arg10[%c0_44, %c0_45, %c0_46, %c0_47] : memref<1x18x18x20xf32, #tpu.memory_space<vmem>>, vector<1x1x18x20xf32>
    tpu.vector_store %arg10[%c0_44, %c0_45, %c0_46, %c0_47], %62 {strides = array<i32>} : memref<1x18x18x20xf32, #tpu.memory_space<vmem>>, vector<1x1x18x20xf32>,
    %c0_48 = arith.constant 0 : index
    %c17 = arith.constant 17 : index
    %c0_49 = arith.constant 0 : index
    %c0_50 = arith.constant 0 : index
    %65 = vector.load %arg10[%c0_48, %c17, %c0_49, %c0_50] : memref<1x18x18x20xf32, #tpu.memory_space<vmem>>, vector<1x1x18x20xf32>
    tpu.vector_store %arg10[%c0_48, %c17, %c0_49, %c0_50], %62 {strides = array<i32>} : memref<1x18x18x20xf32, #tpu.memory_space<vmem>>, vector<1x1x18x20xf32>,
    %c0_51 = arith.constant 0 : index
    %c1 = arith.constant 1 : index
    %c0_52 = arith.constant 0 : index
    %c0_53 = arith.constant 0 : index
    %66 = vector.load %arg10[%c0_51, %c1, %c0_52, %c0_53] : memref<1x18x18x20xf32, #tpu.memory_space<vmem>>, vector<1x16x1x20xf32>
    tpu.vector_store %arg10[%c0_51, %c1, %c0_52, %c0_53], %63 {strides = array<i32>} : memref<1x18x18x20xf32, #tpu.memory_space<vmem>>, vector<1x16x1x20xf32>,
    %c0_54 = arith.constant 0 : index
    %c1_55 = arith.constant 1 : index
    %c17_56 = arith.constant 17 : index
    %c0_57 = arith.constant 0 : index
    %67 = vector.load %arg10[%c0_54, %c1_55, %c17_56, %c0_57] : memref<1x18x18x20xf32, #tpu.memory_space<vmem>>, vector<1x16x1x20xf32>
    tpu.vector_store %arg10[%c0_54, %c1_55, %c17_56, %c0_57], %63 {strides = array<i32>} : memref<1x18x18x20xf32, #tpu.memory_space<vmem>>, vector<1x16x1x20xf32>,
    %68 = vector.extract_strided_slice %60 {offsets = [0, 0], sizes = [256, 16], strides = [1, 1]} : vector<256x32xf32> to vector<256x16xf32>
    %69 = vector.shape_cast %68 : vector<256x16xf32> to vector<1x16x16x16xf32>
    %c0_58 = arith.constant 0 : index
    %c1_59 = arith.constant 1 : index
    %c1_60 = arith.constant 1 : index
    %c0_61 = arith.constant 0 : index
    %70 = vector.load %arg10[%c0_58, %c1_59, %c1_60, %c0_61] : memref<1x18x18x20xf32, #tpu.memory_space<vmem>>, vector<1x16x16x16xf32>
    tpu.vector_store %arg10[%c0_58, %c1_59, %c1_60, %c0_61], %69 {strides = array<i32>} : memref<1x18x18x20xf32, #tpu.memory_space<vmem>>, vector<1x16x16x16xf32>,
    %71 = vector.shape_cast %61 : vector<256x4xf32> to vector<1x16x16x4xf32>
    %c0_62 = arith.constant 0 : index
    %c1_63 = arith.constant 1 : index
    %c1_64 = arith.constant 1 : index
    %c16 = arith.constant 16 : index
    %72 = vector.load %arg10[%c0_62, %c1_63, %c1_64, %c16] : memref<1x18x18x20xf32, #tpu.memory_space<vmem>>, vector<1x16x16x4xf32>
    tpu.vector_store %arg10[%c0_62, %c1_63, %c1_64, %c16], %71 {strides = array<i32>} : memref<1x18x18x20xf32, #tpu.memory_space<vmem>>, vector<1x16x16x4xf32>,
    %c0_65 = arith.constant 0 : index
    %c0_66 = arith.constant 0 : index
    %c0_67 = arith.constant 0 : index
    %c0_68 = arith.constant 0 : index
    %73 = vector.load %arg10[%c0_65, %c0_66, %c0_67, %c0_68] : memref<1x18x18x20xf32, #tpu.memory_space<vmem>>, vector<1x18x18x20xf32>
    %74 = vector.extract_strided_slice %73 {offsets = [0, 0, 0, 0], sizes = [1, 16, 16, 20], strides = [1, 1, 1, 1]} : vector<1x18x18x20xf32> to vector<1x16x16x20xf32>
    %75 = vector.extract_strided_slice %73 {offsets = [0, 0, 1, 0], sizes = [1, 16, 16, 20], strides = [1, 1, 1, 1]} : vector<1x18x18x20xf32> to vector<1x16x16x20xf32>
    %76 = vector.extract_strided_slice %73 {offsets = [0, 0, 2, 0], sizes = [1, 16, 16, 20], strides = [1, 1, 1, 1]} : vector<1x18x18x20xf32> to vector<1x16x16x20xf32>
    %77 = tpu.concatenate %74, %75, %76 in 3 : vector<1x16x16x20xf32>, vector<1x16x16x20xf32>, vector<1x16x16x20xf32> -> vector<1x16x16x60xf32>
    %78 = vector.shape_cast %77 : vector<1x16x16x60xf32> to vector<256x60xf32>
    %c0_69 = arith.constant 0 : index
    %c0_70 = arith.constant 0 : index
    %79 = vector.load %arg12[%c0_69, %c0_70] : memref<256x180xf32, #tpu.memory_space<vmem>>, vector<256x60xf32>
    tpu.vector_store %arg12[%c0_69, %c0_70], %78 {strides = array<i32>} : memref<256x180xf32, #tpu.memory_space<vmem>>, vector<256x60xf32>,
    %80 = vector.extract_strided_slice %73 {offsets = [0, 1, 0, 0], sizes = [1, 16, 16, 20], strides = [1, 1, 1, 1]} : vector<1x18x18x20xf32> to vector<1x16x16x20xf32>
    %81 = vector.extract_strided_slice %73 {offsets = [0, 1, 1, 0], sizes = [1, 16, 16, 20], strides = [1, 1, 1, 1]} : vector<1x18x18x20xf32> to vector<1x16x16x20xf32>
    %82 = vector.extract_strided_slice %73 {offsets = [0, 1, 2, 0], sizes = [1, 16, 16, 20], strides = [1, 1, 1, 1]} : vector<1x18x18x20xf32> to vector<1x16x16x20xf32>
    %83 = tpu.concatenate %80, %81, %82 in 3 : vector<1x16x16x20xf32>, vector<1x16x16x20xf32>, vector<1x16x16x20xf32> -> vector<1x16x16x60xf32>
    %84 = vector.shape_cast %83 : vector<1x16x16x60xf32> to vector<256x60xf32>
    %c0_71 = arith.constant 0 : index
    %c60_72 = arith.constant 60 : index
    %85 = vector.load %arg12[%c0_71, %c60_72] : memref<256x180xf32, #tpu.memory_space<vmem>>, vector<256x60xf32>
    tpu.vector_store %arg12[%c0_71, %c60_72], %84 {strides = array<i32>} : memref<256x180xf32, #tpu.memory_space<vmem>>, vector<256x60xf32>,
    %86 = vector.extract_strided_slice %73 {offsets = [0, 2, 0, 0], sizes = [1, 16, 16, 20], strides = [1, 1, 1, 1]} : vector<1x18x18x20xf32> to vector<1x16x16x20xf32>
    %87 = vector.extract_strided_slice %73 {offsets = [0, 2, 1, 0], sizes = [1, 16, 16, 20], strides = [1, 1, 1, 1]} : vector<1x18x18x20xf32> to vector<1x16x16x20xf32>
    %88 = vector.extract_strided_slice %73 {offsets = [0, 2, 2, 0], sizes = [1, 16, 16, 20], strides = [1, 1, 1, 1]} : vector<1x18x18x20xf32> to vector<1x16x16x20xf32>
    %89 = tpu.concatenate %86, %87, %88 in 3 : vector<1x16x16x20xf32>, vector<1x16x16x20xf32>, vector<1x16x16x20xf32> -> vector<1x16x16x60xf32>
    %90 = vector.shape_cast %89 : vector<1x16x16x60xf32> to vector<256x60xf32>
    %c0_73 = arith.constant 0 : index
    %c120 = arith.constant 120 : index
    %91 = vector.load %arg12[%c0_73, %c120] : memref<256x180xf32, #tpu.memory_space<vmem>>, vector<256x60xf32>
    tpu.vector_store %arg12[%c0_73, %c120], %90 {strides = array<i32>} : memref<256x180xf32, #tpu.memory_space<vmem>>, vector<256x60xf32>,
    %c0_74 = arith.constant 0 : index
    %c0_75 = arith.constant 0 : index
    %92 = vector.load %arg12[%c0_74, %c0_75] : memref<256x180xf32, #tpu.memory_space<vmem>>, vector<256x180xf32>
    %c0_76 = arith.constant 0 : index
    %c0_77 = arith.constant 0 : index
    %93 = vector.load %arg5[%c0_76, %c0_77] : memref<180x40xf32, #tpu.memory_space<vmem>>, vector<180x40xf32>
    %cst_78 = arith.constant dense<0.000000e+00> : vector<256x40xf32>
    %94 = tpu.matmul %92, %93, %cst_78 {dimension_numbers = #tpu.dot_dimension_numbers<[1], [0], [0], [1], [0, 0, 1, 1], [], []>} : vector<256x180xf32>, vector<180x40xf32>, vector<256x40xf32> -> vector<256x40xf32>
    %c0_79 = arith.constant 0 : index
    %c0_80 = arith.constant 0 : index
    %95 = vector.load %arg6[%c0_79, %c0_80] : memref<1x40xf32, #tpu.memory_space<vmem>>, vector<1x40xf32>
    %96 = vector.broadcast %95 : vector<1x40xf32> to vector<256x40xf32>
    %97 = arith.mulf %94, %96 : vector<256x40xf32>
    %c0_81 = arith.constant 0 : index
    %c0_82 = arith.constant 0 : index
    %98 = vector.load %arg7[%c0_81, %c0_82] : memref<1x40xf32, #tpu.memory_space<vmem>>, vector<1x40xf32>
    %99 = vector.broadcast %98 : vector<1x40xf32> to vector<256x40xf32>
    %100 = arith.addf %97, %99 : vector<256x40xf32>
    %cst_83 = arith.constant 0.000000e+00 : f32
    %101 = vector.broadcast %cst_83 : f32 to vector<256x40xf32>
    %102 = arith.maximumf %100, %101 : vector<256x40xf32>
    %103 = vector.extract_strided_slice %102 {offsets = [0, 0], sizes = [256, 32], strides = [1, 1]} : vector<256x40xf32> to vector<256x32xf32>
    %104 = vector.extract_strided_slice %60 {offsets = [0, 16], sizes = [256, 16], strides = [1, 1]} : vector<256x32xf32> to vector<256x16xf32>
    %105 = vector.extract_strided_slice %102 {offsets = [0, 32], sizes = [256, 8], strides = [1, 1]} : vector<256x40xf32> to vector<256x8xf32>
    %106 = tpu.concatenate %103, %104, %105 in 1 : vector<256x32xf32>, vector<256x16xf32>, vector<256x8xf32> -> vector<256x56xf32>
    %c0_84 = arith.constant 0 : index
    %c0_85 = arith.constant 0 : index
    %107 = vector.load %arg8[%c0_84, %c0_85] : memref<256x56xf32, #tpu.memory_space<vmem>>, vector<256x56xf32>
    tpu.vector_store %arg8[%c0_84, %c0_85], %106 {strides = array<i32>} : memref<256x56xf32, #tpu.memory_space<vmem>>, vector<256x56xf32>,
    return
  }
  func.func @transform_0(%arg0: i32) -> (i32, i32, i32, i32) {
    %c0_i32 = arith.constant 0 : i32
    %c0_i32_0 = arith.constant 0 : i32
    %c0_i32_1 = arith.constant 0 : i32
    %c0_i32_2 = arith.constant 0 : i32
    return %arg0, %c0_i32, %c0_i32_0, %c0_i32_1 : i32, i32, i32, i32
  }
  func.func @transform_1(%arg0: i32) -> (i32, i32) {
    %c0_i32 = arith.constant 0 : i32
    %c0_i32_0 = arith.constant 0 : i32
    %c0_i32_1 = arith.constant 0 : i32
    return %c0_i32, %c0_i32_0 : i32, i32
  }
  func.func @transform_2(%arg0: i32) -> (i32, i32) {
    %c0_i32 = arith.constant 0 : i32
    %c0_i32_0 = arith.constant 0 : i32
    %c0_i32_1 = arith.constant 0 : i32
    return %c0_i32, %c0_i32_0 : i32, i32
  }
  func.func @transform_3(%arg0: i32) -> (i32, i32) {
    %c0_i32 = arith.constant 0 : i32
    %c0_i32_0 = arith.constant 0 : i32
    %c0_i32_1 = arith.constant 0 : i32
    return %c0_i32, %c0_i32_0 : i32, i32
  }
  func.func @transform_4(%arg0: i32) -> (i32, i32) {
    %c0_i32 = arith.constant 0 : i32
    %c0_i32_0 = arith.constant 0 : i32
    %c0_i32_1 = arith.constant 0 : i32
    return %c0_i32, %c0_i32_0 : i32, i32
  }
  func.func @transform_5(%arg0: i32) -> (i32, i32) {
    %c0_i32 = arith.constant 0 : i32
    %c0_i32_0 = arith.constant 0 : i32
    %c0_i32_1 = arith.constant 0 : i32
    return %c0_i32, %c0_i32_0 : i32, i32
  }
  func.func @transform_6(%arg0: i32) -> (i32, i32) {
    %c0_i32 = arith.constant 0 : i32
    %c0_i32_0 = arith.constant 0 : i32
    %c0_i32_1 = arith.constant 0 : i32
    return %c0_i32, %c0_i32_0 : i32, i32
  }
  func.func @transform_7(%arg0: i32) -> (i32, i32) {
    %c0_i32 = arith.constant 0 : i32
    %c0_i32_0 = arith.constant 0 : i32
    return %arg0, %c0_i32 : i32, i32
  }
}

</mosaic_0001>

<llo_original>
// kernel: inception_x.1
$region0: #{inception_x.1}
  #allocation0 [shape = 'u32[]', space=smem, size = 0x4, offset = 0x4, fixed_abs, tag = 'smem constant byte address 0x4 - core index']
  #allocation1 [shape = 'u32[144,128]{1,0:T(1,128)}', space=vmem, size = 0x12000, scoped, tag = 'internal scratch']
  #allocation2 [shape = 'f32[1,20,20,4]{3,2,1,0:T(8,128)}', space=vmem, size = 0x3c000, scoped, tag = 'scratch operand']
  #allocation3 [shape = 'f32[1,18,18,20]{3,2,1,0:T(8,128)}', space=vmem, size = 0x36000, scoped, tag = 'scratch operand']
  #allocation4 [shape = 'f32[256,100]{1,0:T(8,128)}', space=vmem, size = 0x20000, scoped, tag = 'scratch operand']
  #allocation5 [shape = 'f32[256,180]{1,0:T(8,128)}', space=vmem, size = 0x40000, scoped, tag = 'scratch operand']
  %s0 = inlined_call_operand.vmem [shape: f32[2,16,16,4], index: 0, kind: input, shape index: {}]
  %s1 = inlined_call_operand.vmem [shape: f32[100,36], index: 1, kind: input, shape index: {}]
  %s2 = inlined_call_operand.vmem [shape: f32[1,32], index: 2, kind: input, shape index: {}]
  %s3 = inlined_call_operand.vmem [shape: f32[1,32], index: 3, kind: input, shape index: {}]
  %s4 = inlined_call_operand.vmem [shape: f32[180,40], index: 4, kind: input, shape index: {}]
  %s5 = inlined_call_operand.vmem [shape: f32[1,40], index: 5, kind: input, shape index: {}]
  %s6 = inlined_call_operand.vmem [shape: f32[1,40], index: 6, kind: input, shape index: {}]
  %s7 = inlined_call_operand.hbm [shape: f32[512,56], index: 7, kind: output, shape index: {}]
  %s8 = sld [smem:[#allocation0]]
  $region61: #{inception_x.1} parent=0
    _
  %s10 = ssub.s32 1, %s8
  %s11 = scalar_select 0, %s10, %s8
  $region1: #{inception_x.1} parent=0
    #allocation6 [shape = 'u8[262144]{0}', space=vmem, size = 0x40000, scoped, tag = 'output window, operand 0']
    #allocation7 [shape = 's32[2]{0}', space=sflag, size = 0x8, scoped, tag = 'scoped memory for inception_x.1']
    %12 = vsyncpa [#allocation7], 0
    %s13 = scalar_lea.sflag [#allocation7], 1
    %14 = vsyncpa %s13, 0
    loop: start=0, step=1, limit=4
    $region2: #{inception_x.1} parent=1 // loop_pre_header
      _
    $region3: #{inception_x.1} parent=1 // loop_header
      %s16 = sphi 0, %s20
      %p17 = scmp.ge.s32.totalorder %s16, 4
      %s26 = sphi 0, %s28
      %s29 = sphi 0, %s26
      %s30 = sphi 0, %s29
      %s46 = sphi 0, %s30
      %s50 = sphi 0, %s50
      %s52 = sphi 0, %s50
      %s53 = sphi 0, %s52
      %s67 = sphi 0, %s53
      %s71 = sphi 0, %s71
      %s73 = sphi 0, %s71
      %s74 = sphi 0, %s73
      %s88 = sphi 0, %s74
      %s92 = sphi 0, %s92
      %s94 = sphi 0, %s92
      %s95 = sphi 0, %s94
      %s109 = sphi 0, %s95
      %s113 = sphi 0, %s113
      %s115 = sphi 0, %s113
      %s116 = sphi 0, %s115
      %s130 = sphi 0, %s116
      %s134 = sphi 0, %s134
      %s136 = sphi 0, %s134
      %s137 = sphi 0, %s136
      %s151 = sphi 0, %s137
      %s155 = sphi 0, %s155
      %s157 = sphi 0, %s155
      %s158 = sphi 0, %s157
      %s172 = sphi 0, %s158
      %s178 = sphi 0, %s180
      %s181 = sphi 0, %s178
      %s182 = sphi 0, %s181
      %s198 = sphi 0, %s182
    $region4: #{inception_x.1} parent=1 // loop_header_branch
      %19 = sbr.rel (%p17) target = $region8
    $region5: #{inception_x.1} parent=1 // loop_body
      %s21 = ssub.s32 %s16, 1
      %s22 = ssub.s32 %s16, 2
      %s23 = sadd.s32 %s16, 1
      %s24 = ssub.s32 %s16, %s23
      %p25 = scmp.eq.s32.totalorder %s24, 0
      %s27 = sadd.s32 %s26, 1
      %s28 = scalar_select %p25, %s26, %s27
      %p31 = pneg %p25
      %p32 = scmp.eq.s32.totalorder %s16, 1
      %p33 = por %p31, %p32
      %p34 = scmp.ne.s32.totalorder %s26, %s29
      %p35 = scmp.eq.s32.totalorder %s16, 0
      %p36 = por %p34, %p35
      %p37 = scmp.ne.s32.totalorder %s26, %s29
      %p38 = scmp.eq.s32.totalorder %s21, 1
      %p39 = por %p37, %p38
      %p40 = scmp.ne.s32.totalorder %s29, %s30
      %p41 = scmp.eq.s32.totalorder %s21, 0
      %p42 = por %p40, %p41
      %p43 = scmp.ne.s32.totalorder %s29, %s30
      %p44 = scmp.eq.s32.totalorder %s22, 1
      %p45 = por %p43, %p44
      %p47 = scmp.ne.s32.totalorder %s30, %s46
      %p48 = scmp.eq.s32.totalorder %s22, 0
      %p49 = por %p47, %p48
      %s51 = sadd.s32 %s50, 1
      %p54 = scmp.eq.s32.totalorder %s16, 1
      %p55 = scmp.ne.s32.totalorder %s50, %s52
      %p56 = scmp.eq.s32.totalorder %s16, 0
      %p57 = por %p55, %p56
      %p58 = scmp.ne.s32.totalorder %s50, %s52
      %p59 = scmp.eq.s32.totalorder %s21, 1
      %p60 = por %p58, %p59
      %p61 = scmp.ne.s32.totalorder %s52, %s53
      %p62 = scmp.eq.s32.totalorder %s21, 0
      %p63 = por %p61, %p62
      %p64 = scmp.ne.s32.totalorder %s52, %s53
      %p65 = scmp.eq.s32.totalorder %s22, 1
      %p66 = por %p64, %p65
      %p68 = scmp.ne.s32.totalorder %s53, %s67
      %p69 = scmp.eq.s32.totalorder %s22, 0
      %p70 = por %p68, %p69
      %s72 = sadd.s32 %s71, 1
      %p75 = scmp.eq.s32.totalorder %s16, 1
      %p76 = scmp.ne.s32.totalorder %s71, %s73
      %p77 = scmp.eq.s32.totalorder %s16, 0
      %p78 = por %p76, %p77
      %p79 = scmp.ne.s32.totalorder %s71, %s73
      %p80 = scmp.eq.s32.totalorder %s21, 1
      %p81 = por %p79, %p80
      %p82 = scmp.ne.s32.totalorder %s73, %s74
      %p83 = scmp.eq.s32.totalorder %s21, 0
      %p84 = por %p82, %p83
      %p85 = scmp.ne.s32.totalorder %s73, %s74
      %p86 = scmp.eq.s32.totalorder %s22, 1
      %p87 = por %p85, %p86
      %p89 = scmp.ne.s32.totalorder %s74, %s88
      %p90 = scmp.eq.s32.totalorder %s22, 0
      %p91 = por %p89, %p90
      %s93 = sadd.s32 %s92, 1
      %p96 = scmp.eq.s32.totalorder %s16, 1
      %p97 = scmp.ne.s32.totalorder %s92, %s94
      %p98 = scmp.eq.s32.totalorder %s16, 0
      %p99 = por %p97, %p98
      %p100 = scmp.ne.s32.totalorder %s92, %s94
      %p101 = scmp.eq.s32.totalorder %s21, 1
      %p102 = por %p100, %p101
      %p103 = scmp.ne.s32.totalorder %s94, %s95
      %p104 = scmp.eq.s32.totalorder %s21, 0
      %p105 = por %p103, %p104
      %p106 = scmp.ne.s32.totalorder %s94, %s95
      %p107 = scmp.eq.s32.totalorder %s22, 1
      %p108 = por %p106, %p107
      %p110 = scmp.ne.s32.totalorder %s95, %s109
      %p111 = scmp.eq.s32.totalorder %s22, 0
      %p112 = por %p110, %p111
      %s114 = sadd.s32 %s113, 1
      %p117 = scmp.eq.s32.totalorder %s16, 1
      %p118 = scmp.ne.s32.totalorder %s113, %s115
      %p119 = scmp.eq.s32.totalorder %s16, 0
      %p120 = por %p118, %p119
      %p121 = scmp.ne.s32.totalorder %s113, %s115
      %p122 = scmp.eq.s32.totalorder %s21, 1
      %p123 = por %p121, %p122
      %p124 = scmp.ne.s32.totalorder %s115, %s116
      %p125 = scmp.eq.s32.totalorder %s21, 0
      %p126 = por %p124, %p125
      %p127 = scmp.ne.s32.totalorder %s115, %s116
      %p128 = scmp.eq.s32.totalorder %s22, 1
      %p129 = por %p127, %p128
      %p131 = scmp.ne.s32.totalorder %s116, %s130
      %p132 = scmp.eq.s32.totalorder %s22, 0
      %p133 = por %p131, %p132
      %s135 = sadd.s32 %s134, 1
      %p138 = scmp.eq.s32.totalorder %s16, 1
      %p139 = scmp.ne.s32.totalorder %s134, %s136
      %p140 = scmp.eq.s32.totalorder %s16, 0
      %p141 = por %p139, %p140
      %p142 = scmp.ne.s32.totalorder %s134, %s136
      %p143 = scmp.eq.s32.totalorder %s21, 1
      %p144 = por %p142, %p143
      %p145 = scmp.ne.s32.totalorder %s136, %s137
      %p146 = scmp.eq.s32.totalorder %s21, 0
      %p147 = por %p145, %p146
      %p148 = scmp.ne.s32.totalorder %s136, %s137
      %p149 = scmp.eq.s32.totalorder %s22, 1
      %p150 = por %p148, %p149
      %p152 = scmp.ne.s32.totalorder %s137, %s151
      %p153 = scmp.eq.s32.totalorder %s22, 0
      %p154 = por %p152, %p153
      %s156 = sadd.s32 %s155, 1
      %p159 = scmp.eq.s32.totalorder %s16, 1
      %p160 = scmp.ne.s32.totalorder %s155, %s157
      %p161 = scmp.eq.s32.totalorder %s16, 0
      %p162 = por %p160, %p161
      %p163 = scmp.ne.s32.totalorder %s155, %s157
      %p164 = scmp.eq.s32.totalorder %s21, 1
      %p165 = por %p163, %p164
      %p166 = scmp.ne.s32.totalorder %s157, %s158
      %p167 = scmp.eq.s32.totalorder %s21, 0
      %p168 = por %p166, %p167
      %p169 = scmp.ne.s32.totalorder %s157, %s158
      %p170 = scmp.eq.s32.totalorder %s22, 1
      %p171 = por %p169, %p170
      %p173 = scmp.ne.s32.totalorder %s158, %s172
      %p174 = scmp.eq.s32.totalorder %s22, 0
      %p175 = por %p173, %p174
      %s176 = ssub.s32 %s16, %s23
      %p177 = scmp.eq.s32.totalorder %s176, 0
      %s179 = sadd.s32 %s178, 1
      %s180 = scalar_select %p177, %s178, %s179
      %p183 = pneg %p177
      %p184 = scmp.eq.s32.totalorder %s16, 1
      %p185 = por %p183, %p184
      %p186 = scmp.ne.s32.totalorder %s178, %s181
      %p187 = scmp.eq.s32.totalorder %s16, 0
      %p188 = por %p186, %p187
      %p189 = scmp.ne.s32.totalorder %s178, %s181
      %p190 = scmp.eq.s32.totalorder %s21, 1
      %p191 = por %p189, %p190
      %p192 = scmp.ne.s32.totalorder %s181, %s182
      %p193 = scmp.eq.s32.totalorder %s21, 0
      %p194 = por %p192, %p193
      %p195 = scmp.ne.s32.totalorder %s181, %s182
      %p196 = scmp.eq.s32.totalorder %s22, 1
      %p197 = por %p195, %p196
      %p199 = scmp.ne.s32.totalorder %s182, %s198
      %p200 = scmp.eq.s32.totalorder %s22, 0
      %p201 = por %p199, %p200
      %p202 = scmp.le.s32.totalorder 1, %s16
      %p203 = scmp.lt.s32.totalorder %s16, 3
      %p204 = pnand %p202, %p203
      %p205 = pneg %p204
      // Predicated region
      $region9: #{inception_x.1} parent=5 // pred_check
        _
      $region10: #{inception_x.1} parent=5 // pred_check_branch
        %207 = sbr.rel (%p204) target = $region12
      $region11: #{inception_x.1} parent=5 // pred_region
        %s208 = ssub.s32 %s16, 1
        // Predicated region
        $region13: #{inception_x.1} parent=11 // pred_check
          %p209 = pneg %p63
        $region14: #{inception_x.1} parent=11 // pred_check_branch
          %211 = sbr.rel (%p209) target = $region16
        $region15: #{inception_x.1} parent=11 // pred_region
          _
        $region16: #{inception_x.1} parent=11 // pred_fallthru
          _
        // Predicated region
        $region17: #{inception_x.1} parent=11 // pred_check
          %p212 = pneg %p84
        $region18: #{inception_x.1} parent=11 // pred_check_branch
          %214 = sbr.rel (%p212) target = $region20
        $region19: #{inception_x.1} parent=11 // pred_region
          _
        $region20: #{inception_x.1} parent=11 // pred_fallthru
          _
        // Predicated region
        $region21: #{inception_x.1} parent=11 // pred_check
          %p215 = pneg %p105
        $region22: #{inception_x.1} parent=11 // pred_check_branch
          %217 = sbr.rel (%p215) target = $region24
        $region23: #{inception_x.1} parent=11 // pred_region
          _
        $region24: #{inception_x.1} parent=11 // pred_fallthru
          _
        // Predicated region
        $region25: #{inception_x.1} parent=11 // pred_check
          %p218 = pneg %p126
        $region26: #{inception_x.1} parent=11 // pred_check_branch
          %220 = sbr.rel (%p218) target = $region28
        $region27: #{inception_x.1} parent=11 // pred_region
          _
        $region28: #{inception_x.1} parent=11 // pred_fallthru
          _
        // Predicated region
        $region29: #{inception_x.1} parent=11 // pred_check
          %p221 = pneg %p147
        $region30: #{inception_x.1} parent=11 // pred_check_branch
          %223 = sbr.rel (%p221) target = $region32
        $region31: #{inception_x.1} parent=11 // pred_region
          _
        $region32: #{inception_x.1} parent=11 // pred_fallthru
          _
        // Predicated region
        $region33: #{inception_x.1} parent=11 // pred_check
          %p224 = pneg %p168
        $region34: #{inception_x.1} parent=11 // pred_check_branch
          %226 = sbr.rel (%p224) target = $region36
        $region35: #{inception_x.1} parent=11 // pred_region
          _
        $region36: #{inception_x.1} parent=11 // pred_fallthru
          _
      $region12: #{inception_x.1} parent=5 // pred_fallthru
        _
      %p227 = scmp.lt.s32.totalorder %s16, 2
      // Predicated region
      $region37: #{inception_x.1} parent=5 // pred_check
        %p228 = pneg %p227
      $region38: #{inception_x.1} parent=5 // pred_check_branch
        %230 = sbr.rel (%p228) target = $region40
      $region39: #{inception_x.1} parent=5 // pred_region
        // Predicated region
        $region41: #{inception_x.1} parent=39 // pred_check
          %p231 = pneg %p36
        $region42: #{inception_x.1} parent=39 // pred_check_branch
          %233 = sbr.rel (%p231) target = $region44
        $region43: #{inception_x.1} parent=39 // pred_region
          %p234 = scmp.lt.s32.totalorder %s16, 1
          %s235 = scalar_select %p234, %s16, 1
          %s236 = smul.addr %s235, 32
          %s237 = smul.addr %s236, 8
          %s238 = scalar_lea.vmem %s0, %s237
        $region44: #{inception_x.1} parent=39 // pred_fallthru
          _
      $region40: #{inception_x.1} parent=5 // pred_fallthru
        _
      %p239 = scmp.le.s32.totalorder 1, %s16
      %p240 = scmp.lt.s32.totalorder %s16, 3
      %p241 = pnand %p239, %p240
      %p242 = pneg %p241
      // Predicated region
      $region45: #{inception_x.1} parent=5 // pred_check
        _
      $region46: #{inception_x.1} parent=5 // pred_check_branch
        %244 = sbr.rel (%p241) target = $region48
      $region47: #{inception_x.1} parent=5 // pred_region
        %s245 = ssub.s32 %s16, 1
        %p246 = scmp.lt.s32.totalorder %s21, 1
        %s247 = scalar_select %p246, %s21, 1
        %s248 = smul.addr %s247, 32
        %s249 = smul.addr %s248, 8
        %s250 = scalar_lea.vmem %s0, %s249
        %p251 = pneg %p42
        %p252 = pneg %p39
        %p253 = pneg %p63
        %p254 = pneg %p60
        %p255 = pneg %p84
        %p256 = pneg %p81
        %p257 = pneg %p105
        %p258 = pneg %p102
        %p259 = pneg %p126
        %p260 = pneg %p123
        %p261 = pneg %p147
        %p262 = pneg %p144
        %p263 = pneg %p168
        %p264 = pneg %p165
        %p265 = pneg %p194
        %p266 = pneg %p191
        %s267 = sand.u32 %s181, 1
        %s268 = scalar_lea.sflag [#allocation7], %s267
        %s269 = sand.u32 %s181, 1
        %s270 = smul.addr %s269, 256
        %s271 = scalar_lea.vmem [#allocation6], %s270
        %p272 = scmp.lt.s32.totalorder %s21, 1
        %s273 = scalar_select %p272, %s21, 1
        %s274 = smul.addr %s273, 32
        %s275 = smul.addr %s274, 8
        %s276 = scalar_lea.vmem %s0, %s275
        %s277 = smul.u32 32, %s21
        %vm278 = vcmask 31744
        %279 = vst.msk [vmem:[#allocation2] sm:$0xff] %vm278, 0.0
        %280 = vst.msk [vmem:[#allocation2 + $0x8] sm:$0xff] %vm278, 0.0
        %vm281 = vcmask 27648
        %282 = vst.msk [vmem:[#allocation2 + $0x10] sm:$0xf] %vm281, 0.0
        %283 = vst.msk [vmem:[#allocation2 + $0x18] sm:$0xff] %vm278, 0.0
        %284 = vst.msk [vmem:[#allocation2 + $0x20] sm:$0xff] %vm278, 0.0
        %285 = vst.msk [vmem:[#allocation2 + $0x28] sm:$0xf] %vm281, 0.0
        %s286 = scalar_lea.vmem [#allocation2], 432
        %287 = vst.msk [vmem:[%s286] sm:$0xff] %vm278, 0.0
        %288 = vst.msk [vmem:[%s286 + $0x8] sm:$0xff] %vm278, 0.0
        %289 = vst.msk [vmem:[%s286 + $0x10] sm:$0xf] %vm281, 0.0
        %290 = vst.msk [vmem:[%s286 + $0x18] sm:$0xff] %vm278, 0.0
        %291 = vst.msk [vmem:[%s286 + $0x20] sm:$0xff] %vm278, 0.0
        %292 = vst.msk [vmem:[%s286 + $0x28] sm:$0xf] %vm281, 0.0
        %s293 = scalar_lea.vmem [#allocation2], 48
        %vm294 = vcmask 25600
        %295 = vst.msk [vmem:[%s293] sm:$0x3] %vm294, 0.0
        %296 = vst.msk [vmem:[%s293 + $0x18] sm:$0x3] %vm294, 0.0
        %297 = vst.msk [vmem:[%s293 + $0x30] sm:$0x3] %vm294, 0.0
        %298 = vst.msk [vmem:[%s293 + $0x48] sm:$0x3] %vm294, 0.0
        %299 = vst.msk [vmem:[%s293 + $0x60] sm:$0x3] %vm294, 0.0
        %300 = vst.msk [vmem:[%s293 + $0x78] sm:$0x3] %vm294, 0.0
        %301 = vst.msk [vmem:[%s293 + $0x90] sm:$0x3] %vm294, 0.0
        %302 = vst.msk [vmem:[%s293 + $0xa8] sm:$0x3] %vm294, 0.0
        %303 = vst.msk [vmem:[%s293 + $0xc0] sm:$0x3] %vm294, 0.0
        %304 = vst.msk [vmem:[%s293 + $0xd8] sm:$0x3] %vm294, 0.0
        %305 = vst.msk [vmem:[%s293 + $0xf0] sm:$0x3] %vm294, 0.0
        %306 = vst.msk [vmem:[%s293 + $0x108] sm:$0x3] %vm294, 0.0
        %307 = vst.msk [vmem:[%s293 + $0x120] sm:$0x3] %vm294, 0.0
        %308 = vst.msk [vmem:[%s293 + $0x138] sm:$0x3] %vm294, 0.0
        %309 = vst.msk [vmem:[%s293 + $0x150] sm:$0x3] %vm294, 0.0
        %310 = vst.msk [vmem:[%s293 + $0x168] sm:$0x3] %vm294, 0.0
        %311 = vst.msk [vmem:[%s293 + $0x12] sm:$0x3] %vm294, 0.0
        %312 = vst.msk [vmem:[%s293 + $0x2a] sm:$0x3] %vm294, 0.0
        %313 = vst.msk [vmem:[%s293 + $0x42] sm:$0x3] %vm294, 0.0
        %314 = vst.msk [vmem:[%s293 + $0x5a] sm:$0x3] %vm294, 0.0
        %315 = vst.msk [vmem:[%s293 + $0x72] sm:$0x3] %vm294, 0.0
        %316 = vst.msk [vmem:[%s293 + $0x8a] sm:$0x3] %vm294, 0.0
        %317 = vst.msk [vmem:[%s293 + $0xa2] sm:$0x3] %vm294, 0.0
        %318 = vst.msk [vmem:[%s293 + $0xba] sm:$0x3] %vm294, 0.0
        %319 = vst.msk [vmem:[%s293 + $0xd2] sm:$0x3] %vm294, 0.0
        %320 = vst.msk [vmem:[%s293 + $0xea] sm:$0x3] %vm294, 0.0
        %321 = vst.msk [vmem:[%s293 + $0x102] sm:$0x3] %vm294, 0.0
        %322 = vst.msk [vmem:[%s293 + $0x11a] sm:$0x3] %vm294, 0.0
        %323 = vst.msk [vmem:[%s293 + $0x132] sm:$0x3] %vm294, 0.0
        %324 = vst.msk [vmem:[%s293 + $0x14a] sm:$0x3] %vm294, 0.0
        %325 = vst.msk [vmem:[%s293 + $0x162] sm:$0x3] %vm294, 0.0
        %326 = vst.msk [vmem:[%s293 + $0x17a] sm:$0x3] %vm294, 0.0
        %v327 = vld [vmem:[%s276] sm:$0xff]
        %v328 = vld [vmem:[%s276 + $0x8] sm:$0xff]
        %v329 = vld [vmem:[%s276 + $0x10] sm:$0xff]
        %v330 = vld [vmem:[%s276 + $0x18] sm:$0xff]
        %v331 = vld [vmem:[%s276 + $0x20] sm:$0xff]
        %v332 = vld [vmem:[%s276 + $0x28] sm:$0xff]
        %v333 = vld [vmem:[%s276 + $0x30] sm:$0xff]
        %v334 = vld [vmem:[%s276 + $0x38] sm:$0xff]
        %v335 = vld [vmem:[%s276 + $0x40] sm:$0xff]
        %v336 = vld [vmem:[%s276 + $0x48] sm:$0xff]
        %v337 = vld [vmem:[%s276 + $0x50] sm:$0xff]
        %v338 = vld [vmem:[%s276 + $0x58] sm:$0xff]
        %v339 = vld [vmem:[%s276 + $0x60] sm:$0xff]
        %v340 = vld [vmem:[%s276 + $0x68] sm:$0xff]
        %v341 = vld [vmem:[%s276 + $0x70] sm:$0xff]
        %v342 = vld [vmem:[%s276 + $0x78] sm:$0xff]
        %v343 = vld [vmem:[%s276 + $0x80] sm:$0xff]
        %v344 = vld [vmem:[%s276 + $0x88] sm:$0xff]
        %v345 = vld [vmem:[%s276 + $0x90] sm:$0xff]
        %v346 = vld [vmem:[%s276 + $0x98] sm:$0xff]
        %v347 = vld [vmem:[%s276 + $0xa0] sm:$0xff]
        %v348 = vld [vmem:[%s276 + $0xa8] sm:$0xff]
        %v349 = vld [vmem:[%s276 + $0xb0] sm:$0xff]
        %v350 = vld [vmem:[%s276 + $0xb8] sm:$0xff]
        %v351 = vld [vmem:[%s276 + $0xc0] sm:$0xff]
        %v352 = vld [vmem:[%s276 + $0xc8] sm:$0xff]
        %v353 = vld [vmem:[%s276 + $0xd0] sm:$0xff]
        %v354 = vld [vmem:[%s276 + $0xd8] sm:$0xff]
        %v355 = vld [vmem:[%s276 + $0xe0] sm:$0xff]
        %v356 = vld [vmem:[%s276 + $0xe8] sm:$0xff]
        %v357 = vld [vmem:[%s276 + $0xf0] sm:$0xff]
        %v358 = vld [vmem:[%s276 + $0xf8] sm:$0xff]
        %359 = vst.msk [vmem:[%s293 + $0x2] sm:$0xff] %vm278, %v327
        %360 = vst.msk [vmem:[%s293 + $0xa] sm:$0xff] %vm278, %v328
        %361 = vst.msk [vmem:[%s293 + $0x1a] sm:$0xff] %vm278, %v329
        %362 = vst.msk [vmem:[%s293 + $0x22] sm:$0xff] %vm278, %v330
        %363 = vst.msk [vmem:[%s293 + $0x32] sm:$0xff] %vm278, %v331
        %364 = vst.msk [vmem:[%s293 + $0x3a] sm:$0xff] %vm278, %v332
        %365 = vst.msk [vmem:[%s293 + $0x4a] sm:$0xff] %vm278, %v333
        %366 = vst.msk [vmem:[%s293 + $0x52] sm:$0xff] %vm278, %v334
        %367 = vst.msk [vmem:[%s293 + $0x62] sm:$0xff] %vm278, %v335
        %368 = vst.msk [vmem:[%s293 + $0x6a] sm:$0xff] %vm278, %v336
        %369 = vst.msk [vmem:[%s293 + $0x7a] sm:$0xff] %vm278, %v337
        %370 = vst.msk [vmem:[%s293 + $0x82] sm:$0xff] %vm278, %v338
        %371 = vst.msk [vmem:[%s293 + $0x92] sm:$0xff] %vm278, %v339
        %372 = vst.msk [vmem:[%s293 + $0x9a] sm:$0xff] %vm278, %v340
        %373 = vst.msk [vmem:[%s293 + $0xaa] sm:$0xff] %vm278, %v341
        %374 = vst.msk [vmem:[%s293 + $0xb2] sm:$0xff] %vm278, %v342
        %375 = vst.msk [vmem:[%s293 + $0xc2] sm:$0xff] %vm278, %v343
        %376 = vst.msk [vmem:[%s293 + $0xca] sm:$0xff] %vm278, %v344
        %377 = vst.msk [vmem:[%s293 + $0xda] sm:$0xff] %vm278, %v345
        %378 = vst.msk [vmem:[%s293 + $0xe2] sm:$0xff] %vm278, %v346
        %379 = vst.msk [vmem:[%s293 + $0xf2] sm:$0xff] %vm278, %v347
        %380 = vst.msk [vmem:[%s293 + $0xfa] sm:$0xff] %vm278, %v348
        %381 = vst.msk [vmem:[%s293 + $0x10a] sm:$0xff] %vm278, %v349
        %382 = vst.msk [vmem:[%s293 + $0x112] sm:$0xff] %vm278, %v350
        %383 = vst.msk [vmem:[%s293 + $0x122] sm:$0xff] %vm278, %v351
        %384 = vst.msk [vmem:[%s293 + $0x12a] sm:$0xff] %vm278, %v352
        %385 = vst.msk [vmem:[%s293 + $0x13a] sm:$0xff] %vm278, %v353
        %386 = vst.msk [vmem:[%s293 + $0x142] sm:$0xff] %vm278, %v354
        %387 = vst.msk [vmem:[%s293 + $0x152] sm:$0xff] %vm278, %v355
        %388 = vst.msk [vmem:[%s293 + $0x15a] sm:$0xff] %vm278, %v356
        %389 = vst.msk [vmem:[%s293 + $0x16a] sm:$0xff] %vm278, %v357
        %390 = vst.msk [vmem:[%s293 + $0x172] sm:$0xff] %vm278, %v358
        %v391 = vld [vmem:[#allocation2] sm:$0xff]
        %v392 = vld [vmem:[#allocation2 + $0x8] sm:$0xff]
        %v393 = vld [vmem:[#allocation2 + $0x10] sm:$0xf]
        %v394 = vld [vmem:[#allocation2 + $0x18] sm:$0xff]
        %v395 = vld [vmem:[#allocation2 + $0x20] sm:$0xff]
        %v396 = vld [vmem:[#allocation2 + $0x28] sm:$0xf]
        %v397 = vld [vmem:[#allocation2 + $0x30] sm:$0xff]
        %v398 = vld [vmem:[#allocation2 + $0x38] sm:$0xff]
        %v399 = vld [vmem:[#allocation2 + $0x40] sm:$0xf]
        %v400 = vld [vmem:[#allocation2 + $0x48] sm:$0xff]
        %v401 = vld [vmem:[#allocation2 + $0x50] sm:$0xff]
        %v402 = vld [vmem:[#allocation2 + $0x58] sm:$0xf]
        %v403 = vld [vmem:[#allocation2 + $0x60] sm:$0xff]
        %v404 = vld [vmem:[#allocation2 + $0x68] sm:$0xff]
        %v405 = vld [vmem:[#allocation2 + $0x70] sm:$0xf]
        %v406 = vld [vmem:[#allocation2 + $0x78] sm:$0xff]
        %v407 = vld [vmem:[#allocation2 + $0x80] sm:$0xff]
        %v408 = vld [vmem:[#allocation2 + $0x88] sm:$0xf]
        %v409 = vld [vmem:[#allocation2 + $0x90] sm:$0xff]
        %v410 = vld [vmem:[#allocation2 + $0x98] sm:$0xff]
        %v411 = vld [vmem:[#allocation2 + $0xa0] sm:$0xf]
        %v412 = vld [vmem:[#allocation2 + $0xa8] sm:$0xff]
        %v413 = vld [vmem:[#allocation2 + $0xb0] sm:$0xff]
        %v414 = vld [vmem:[#allocation2 + $0xb8] sm:$0xf]
        %v415 = vld [vmem:[#allocation2 + $0xc0] sm:$0xff]
        %v416 = vld [vmem:[#allocation2 + $0xc8] sm:$0xff]
        %v417 = vld [vmem:[#allocation2 + $0xd0] sm:$0xf]
        %v418 = vld [vmem:[#allocation2 + $0xd8] sm:$0xff]
        %v419 = vld [vmem:[#allocation2 + $0xe0] sm:$0xff]
        %v420 = vld [vmem:[#allocation2 + $0xe8] sm:$0xf]
        %v421 = vld [vmem:[#allocation2 + $0xf0] sm:$0xff]
        %v422 = vld [vmem:[#allocation2 + $0xf8] sm:$0xff]
        %v423 = vld [vmem:[#allocation2 + $0x100] sm:$0xf]
        %v424 = vld [vmem:[#allocation2 + $0x108] sm:$0xff]
        %v425 = vld [vmem:[#allocation2 + $0x110] sm:$0xff]
        %v426 = vld [vmem:[#allocation2 + $0x118] sm:$0xf]
        %v427 = vld [vmem:[#allocation2 + $0x120] sm:$0xff]
        %v428 = vld [vmem:[#allocation2 + $0x128] sm:$0xff]
        %v429 = vld [vmem:[#allocation2 + $0x130] sm:$0xf]
        %v430 = vld [vmem:[#allocation2 + $0x138] sm:$0xff]
        %v431 = vld [vmem:[#allocation2 + $0x140] sm:$0xff]
        %v432 = vld [vmem:[#allocation2 + $0x148] sm:$0xf]
        %v433 = vld [vmem:[#allocation2 + $0x150] sm:$0xff]
        %v434 = vld [vmem:[#allocation2 + $0x158] sm:$0xff]
        %v435 = vld [vmem:[#allocation2 + $0x160] sm:$0xf]
        %v436 = vld [vmem:[#allocation2 + $0x168] sm:$0xff]
        %v437 = vld [vmem:[#allocation2 + $0x170] sm:$0xff]
        %v438 = vld [vmem:[#allocation2 + $0x178] sm:$0xf]
        %v439 = vld [vmem:[#allocation2 + $0x180] sm:$0xff]
        %v440 = vld [vmem:[#allocation2 + $0x188] sm:$0xff]
        %v441 = vld [vmem:[#allocation2 + $0x190] sm:$0xf]
        %v442 = vld [vmem:[#allocation2 + $0x198] sm:$0xff]
        %v443 = vld [vmem:[#allocation2 + $0x1a0] sm:$0xff]
        %v444 = vld [vmem:[#allocation2 + $0x1a8] sm:$0xf]
        %v445 = vld [vmem:[#allocation2 + $0x1b0] sm:$0xff]
        %v446 = vld [vmem:[#allocation2 + $0x1b8] sm:$0xff]
        %v447 = vld [vmem:[#allocation2 + $0x1c0] sm:$0xf]
        %v448 = vld [vmem:[#allocation2 + $0x1c8] sm:$0xff]
        %v449 = vld [vmem:[#allocation2 + $0x1d0] sm:$0xff]
        %v450 = vld [vmem:[#allocation2 + $0x1d8] sm:$0xf]
        %vm499 = vcmask 1046528
        %v500 = vrot.slane %v391, 1
        %v501 = vrot.slane %v392, 1
        %v502 = vsel %vm499, %v500, %v501
        %v503 = vrot.slane %v393, 1
        %v504 = vsel %vm499, %v501, %v503
        %v505 = vrot.slane %v394, 1
        %v506 = vrot.slane %v395, 1
        %v507 = vsel %vm499, %v505, %v506
        %v508 = vrot.slane %v396, 1
        %v509 = vsel %vm499, %v506, %v508
        %v510 = vrot.slane %v397, 1
        %v511 = vrot.slane %v398, 1
        %v512 = vsel %vm499, %v510, %v511
        %v513 = vrot.slane %v399, 1
        %v514 = vsel %vm499, %v511, %v513
        %v515 = vrot.slane %v400, 1
        %v516 = vrot.slane %v401, 1
        %v517 = vsel %vm499, %v515, %v516
        %v518 = vrot.slane %v402, 1
        %v519 = vsel %vm499, %v516, %v518
        %v520 = vrot.slane %v403, 1
        %v521 = vrot.slane %v404, 1
        %v522 = vsel %vm499, %v520, %v521
        %v523 = vrot.slane %v405, 1
        %v524 = vsel %vm499, %v521, %v523
        %v525 = vrot.slane %v406, 1
        %v526 = vrot.slane %v407, 1
        %v527 = vsel %vm499, %v525, %v526
        %v528 = vrot.slane %v408, 1
        %v529 = vsel %vm499, %v526, %v528
        %v530 = vrot.slane %v409, 1
        %v531 = vrot.slane %v410, 1
        %v532 = vsel %vm499, %v530, %v531
        %v533 = vrot.slane %v411, 1
        %v534 = vsel %vm499, %v531, %v533
        %v535 = vrot.slane %v412, 1
        %v536 = vrot.slane %v413, 1
        %v537 = vsel %vm499, %v535, %v536
        %v538 = vrot.slane %v414, 1
        %v539 = vsel %vm499, %v536, %v538
        %v540 = vrot.slane %v415, 1
        %v541 = vrot.slane %v416, 1
        %v542 = vsel %vm499, %v540, %v541
        %v543 = vrot.slane %v417, 1
        %v544 = vsel %vm499, %v541, %v543
        %v545 = vrot.slane %v418, 1
        %v546 = vrot.slane %v419, 1
        %v547 = vsel %vm499, %v545, %v546
        %v548 = vrot.slane %v420, 1
        %v549 = vsel %vm499, %v546, %v548
        %v550 = vrot.slane %v421, 1
        %v551 = vrot.slane %v422, 1
        %v552 = vsel %vm499, %v550, %v551
        %v553 = vrot.slane %v423, 1
        %v554 = vsel %vm499, %v551, %v553
        %v555 = vrot.slane %v424, 1
        %v556 = vrot.slane %v425, 1
        %v557 = vsel %vm499, %v555, %v556
        %v558 = vrot.slane %v426, 1
        %v559 = vsel %vm499, %v556, %v558
        %v560 = vrot.slane %v427, 1
        %v561 = vrot.slane %v428, 1
        %v562 = vsel %vm499, %v560, %v561
        %v563 = vrot.slane %v429, 1
        %v564 = vsel %vm499, %v561, %v563
        %v565 = vrot.slane %v430, 1
        %v566 = vrot.slane %v431, 1
        %v567 = vsel %vm499, %v565, %v566
        %v568 = vrot.slane %v432, 1
        %v569 = vsel %vm499, %v566, %v568
        %v570 = vrot.slane %v433, 1
        %v571 = vrot.slane %v434, 1
        %v572 = vsel %vm499, %v570, %v571
        %v573 = vrot.slane %v435, 1
        %v574 = vsel %vm499, %v571, %v573
        %v575 = vrot.slane %v436, 1
        %v576 = vrot.slane %v437, 1
        %v577 = vsel %vm499, %v575, %v576
        %v578 = vrot.slane %v438, 1
        %v579 = vsel %vm499, %v576, %v578
        %580 = vrot.lane.b32.xlu0 %v502, 4
        %v581 = vpop.permute.xlu0 %580
        %582 = vrot.lane.b32.xlu0 %v504, 4
        %v583 = vpop.permute.xlu0 %582
        %584 = vrot.lane.b32.xlu0 %v507, 4
        %v585 = vpop.permute.xlu0 %584
        %586 = vrot.lane.b32.xlu0 %v509, 4
        %v587 = vpop.permute.xlu0 %586
        %588 = vrot.lane.b32.xlu0 %v512, 4
        %v589 = vpop.permute.xlu0 %588
        %590 = vrot.lane.b32.xlu0 %v514, 4
        %v591 = vpop.permute.xlu0 %590
        %592 = vrot.lane.b32.xlu0 %v517, 4
        %v593 = vpop.permute.xlu0 %592
        %594 = vrot.lane.b32.xlu0 %v519, 4
        %v595 = vpop.permute.xlu0 %594
        %596 = vrot.lane.b32.xlu0 %v522, 4
        %v597 = vpop.permute.xlu0 %596
        %598 = vrot.lane.b32.xlu0 %v524, 4
        %v599 = vpop.permute.xlu0 %598
        %600 = vrot.lane.b32.xlu0 %v527, 4
        %v601 = vpop.permute.xlu0 %600
        %602 = vrot.lane.b32.xlu0 %v529, 4
        %v603 = vpop.permute.xlu0 %602
        %604 = vrot.lane.b32.xlu0 %v532, 4
        %v605 = vpop.permute.xlu0 %604
        %606 = vrot.lane.b32.xlu0 %v534, 4
        %v607 = vpop.permute.xlu0 %606
        %608 = vrot.lane.b32.xlu0 %v537, 4
        %v609 = vpop.permute.xlu0 %608
        %610 = vrot.lane.b32.xlu0 %v539, 4
        %v611 = vpop.permute.xlu0 %610
        %612 = vrot.lane.b32.xlu0 %v542, 4
        %v613 = vpop.permute.xlu0 %612
        %614 = vrot.lane.b32.xlu0 %v544, 4
        %v615 = vpop.permute.xlu0 %614
        %616 = vrot.lane.b32.xlu0 %v547, 4
        %v617 = vpop.permute.xlu0 %616
        %618 = vrot.lane.b32.xlu0 %v549, 4
        %v619 = vpop.permute.xlu0 %618
        %620 = vrot.lane.b32.xlu0 %v552, 4
        %v621 = vpop.permute.xlu0 %620
        %622 = vrot.lane.b32.xlu0 %v554, 4
        %v623 = vpop.permute.xlu0 %622
        %624 = vrot.lane.b32.xlu0 %v557, 4
        %v625 = vpop.permute.xlu0 %624
        %626 = vrot.lane.b32.xlu0 %v559, 4
        %v627 = vpop.permute.xlu0 %626
        %628 = vrot.lane.b32.xlu0 %v562, 4
        %v629 = vpop.permute.xlu0 %628
        %630 = vrot.lane.b32.xlu0 %v564, 4
        %v631 = vpop.permute.xlu0 %630
        %632 = vrot.lane.b32.xlu0 %v567, 4
        %v633 = vpop.permute.xlu0 %632
        %634 = vrot.lane.b32.xlu0 %v569, 4
        %v635 = vpop.permute.xlu0 %634
        %636 = vrot.lane.b32.xlu0 %v572, 4
        %v637 = vpop.permute.xlu0 %636
        %638 = vrot.lane.b32.xlu0 %v574, 4
        %v639 = vpop.permute.xlu0 %638
        %640 = vrot.lane.b32.xlu0 %v577, 4
        %v641 = vpop.permute.xlu0 %640
        %642 = vrot.lane.b32.xlu0 %v579, 4
        %v643 = vpop.permute.xlu0 %642
        %vm676 = vcmask 1045504
        %v677 = vrot.slane %v391, 2
        %v678 = vrot.slane %v392, 2
        %v679 = vsel %vm676, %v677, %v678
        %v680 = vrot.slane %v393, 2
        %v681 = vsel %vm676, %v678, %v680
        %v682 = vrot.slane %v394, 2
        %v683 = vrot.slane %v395, 2
        %v684 = vsel %vm676, %v682, %v683
        %v685 = vrot.slane %v396, 2
        %v686 = vsel %vm676, %v683, %v685
        %v687 = vrot.slane %v397, 2
        %v688 = vrot.slane %v398, 2
        %v689 = vsel %vm676, %v687, %v688
        %v690 = vrot.slane %v399, 2
        %v691 = vsel %vm676, %v688, %v690
        %v692 = vrot.slane %v400, 2
        %v693 = vrot.slane %v401, 2
        %v694 = vsel %vm676, %v692, %v693
        %v695 = vrot.slane %v402, 2
        %v696 = vsel %vm676, %v693, %v695
        %v697 = vrot.slane %v403, 2
        %v698 = vrot.slane %v404, 2
        %v699 = vsel %vm676, %v697, %v698
        %v700 = vrot.slane %v405, 2
        %v701 = vsel %vm676, %v698, %v700
        %v702 = vrot.slane %v406, 2
        %v703 = vrot.slane %v407, 2
        %v704 = vsel %vm676, %v702, %v703
        %v705 = vrot.slane %v408, 2
        %v706 = vsel %vm676, %v703, %v705
        %v707 = vrot.slane %v409, 2
        %v708 = vrot.slane %v410, 2
        %v709 = vsel %vm676, %v707, %v708
        %v710 = vrot.slane %v411, 2
        %v711 = vsel %vm676, %v708, %v710
        %v712 = vrot.slane %v412, 2
        %v713 = vrot.slane %v413, 2
        %v714 = vsel %vm676, %v712, %v713
        %v715 = vrot.slane %v414, 2
        %v716 = vsel %vm676, %v713, %v715
        %v717 = vrot.slane %v415, 2
        %v718 = vrot.slane %v416, 2
        %v719 = vsel %vm676, %v717, %v718
        %v720 = vrot.slane %v417, 2
        %v721 = vsel %vm676, %v718, %v720
        %v722 = vrot.slane %v418, 2
        %v723 = vrot.slane %v419, 2
        %v724 = vsel %vm676, %v722, %v723
        %v725 = vrot.slane %v420, 2
        %v726 = vsel %vm676, %v723, %v725
        %v727 = vrot.slane %v421, 2
        %v728 = vrot.slane %v422, 2
        %v729 = vsel %vm676, %v727, %v728
        %v730 = vrot.slane %v423, 2
        %v731 = vsel %vm676, %v728, %v730
        %v732 = vrot.slane %v424, 2
        %v733 = vrot.slane %v425, 2
        %v734 = vsel %vm676, %v732, %v733
        %v735 = vrot.slane %v426, 2
        %v736 = vsel %vm676, %v733, %v735
        %v737 = vrot.slane %v427, 2
        %v738 = vrot.slane %v428, 2
        %v739 = vsel %vm676, %v737, %v738
        %v740 = vrot.slane %v429, 2
        %v741 = vsel %vm676, %v738, %v740
        %v742 = vrot.slane %v430, 2
        %v743 = vrot.slane %v431, 2
        %v744 = vsel %vm676, %v742, %v743
        %v745 = vrot.slane %v432, 2
        %v746 = vsel %vm676, %v743, %v745
        %v747 = vrot.slane %v433, 2
        %v748 = vrot.slane %v434, 2
        %v749 = vsel %vm676, %v747, %v748
        %v750 = vrot.slane %v435, 2
        %v751 = vsel %vm676, %v748, %v750
        %v752 = vrot.slane %v436, 2
        %v753 = vrot.slane %v437, 2
        %v754 = vsel %vm676, %v752, %v753
        %v755 = vrot.slane %v438, 2
        %v756 = vsel %vm676, %v753, %v755
        %757 = vrot.lane.b32.xlu0 %v679, 8
        %v758 = vpop.permute.xlu0 %757
        %759 = vrot.lane.b32.xlu0 %v681, 8
        %v760 = vpop.permute.xlu0 %759
        %761 = vrot.lane.b32.xlu0 %v684, 8
        %v762 = vpop.permute.xlu0 %761
        %763 = vrot.lane.b32.xlu0 %v686, 8
        %v764 = vpop.permute.xlu0 %763
        %765 = vrot.lane.b32.xlu0 %v689, 8
        %v766 = vpop.permute.xlu0 %765
        %767 = vrot.lane.b32.xlu0 %v691, 8
        %v768 = vpop.permute.xlu0 %767
        %769 = vrot.lane.b32.xlu0 %v694, 8
        %v770 = vpop.permute.xlu0 %769
        %771 = vrot.lane.b32.xlu0 %v696, 8
        %v772 = vpop.permute.xlu0 %771
        %773 = vrot.lane.b32.xlu0 %v699, 8
        %v774 = vpop.permute.xlu0 %773
        %775 = vrot.lane.b32.xlu0 %v701, 8
        %v776 = vpop.permute.xlu0 %775
        %777 = vrot.lane.b32.xlu0 %v704, 8
        %v778 = vpop.permute.xlu0 %777
        %779 = vrot.lane.b32.xlu0 %v706, 8
        %v780 = vpop.permute.xlu0 %779
        %781 = vrot.lane.b32.xlu0 %v709, 8
        %v782 = vpop.permute.xlu0 %781
        %783 = vrot.lane.b32.xlu0 %v711, 8
        %v784 = vpop.permute.xlu0 %783
        %785 = vrot.lane.b32.xlu0 %v714, 8
        %v786 = vpop.permute.xlu0 %785
        %787 = vrot.lane.b32.xlu0 %v716, 8
        %v788 = vpop.permute.xlu0 %787
        %789 = vrot.lane.b32.xlu0 %v719, 8
        %v790 = vpop.permute.xlu0 %789
        %791 = vrot.lane.b32.xlu0 %v721, 8
        %v792 = vpop.permute.xlu0 %791
        %793 = vrot.lane.b32.xlu0 %v724, 8
        %v794 = vpop.permute.xlu0 %793
        %795 = vrot.lane.b32.xlu0 %v726, 8
        %v796 = vpop.permute.xlu0 %795
        %797 = vrot.lane.b32.xlu0 %v729, 8
        %v798 = vpop.permute.xlu0 %797
        %799 = vrot.lane.b32.xlu0 %v731, 8
        %v800 = vpop.permute.xlu0 %799
        %801 = vrot.lane.b32.xlu0 %v734, 8
        %v802 = vpop.permute.xlu0 %801
        %803 = vrot.lane.b32.xlu0 %v736, 8
        %v804 = vpop.permute.xlu0 %803
        %805 = vrot.lane.b32.xlu0 %v739, 8
        %v806 = vpop.permute.xlu0 %805
        %807 = vrot.lane.b32.xlu0 %v741, 8
        %v808 = vpop.permute.xlu0 %807
        %809 = vrot.lane.b32.xlu0 %v744, 8
        %v810 = vpop.permute.xlu0 %809
        %811 = vrot.lane.b32.xlu0 %v746, 8
        %v812 = vpop.permute.xlu0 %811
        %813 = vrot.lane.b32.xlu0 %v749, 8
        %v814 = vpop.permute.xlu0 %813
        %815 = vrot.lane.b32.xlu0 %v751, 8
        %v816 = vpop.permute.xlu0 %815
        %817 = vrot.lane.b32.xlu0 %v754, 8
        %v818 = vpop.permute.xlu0 %817
        %819 = vrot.lane.b32.xlu0 %v756, 8
        %v820 = vpop.permute.xlu0 %819
        %vm853 = vcmask 1044480
        %v854 = vrot.slane %v391, 3
        %v855 = vrot.slane %v392, 3
        %v856 = vsel %vm853, %v854, %v855
        %v857 = vrot.slane %v393, 3
        %v858 = vsel %vm853, %v855, %v857
        %v859 = vrot.slane %v394, 3
        %v860 = vrot.slane %v395, 3
        %v861 = vsel %vm853, %v859, %v860
        %v862 = vrot.slane %v396, 3
        %v863 = vsel %vm853, %v860, %v862
        %v864 = vrot.slane %v397, 3
        %v865 = vrot.slane %v398, 3
        %v866 = vsel %vm853, %v864, %v865
        %v867 = vrot.slane %v399, 3
        %v868 = vsel %vm853, %v865, %v867
        %v869 = vrot.slane %v400, 3
        %v870 = vrot.slane %v401, 3
        %v871 = vsel %vm853, %v869, %v870
        %v872 = vrot.slane %v402, 3
        %v873 = vsel %vm853, %v870, %v872
        %v874 = vrot.slane %v403, 3
        %v875 = vrot.slane %v404, 3
        %v876 = vsel %vm853, %v874, %v875
        %v877 = vrot.slane %v405, 3
        %v878 = vsel %vm853, %v875, %v877
        %v879 = vrot.slane %v406, 3
        %v880 = vrot.slane %v407, 3
        %v881 = vsel %vm853, %v879, %v880
        %v882 = vrot.slane %v408, 3
        %v883 = vsel %vm853, %v880, %v882
        %v884 = vrot.slane %v409, 3
        %v885 = vrot.slane %v410, 3
        %v886 = vsel %vm853, %v884, %v885
        %v887 = vrot.slane %v411, 3
        %v888 = vsel %vm853, %v885, %v887
        %v889 = vrot.slane %v412, 3
        %v890 = vrot.slane %v413, 3
        %v891 = vsel %vm853, %v889, %v890
        %v892 = vrot.slane %v414, 3
        %v893 = vsel %vm853, %v890, %v892
        %v894 = vrot.slane %v415, 3
        %v895 = vrot.slane %v416, 3
        %v896 = vsel %vm853, %v894, %v895
        %v897 = vrot.slane %v417, 3
        %v898 = vsel %vm853, %v895, %v897
        %v899 = vrot.slane %v418, 3
        %v900 = vrot.slane %v419, 3
        %v901 = vsel %vm853, %v899, %v900
        %v902 = vrot.slane %v420, 3
        %v903 = vsel %vm853, %v900, %v902
        %v904 = vrot.slane %v421, 3
        %v905 = vrot.slane %v422, 3
        %v906 = vsel %vm853, %v904, %v905
        %v907 = vrot.slane %v423, 3
        %v908 = vsel %vm853, %v905, %v907
        %v909 = vrot.slane %v424, 3
        %v910 = vrot.slane %v425, 3
        %v911 = vsel %vm853, %v909, %v910
        %v912 = vrot.slane %v426, 3
        %v913 = vsel %vm853, %v910, %v912
        %v914 = vrot.slane %v427, 3
        %v915 = vrot.slane %v428, 3
        %v916 = vsel %vm853, %v914, %v915
        %v917 = vrot.slane %v429, 3
        %v918 = vsel %vm853, %v915, %v917
        %v919 = vrot.slane %v430, 3
        %v920 = vrot.slane %v431, 3
        %v921 = vsel %vm853, %v919, %v920
        %v922 = vrot.slane %v432, 3
        %v923 = vsel %vm853, %v920, %v922
        %v924 = vrot.slane %v433, 3
        %v925 = vrot.slane %v434, 3
        %v926 = vsel %vm853, %v924, %v925
        %v927 = vrot.slane %v435, 3
        %v928 = vsel %vm853, %v925, %v927
        %v929 = vrot.slane %v436, 3
        %v930 = vrot.slane %v437, 3
        %v931 = vsel %vm853, %v929, %v930
        %v932 = vrot.slane %v438, 3
        %v933 = vsel %vm853, %v930, %v932
        %934 = vrot.lane.b32.xlu0 %v856, 12
        %v935 = vpop.permute.xlu0 %934
        %936 = vrot.lane.b32.xlu0 %v858, 12
        %v937 = vpop.permute.xlu0 %936
        %938 = vrot.lane.b32.xlu0 %v861, 12
        %v939 = vpop.permute.xlu0 %938
        %940 = vrot.lane.b32.xlu0 %v863, 12
        %v941 = vpop.permute.xlu0 %940
        %942 = vrot.lane.b32.xlu0 %v866, 12
        %v943 = vpop.permute.xlu0 %942
        %944 = vrot.lane.b32.xlu0 %v868, 12
        %v945 = vpop.permute.xlu0 %944
        %946 = vrot.lane.b32.xlu0 %v871, 12
        %v947 = vpop.permute.xlu0 %946
        %948 = vrot.lane.b32.xlu0 %v873, 12
        %v949 = vpop.permute.xlu0 %948
        %950 = vrot.lane.b32.xlu0 %v876, 12
        %v951 = vpop.permute.xlu0 %950
        %952 = vrot.lane.b32.xlu0 %v878, 12
        %v953 = vpop.permute.xlu0 %952
        %954 = vrot.lane.b32.xlu0 %v881, 12
        %v955 = vpop.permute.xlu0 %954
        %956 = vrot.lane.b32.xlu0 %v883, 12
        %v957 = vpop.permute.xlu0 %956
        %958 = vrot.lane.b32.xlu0 %v886, 12
        %v959 = vpop.permute.xlu0 %958
        %960 = vrot.lane.b32.xlu0 %v888, 12
        %v961 = vpop.permute.xlu0 %960
        %962 = vrot.lane.b32.xlu0 %v891, 12
        %v963 = vpop.permute.xlu0 %962
        %964 = vrot.lane.b32.xlu0 %v893, 12
        %v965 = vpop.permute.xlu0 %964
        %966 = vrot.lane.b32.xlu0 %v896, 12
        %v967 = vpop.permute.xlu0 %966
        %968 = vrot.lane.b32.xlu0 %v898, 12
        %v969 = vpop.permute.xlu0 %968
        %970 = vrot.lane.b32.xlu0 %v901, 12
        %v971 = vpop.permute.xlu0 %970
        %972 = vrot.lane.b32.xlu0 %v903, 12
        %v973 = vpop.permute.xlu0 %972
        %974 = vrot.lane.b32.xlu0 %v906, 12
        %v975 = vpop.permute.xlu0 %974
        %976 = vrot.lane.b32.xlu0 %v908, 12
        %v977 = vpop.permute.xlu0 %976
        %978 = vrot.lane.b32.xlu0 %v911, 12
        %v979 = vpop.permute.xlu0 %978
        %980 = vrot.lane.b32.xlu0 %v913, 12
        %v981 = vpop.permute.xlu0 %980
        %982 = vrot.lane.b32.xlu0 %v916, 12
        %v983 = vpop.permute.xlu0 %982
        %984 = vrot.lane.b32.xlu0 %v918, 12
        %v985 = vpop.permute.xlu0 %984
        %986 = vrot.lane.b32.xlu0 %v921, 12
        %v987 = vpop.permute.xlu0 %986
        %988 = vrot.lane.b32.xlu0 %v923, 12
        %v989 = vpop.permute.xlu0 %988
        %990 = vrot.lane.b32.xlu0 %v926, 12
        %v991 = vpop.permute.xlu0 %990
        %992 = vrot.lane.b32.xlu0 %v928, 12
        %v993 = vpop.permute.xlu0 %992
        %994 = vrot.lane.b32.xlu0 %v931, 12
        %v995 = vpop.permute.xlu0 %994
        %996 = vrot.lane.b32.xlu0 %v933, 12
        %v997 = vpop.permute.xlu0 %996
        %vm1030 = vcmask 1043456
        %v1031 = vrot.slane %v391, 4
        %v1032 = vrot.slane %v392, 4
        %v1033 = vsel %vm1030, %v1031, %v1032
        %v1034 = vrot.slane %v393, 4
        %v1035 = vsel %vm1030, %v1032, %v1034
        %v1036 = vrot.slane %v394, 4
        %v1037 = vrot.slane %v395, 4
        %v1038 = vsel %vm1030, %v1036, %v1037
        %v1039 = vrot.slane %v396, 4
        %v1040 = vsel %vm1030, %v1037, %v1039
        %v1041 = vrot.slane %v397, 4
        %v1042 = vrot.slane %v398, 4
        %v1043 = vsel %vm1030, %v1041, %v1042
        %v1044 = vrot.slane %v399, 4
        %v1045 = vsel %vm1030, %v1042, %v1044
        %v1046 = vrot.slane %v400, 4
        %v1047 = vrot.slane %v401, 4
        %v1048 = vsel %vm1030, %v1046, %v1047
        %v1049 = vrot.slane %v402, 4
        %v1050 = vsel %vm1030, %v1047, %v1049
        %v1051 = vrot.slane %v403, 4
        %v1052 = vrot.slane %v404, 4
        %v1053 = vsel %vm1030, %v1051, %v1052
        %v1054 = vrot.slane %v405, 4
        %v1055 = vsel %vm1030, %v1052, %v1054
        %v1056 = vrot.slane %v406, 4
        %v1057 = vrot.slane %v407, 4
        %v1058 = vsel %vm1030, %v1056, %v1057
        %v1059 = vrot.slane %v408, 4
        %v1060 = vsel %vm1030, %v1057, %v1059
        %v1061 = vrot.slane %v409, 4
        %v1062 = vrot.slane %v410, 4
        %v1063 = vsel %vm1030, %v1061, %v1062
        %v1064 = vrot.slane %v411, 4
        %v1065 = vsel %vm1030, %v1062, %v1064
        %v1066 = vrot.slane %v412, 4
        %v1067 = vrot.slane %v413, 4
        %v1068 = vsel %vm1030, %v1066, %v1067
        %v1069 = vrot.slane %v414, 4
        %v1070 = vsel %vm1030, %v1067, %v1069
        %v1071 = vrot.slane %v415, 4
        %v1072 = vrot.slane %v416, 4
        %v1073 = vsel %vm1030, %v1071, %v1072
        %v1074 = vrot.slane %v417, 4
        %v1075 = vsel %vm1030, %v1072, %v1074
        %v1076 = vrot.slane %v418, 4
        %v1077 = vrot.slane %v419, 4
        %v1078 = vsel %vm1030, %v1076, %v1077
        %v1079 = vrot.slane %v420, 4
        %v1080 = vsel %vm1030, %v1077, %v1079
        %v1081 = vrot.slane %v421, 4
        %v1082 = vrot.slane %v422, 4
        %v1083 = vsel %vm1030, %v1081, %v1082
        %v1084 = vrot.slane %v423, 4
        %v1085 = vsel %vm1030, %v1082, %v1084
        %v1086 = vrot.slane %v424, 4
        %v1087 = vrot.slane %v425, 4
        %v1088 = vsel %vm1030, %v1086, %v1087
        %v1089 = vrot.slane %v426, 4
        %v1090 = vsel %vm1030, %v1087, %v1089
        %v1091 = vrot.slane %v427, 4
        %v1092 = vrot.slane %v428, 4
        %v1093 = vsel %vm1030, %v1091, %v1092
        %v1094 = vrot.slane %v429, 4
        %v1095 = vsel %vm1030, %v1092, %v1094
        %v1096 = vrot.slane %v430, 4
        %v1097 = vrot.slane %v431, 4
        %v1098 = vsel %vm1030, %v1096, %v1097
        %v1099 = vrot.slane %v432, 4
        %v1100 = vsel %vm1030, %v1097, %v1099
        %v1101 = vrot.slane %v433, 4
        %v1102 = vrot.slane %v434, 4
        %v1103 = vsel %vm1030, %v1101, %v1102
        %v1104 = vrot.slane %v435, 4
        %v1105 = vsel %vm1030, %v1102, %v1104
        %v1106 = vrot.slane %v436, 4
        %v1107 = vrot.slane %v437, 4
        %v1108 = vsel %vm1030, %v1106, %v1107
        %v1109 = vrot.slane %v438, 4
        %v1110 = vsel %vm1030, %v1107, %v1109
        %1111 = vrot.lane.b32.xlu0 %v1033, 16
        %v1112 = vpop.permute.xlu0 %1111
        %1113 = vrot.lane.b32.xlu0 %v1035, 16
        %v1114 = vpop.permute.xlu0 %1113
        %1115 = vrot.lane.b32.xlu0 %v1038, 16
        %v1116 = vpop.permute.xlu0 %1115
        %1117 = vrot.lane.b32.xlu0 %v1040, 16
        %v1118 = vpop.permute.xlu0 %1117
        %1119 = vrot.lane.b32.xlu0 %v1043, 16
        %v1120 = vpop.permute.xlu0 %1119
        %1121 = vrot.lane.b32.xlu0 %v1045, 16
        %v1122 = vpop.permute.xlu0 %1121
        %1123 = vrot.lane.b32.xlu0 %v1048, 16
        %v1124 = vpop.permute.xlu0 %1123
        %1125 = vrot.lane.b32.xlu0 %v1050, 16
        %v1126 = vpop.permute.xlu0 %1125
        %1127 = vrot.lane.b32.xlu0 %v1053, 16
        %v1128 = vpop.permute.xlu0 %1127
        %1129 = vrot.lane.b32.xlu0 %v1055, 16
        %v1130 = vpop.permute.xlu0 %1129
        %1131 = vrot.lane.b32.xlu0 %v1058, 16
        %v1132 = vpop.permute.xlu0 %1131
        %1133 = vrot.lane.b32.xlu0 %v1060, 16
        %v1134 = vpop.permute.xlu0 %1133
        %1135 = vrot.lane.b32.xlu0 %v1063, 16
        %v1136 = vpop.permute.xlu0 %1135
        %1137 = vrot.lane.b32.xlu0 %v1065, 16
        %v1138 = vpop.permute.xlu0 %1137
        %1139 = vrot.lane.b32.xlu0 %v1068, 16
        %v1140 = vpop.permute.xlu0 %1139
        %1141 = vrot.lane.b32.xlu0 %v1070, 16
        %v1142 = vpop.permute.xlu0 %1141
        %1143 = vrot.lane.b32.xlu0 %v1073, 16
        %v1144 = vpop.permute.xlu0 %1143
        %1145 = vrot.lane.b32.xlu0 %v1075, 16
        %v1146 = vpop.permute.xlu0 %1145
        %1147 = vrot.lane.b32.xlu0 %v1078, 16
        %v1148 = vpop.permute.xlu0 %1147
        %1149 = vrot.lane.b32.xlu0 %v1080, 16
        %v1150 = vpop.permute.xlu0 %1149
        %1151 = vrot.lane.b32.xlu0 %v1083, 16
        %v1152 = vpop.permute.xlu0 %1151
        %1153 = vrot.lane.b32.xlu0 %v1085, 16
        %v1154 = vpop.permute.xlu0 %1153
        %1155 = vrot.lane.b32.xlu0 %v1088, 16
        %v1156 = vpop.permute.xlu0 %1155
        %1157 = vrot.lane.b32.xlu0 %v1090, 16
        %v1158 = vpop.permute.xlu0 %1157
        %1159 = vrot.lane.b32.xlu0 %v1093, 16
        %v1160 = vpop.permute.xlu0 %1159
        %1161 = vrot.lane.b32.xlu0 %v1095, 16
        %v1162 = vpop.permute.xlu0 %1161
        %1163 = vrot.lane.b32.xlu0 %v1098, 16
        %v1164 = vpop.permute.xlu0 %1163
        %1165 = vrot.lane.b32.xlu0 %v1100, 16
        %v1166 = vpop.permute.xlu0 %1165
        %1167 = vrot.lane.b32.xlu0 %v1103, 16
        %v1168 = vpop.permute.xlu0 %1167
        %1169 = vrot.lane.b32.xlu0 %v1105, 16
        %v1170 = vpop.permute.xlu0 %1169
        %1171 = vrot.lane.b32.xlu0 %v1108, 16
        %v1172 = vpop.permute.xlu0 %1171
        %1173 = vrot.lane.b32.xlu0 %v1110, 16
        %v1174 = vpop.permute.xlu0 %1173
        %v1207 = vsel %vm278, %v391, %v581
        %v1208 = vsel %vm278, %v392, %v583
        %v1209 = vsel %vm278, %v394, %v585
        %v1210 = vsel %vm278, %v395, %v587
        %v1211 = vsel %vm278, %v397, %v589
        %v1212 = vsel %vm278, %v398, %v591
        %v1213 = vsel %vm278, %v400, %v593
        %v1214 = vsel %vm278, %v401, %v595
        %v1215 = vsel %vm278, %v403, %v597
        %v1216 = vsel %vm278, %v404, %v599
        %v1217 = vsel %vm278, %v406, %v601
        %v1218 = vsel %vm278, %v407, %v603
        %v1219 = vsel %vm278, %v409, %v605
        %v1220 = vsel %vm278, %v410, %v607
        %v1221 = vsel %vm278, %v412, %v609
        %v1222 = vsel %vm278, %v413, %v611
        %v1223 = vsel %vm278, %v415, %v613
        %v1224 = vsel %vm278, %v416, %v615
        %v1225 = vsel %vm278, %v418, %v617
        %v1226 = vsel %vm278, %v419, %v619
        %v1227 = vsel %vm278, %v421, %v621
        %v1228 = vsel %vm278, %v422, %v623
        %v1229 = vsel %vm278, %v424, %v625
        %v1230 = vsel %vm278, %v425, %v627
        %v1231 = vsel %vm278, %v427, %v629
        %v1232 = vsel %vm278, %v428, %v631
        %v1233 = vsel %vm278, %v430, %v633
        %v1234 = vsel %vm278, %v431, %v635
        %v1235 = vsel %vm278, %v433, %v637
        %v1236 = vsel %vm278, %v434, %v639
        %v1237 = vsel %vm278, %v436, %v641
        %v1238 = vsel %vm278, %v437, %v643
        %vm1239 = vcmask 64512
        %v1240 = vsel %vm1239, %v1207, %v758
        %v1241 = vsel %vm1239, %v1208, %v760
        %v1242 = vsel %vm1239, %v1209, %v762
        %v1243 = vsel %vm1239, %v1210, %v764
        %v1244 = vsel %vm1239, %v1211, %v766
        %v1245 = vsel %vm1239, %v1212, %v768
        %v1246 = vsel %vm1239, %v1213, %v770
        %v1247 = vsel %vm1239, %v1214, %v772
        %v1248 = vsel %vm1239, %v1215, %v774
        %v1249 = vsel %vm1239, %v1216, %v776
        %v1250 = vsel %vm1239, %v1217, %v778
        %v1251 = vsel %vm1239, %v1218, %v780
        %v1252 = vsel %vm1239, %v1219, %v782
        %v1253 = vsel %vm1239, %v1220, %v784
        %v1254 = vsel %vm1239, %v1221, %v786
        %v1255 = vsel %vm1239, %v1222, %v788
        %v1256 = vsel %vm1239, %v1223, %v790
        %v1257 = vsel %vm1239, %v1224, %v792
        %v1258 = vsel %vm1239, %v1225, %v794
        %v1259 = vsel %vm1239, %v1226, %v796
        %v1260 = vsel %vm1239, %v1227, %v798
        %v1261 = vsel %vm1239, %v1228, %v800
        %v1262 = vsel %vm1239, %v1229, %v802
        %v1263 = vsel %vm1239, %v1230, %v804
        %v1264 = vsel %vm1239, %v1231, %v806
        %v1265 = vsel %vm1239, %v1232, %v808
        %v1266 = vsel %vm1239, %v1233, %v810
        %v1267 = vsel %vm1239, %v1234, %v812
        %v1268 = vsel %vm1239, %v1235, %v814
        %v1269 = vsel %vm1239, %v1236, %v816
        %v1270 = vsel %vm1239, %v1237, %v818
        %v1271 = vsel %vm1239, %v1238, %v820
        %vm1272 = vcmask 97280
        %v1273 = vsel %vm1272, %v1240, %v935
        %v1274 = vsel %vm1272, %v1241, %v937
        %v1275 = vsel %vm1272, %v1242, %v939
        %v1276 = vsel %vm1272, %v1243, %v941
        %v1277 = vsel %vm1272, %v1244, %v943
        %v1278 = vsel %vm1272, %v1245, %v945
        %v1279 = vsel %vm1272, %v1246, %v947
        %v1280 = vsel %vm1272, %v1247, %v949
        %v1281 = vsel %vm1272, %v1248, %v951
        %v1282 = vsel %vm1272, %v1249, %v953
        %v1283 = vsel %vm1272, %v1250, %v955
        %v1284 = vsel %vm1272, %v1251, %v957
        %v1285 = vsel %vm1272, %v1252, %v959
        %v1286 = vsel %vm1272, %v1253, %v961
        %v1287 = vsel %vm1272, %v1254, %v963
        %v1288 = vsel %vm1272, %v1255, %v965
        %v1289 = vsel %vm1272, %v1256, %v967
        %v1290 = vsel %vm1272, %v1257, %v969
        %v1291 = vsel %vm1272, %v1258, %v971
        %v1292 = vsel %vm1272, %v1259, %v973
        %v1293 = vsel %vm1272, %v1260, %v975
        %v1294 = vsel %vm1272, %v1261, %v977
        %v1295 = vsel %vm1272, %v1262, %v979
        %v1296 = vsel %vm1272, %v1263, %v981
        %v1297 = vsel %vm1272, %v1264, %v983
        %v1298 = vsel %vm1272, %v1265, %v985
        %v1299 = vsel %vm1272, %v1266, %v987
        %v1300 = vsel %vm1272, %v1267, %v989
        %v1301 = vsel %vm1272, %v1268, %v991
        %v1302 = vsel %vm1272, %v1269, %v993
        %v1303 = vsel %vm1272, %v1270, %v995
        %v1304 = vsel %vm1272, %v1271, %v997
        %vm1305 = vcmask 130048
        %v1306 = vsel %vm1305, %v1273, %v1112
        %v1307 = vsel %vm1305, %v1274, %v1114
        %v1308 = vsel %vm1305, %v1275, %v1116
        %v1309 = vsel %vm1305, %v1276, %v1118
        %v1310 = vsel %vm1305, %v1277, %v1120
        %v1311 = vsel %vm1305, %v1278, %v1122
        %v1312 = vsel %vm1305, %v1279, %v1124
        %v1313 = vsel %vm1305, %v1280, %v1126
        %v1314 = vsel %vm1305, %v1281, %v1128
        %v1315 = vsel %vm1305, %v1282, %v1130
        %v1316 = vsel %vm1305, %v1283, %v1132
        %v1317 = vsel %vm1305, %v1284, %v1134
        %v1318 = vsel %vm1305, %v1285, %v1136
        %v1319 = vsel %vm1305, %v1286, %v1138
        %v1320 = vsel %vm1305, %v1287, %v1140
        %v1321 = vsel %vm1305, %v1288, %v1142
        %v1322 = vsel %vm1305, %v1289, %v1144
        %v1323 = vsel %vm1305, %v1290, %v1146
        %v1324 = vsel %vm1305, %v1291, %v1148
        %v1325 = vsel %vm1305, %v1292, %v1150
        %v1326 = vsel %vm1305, %v1293, %v1152
        %v1327 = vsel %vm1305, %v1294, %v1154
        %v1328 = vsel %vm1305, %v1295, %v1156
        %v1329 = vsel %vm1305, %v1296, %v1158
        %v1330 = vsel %vm1305, %v1297, %v1160
        %v1331 = vsel %vm1305, %v1298, %v1162
        %v1332 = vsel %vm1305, %v1299, %v1164
        %v1333 = vsel %vm1305, %v1300, %v1166
        %v1334 = vsel %vm1305, %v1301, %v1168
        %v1335 = vsel %vm1305, %v1302, %v1170
        %v1336 = vsel %vm1305, %v1303, %v1172
        %v1337 = vsel %vm1305, %v1304, %v1174
        %vm1338 = vcmask 162816
        %1339 = vst.msk [vmem:[#allocation4] sm:$0xff] %vm1338, %v1306
        %1340 = vst.msk [vmem:[#allocation4 + $0x8] sm:$0xff] %vm1338, %v1307
        %1341 = vst.msk [vmem:[#allocation4 + $0x10] sm:$0xff] %vm1338, %v1308
        %1342 = vst.msk [vmem:[#allocation4 + $0x18] sm:$0xff] %vm1338, %v1309
        %1343 = vst.msk [vmem:[#allocation4 + $0x20] sm:$0xff] %vm1338, %v1310
        %1344 = vst.msk [vmem:[#allocation4 + $0x28] sm:$0xff] %vm1338, %v1311
        %1345 = vst.msk [vmem:[#allocation4 + $0x30] sm:$0xff] %vm1338, %v1312
        %1346 = vst.msk [vmem:[#allocation4 + $0x38] sm:$0xff] %vm1338, %v1313
        %1347 = vst.msk [vmem:[#allocation4 + $0x40] sm:$0xff] %vm1338, %v1314
        %1348 = vst.msk [vmem:[#allocation4 + $0x48] sm:$0xff] %vm1338, %v1315
        %1349 = vst.msk [vmem:[#allocation4 + $0x50] sm:$0xff] %vm1338, %v1316
        %1350 = vst.msk [vmem:[#allocation4 + $0x58] sm:$0xff] %vm1338, %v1317
        %1351 = vst.msk [vmem:[#allocation4 + $0x60] sm:$0xff] %vm1338, %v1318
        %1352 = vst.msk [vmem:[#allocation4 + $0x68] sm:$0xff] %vm1338, %v1319
        %1353 = vst.msk [vmem:[#allocation4 + $0x70] sm:$0xff] %vm1338, %v1320
        %1354 = vst.msk [vmem:[#allocation4 + $0x78] sm:$0xff] %vm1338, %v1321
        %1355 = vst.msk [vmem:[#allocation4 + $0x80] sm:$0xff] %vm1338, %v1322
        %1356 = vst.msk [vmem:[#allocation4 + $0x88] sm:$0xff] %vm1338, %v1323
        %1357 = vst.msk [vmem:[#allocation4 + $0x90] sm:$0xff] %vm1338, %v1324
        %1358 = vst.msk [vmem:[#allocation4 + $0x98] sm:$0xff] %vm1338, %v1325
        %1359 = vst.msk [vmem:[#allocation4 + $0xa0] sm:$0xff] %vm1338, %v1326
        %1360 = vst.msk [vmem:[#allocation4 + $0xa8] sm:$0xff] %vm1338, %v1327
        %1361 = vst.msk [vmem:[#allocation4 + $0xb0] sm:$0xff] %vm1338, %v1328
        %1362 = vst.msk [vmem:[#allocation4 + $0xb8] sm:$0xff] %vm1338, %v1329
        %1363 = vst.msk [vmem:[#allocation4 + $0xc0] sm:$0xff] %vm1338, %v1330
        %1364 = vst.msk [vmem:[#allocation4 + $0xc8] sm:$0xff] %vm1338, %v1331
        %1365 = vst.msk [vmem:[#allocation4 + $0xd0] sm:$0xff] %vm1338, %v1332
        %1366 = vst.msk [vmem:[#allocation4 + $0xd8] sm:$0xff] %vm1338, %v1333
        %1367 = vst.msk [vmem:[#allocation4 + $0xe0] sm:$0xff] %vm1338, %v1334
        %1368 = vst.msk [vmem:[#allocation4 + $0xe8] sm:$0xff] %vm1338, %v1335
        %1369 = vst.msk [vmem:[#allocation4 + $0xf0] sm:$0xff] %vm1338, %v1336
        %1370 = vst.msk [vmem:[#allocation4 + $0xf8] sm:$0xff] %vm1338, %v1337
        %v1374 = vrot.slane %v439, 1
        %v1375 = vrot.slane %v440, 1
        %v1376 = vsel %vm499, %v1374, %v1375
        %v1377 = vrot.slane %v441, 1
        %v1378 = vsel %vm499, %v1375, %v1377
        %1379 = vrot.lane.b32.xlu0 %v1376, 4
        %v1380 = vpop.permute.xlu0 %1379
        %1381 = vrot.lane.b32.xlu0 %v1378, 4
        %v1382 = vpop.permute.xlu0 %1381
        %v1385 = vrot.slane %v439, 2
        %v1386 = vrot.slane %v440, 2
        %v1387 = vsel %vm676, %v1385, %v1386
        %v1388 = vrot.slane %v441, 2
        %v1389 = vsel %vm676, %v1386, %v1388
        %1390 = vrot.lane.b32.xlu0 %v1387, 8
        %v1391 = vpop.permute.xlu0 %1390
        %1392 = vrot.lane.b32.xlu0 %v1389, 8
        %v1393 = vpop.permute.xlu0 %1392
        %v1396 = vrot.slane %v439, 3
        %v1397 = vrot.slane %v440, 3
        %v1398 = vsel %vm853, %v1396, %v1397
        %v1399 = vrot.slane %v441, 3
        %v1400 = vsel %vm853, %v1397, %v1399
        %1401 = vrot.lane.b32.xlu0 %v1398, 12
        %v1402 = vpop.permute.xlu0 %1401
        %1403 = vrot.lane.b32.xlu0 %v1400, 12
        %v1404 = vpop.permute.xlu0 %1403
        %v1407 = vrot.slane %v439, 4
        %v1408 = vrot.slane %v440, 4
        %v1409 = vsel %vm1030, %v1407, %v1408
        %v1410 = vrot.slane %v441, 4
        %v1411 = vsel %vm1030, %v1408, %v1410
        %1412 = vrot.lane.b32.xlu0 %v1409, 16
        %v1413 = vpop.permute.xlu0 %1412
        %1414 = vrot.lane.b32.xlu0 %v1411, 16
        %v1415 = vpop.permute.xlu0 %1414
        %v1418 = vsel %vm278, %v439, %v1380
        %v1419 = vsel %vm278, %v440, %v1382
        %v1420 = vsel %vm1239, %v1418, %v1391
        %v1421 = vsel %vm1239, %v1419, %v1393
        %v1422 = vsel %vm1272, %v1420, %v1402
        %v1423 = vsel %vm1272, %v1421, %v1404
        %v1424 = vsel %vm1305, %v1422, %v1413
        %v1425 = vsel %vm1305, %v1423, %v1415
        %1458 = vrot.lane.b32.xlu0 %v1308, 20
        %v1459 = vpop.permute.xlu0 %1458
        %1460 = vrot.lane.b32.xlu0 %v1309, 20
        %v1461 = vpop.permute.xlu0 %1460
        %1462 = vrot.lane.b32.xlu0 %v1310, 20
        %v1463 = vpop.permute.xlu0 %1462
        %1464 = vrot.lane.b32.xlu0 %v1311, 20
        %v1465 = vpop.permute.xlu0 %1464
        %1466 = vrot.lane.b32.xlu0 %v1312, 20
        %v1467 = vpop.permute.xlu0 %1466
        %1468 = vrot.lane.b32.xlu0 %v1313, 20
        %v1469 = vpop.permute.xlu0 %1468
        %1470 = vrot.lane.b32.xlu0 %v1314, 20
        %v1471 = vpop.permute.xlu0 %1470
        %1472 = vrot.lane.b32.xlu0 %v1315, 20
        %v1473 = vpop.permute.xlu0 %1472
        %1474 = vrot.lane.b32.xlu0 %v1316, 20
        %v1475 = vpop.permute.xlu0 %1474
        %1476 = vrot.lane.b32.xlu0 %v1317, 20
        %v1477 = vpop.permute.xlu0 %1476
        %1478 = vrot.lane.b32.xlu0 %v1318, 20
        %v1479 = vpop.permute.xlu0 %1478
        %1480 = vrot.lane.b32.xlu0 %v1319, 20
        %v1481 = vpop.permute.xlu0 %1480
        %1482 = vrot.lane.b32.xlu0 %v1320, 20
        %v1483 = vpop.permute.xlu0 %1482
        %1484 = vrot.lane.b32.xlu0 %v1321, 20
        %v1485 = vpop.permute.xlu0 %1484
        %1486 = vrot.lane.b32.xlu0 %v1322, 20
        %v1487 = vpop.permute.xlu0 %1486
        %1488 = vrot.lane.b32.xlu0 %v1323, 20
        %v1489 = vpop.permute.xlu0 %1488
        %1490 = vrot.lane.b32.xlu0 %v1324, 20
        %v1491 = vpop.permute.xlu0 %1490
        %1492 = vrot.lane.b32.xlu0 %v1325, 20
        %v1493 = vpop.permute.xlu0 %1492
        %1494 = vrot.lane.b32.xlu0 %v1326, 20
        %v1495 = vpop.permute.xlu0 %1494
        %1496 = vrot.lane.b32.xlu0 %v1327, 20
        %v1497 = vpop.permute.xlu0 %1496
        %1498 = vrot.lane.b32.xlu0 %v1328, 20
        %v1499 = vpop.permute.xlu0 %1498
        %1500 = vrot.lane.b32.xlu0 %v1329, 20
        %v1501 = vpop.permute.xlu0 %1500
        %1502 = vrot.lane.b32.xlu0 %v1330, 20
        %v1503 = vpop.permute.xlu0 %1502
        %1504 = vrot.lane.b32.xlu0 %v1331, 20
        %v1505 = vpop.permute.xlu0 %1504
        %1506 = vrot.lane.b32.xlu0 %v1332, 20
        %v1507 = vpop.permute.xlu0 %1506
        %1508 = vrot.lane.b32.xlu0 %v1333, 20
        %v1509 = vpop.permute.xlu0 %1508
        %1510 = vrot.lane.b32.xlu0 %v1334, 20
        %v1511 = vpop.permute.xlu0 %1510
        %1512 = vrot.lane.b32.xlu0 %v1335, 20
        %v1513 = vpop.permute.xlu0 %1512
        %1514 = vrot.lane.b32.xlu0 %v1336, 20
        %v1515 = vpop.permute.xlu0 %1514
        %1516 = vrot.lane.b32.xlu0 %v1337, 20
        %v1517 = vpop.permute.xlu0 %1516
        %1518 = vrot.lane.b32.xlu0 %v1424, 20
        %v1519 = vpop.permute.xlu0 %1518
        %1520 = vrot.lane.b32.xlu0 %v1425, 20
        %v1521 = vpop.permute.xlu0 %1520
        %vm1554 = vcmask 326816
        %1555 = vst.msk [vmem:[#allocation4] sm:$0xff] %vm1554, %v1459
        %1556 = vst.msk [vmem:[#allocation4 + $0x8] sm:$0xff] %vm1554, %v1461
        %1557 = vst.msk [vmem:[#allocation4 + $0x10] sm:$0xff] %vm1554, %v1463
        %1558 = vst.msk [vmem:[#allocation4 + $0x18] sm:$0xff] %vm1554, %v1465
        %1559 = vst.msk [vmem:[#allocation4 + $0x20] sm:$0xff] %vm1554, %v1467
        %1560 = vst.msk [vmem:[#allocation4 + $0x28] sm:$0xff] %vm1554, %v1469
        %1561 = vst.msk [vmem:[#allocation4 + $0x30] sm:$0xff] %vm1554, %v1471
        %1562 = vst.msk [vmem:[#allocation4 + $0x38] sm:$0xff] %vm1554, %v1473
        %1563 = vst.msk [vmem:[#allocation4 + $0x40] sm:$0xff] %vm1554, %v1475
        %1564 = vst.msk [vmem:[#allocation4 + $0x48] sm:$0xff] %vm1554, %v1477
        %1565 = vst.msk [vmem:[#allocation4 + $0x50] sm:$0xff] %vm1554, %v1479
        %1566 = vst.msk [vmem:[#allocation4 + $0x58] sm:$0xff] %vm1554, %v1481
        %1567 = vst.msk [vmem:[#allocation4 + $0x60] sm:$0xff] %vm1554, %v1483
        %1568 = vst.msk [vmem:[#allocation4 + $0x68] sm:$0xff] %vm1554, %v1485
        %1569 = vst.msk [vmem:[#allocation4 + $0x70] sm:$0xff] %vm1554, %v1487
        %1570 = vst.msk [vmem:[#allocation4 + $0x78] sm:$0xff] %vm1554, %v1489
        %1571 = vst.msk [vmem:[#allocation4 + $0x80] sm:$0xff] %vm1554, %v1491
        %1572 = vst.msk [vmem:[#allocation4 + $0x88] sm:$0xff] %vm1554, %v1493
        %1573 = vst.msk [vmem:[#allocation4 + $0x90] sm:$0xff] %vm1554, %v1495
        %1574 = vst.msk [vmem:[#allocation4 + $0x98] sm:$0xff] %vm1554, %v1497
        %1575 = vst.msk [vmem:[#allocation4 + $0xa0] sm:$0xff] %vm1554, %v1499
        %1576 = vst.msk [vmem:[#allocation4 + $0xa8] sm:$0xff] %vm1554, %v1501
        %1577 = vst.msk [vmem:[#allocation4 + $0xb0] sm:$0xff] %vm1554, %v1503
        %1578 = vst.msk [vmem:[#allocation4 + $0xb8] sm:$0xff] %vm1554, %v1505
        %1579 = vst.msk [vmem:[#allocation4 + $0xc0] sm:$0xff] %vm1554, %v1507
        %1580 = vst.msk [vmem:[#allocation4 + $0xc8] sm:$0xff] %vm1554, %v1509
        %1581 = vst.msk [vmem:[#allocation4 + $0xd0] sm:$0xff] %vm1554, %v1511
        %1582 = vst.msk [vmem:[#allocation4 + $0xd8] sm:$0xff] %vm1554, %v1513
        %1583 = vst.msk [vmem:[#allocation4 + $0xe0] sm:$0xff] %vm1554, %v1515
        %1584 = vst.msk [vmem:[#allocation4 + $0xe8] sm:$0xff] %vm1554, %v1517
        %1585 = vst.msk [vmem:[#allocation4 + $0xf0] sm:$0xff] %vm1554, %v1519
        %1586 = vst.msk [vmem:[#allocation4 + $0xf8] sm:$0xff] %vm1554, %v1521
        %v1590 = vrot.slane %v442, 1
        %v1591 = vrot.slane %v443, 1
        %v1592 = vsel %vm499, %v1590, %v1591
        %v1593 = vrot.slane %v444, 1
        %v1594 = vsel %vm499, %v1591, %v1593
        %1595 = vrot.lane.b32.xlu0 %v1592, 4
        %v1596 = vpop.permute.xlu0 %1595
        %1597 = vrot.lane.b32.xlu0 %v1594, 4
        %v1598 = vpop.permute.xlu0 %1597
        %v1601 = vrot.slane %v442, 2
        %v1602 = vrot.slane %v443, 2
        %v1603 = vsel %vm676, %v1601, %v1602
        %v1604 = vrot.slane %v444, 2
        %v1605 = vsel %vm676, %v1602, %v1604
        %1606 = vrot.lane.b32.xlu0 %v1603, 8
        %v1607 = vpop.permute.xlu0 %1606
        %1608 = vrot.lane.b32.xlu0 %v1605, 8
        %v1609 = vpop.permute.xlu0 %1608
        %v1612 = vrot.slane %v442, 3
        %v1613 = vrot.slane %v443, 3
        %v1614 = vsel %vm853, %v1612, %v1613
        %v1615 = vrot.slane %v444, 3
        %v1616 = vsel %vm853, %v1613, %v1615
        %1617 = vrot.lane.b32.xlu0 %v1614, 12
        %v1618 = vpop.permute.xlu0 %1617
        %1619 = vrot.lane.b32.xlu0 %v1616, 12
        %v1620 = vpop.permute.xlu0 %1619
        %v1623 = vrot.slane %v442, 4
        %v1624 = vrot.slane %v443, 4
        %v1625 = vsel %vm1030, %v1623, %v1624
        %v1626 = vrot.slane %v444, 4
        %v1627 = vsel %vm1030, %v1624, %v1626
        %1628 = vrot.lane.b32.xlu0 %v1625, 16
        %v1629 = vpop.permute.xlu0 %1628
        %1630 = vrot.lane.b32.xlu0 %v1627, 16
        %v1631 = vpop.permute.xlu0 %1630
        %v1634 = vsel %vm278, %v442, %v1596
        %v1635 = vsel %vm278, %v443, %v1598
        %v1636 = vsel %vm1239, %v1634, %v1607
        %v1637 = vsel %vm1239, %v1635, %v1609
        %v1638 = vsel %vm1272, %v1636, %v1618
        %v1639 = vsel %vm1272, %v1637, %v1620
        %v1640 = vsel %vm1305, %v1638, %v1629
        %v1641 = vsel %vm1305, %v1639, %v1631
        %1644 = vrot.lane.b32.xlu0 %v1310, 40
        %v1645 = vpop.permute.xlu0 %1644
        %1646 = vrot.lane.b32.xlu0 %v1311, 40
        %v1647 = vpop.permute.xlu0 %1646
        %1648 = vrot.lane.b32.xlu0 %v1312, 40
        %v1649 = vpop.permute.xlu0 %1648
        %1650 = vrot.lane.b32.xlu0 %v1313, 40
        %v1651 = vpop.permute.xlu0 %1650
        %1652 = vrot.lane.b32.xlu0 %v1314, 40
        %v1653 = vpop.permute.xlu0 %1652
        %1654 = vrot.lane.b32.xlu0 %v1315, 40
        %v1655 = vpop.permute.xlu0 %1654
        %1656 = vrot.lane.b32.xlu0 %v1316, 40
        %v1657 = vpop.permute.xlu0 %1656
        %1658 = vrot.lane.b32.xlu0 %v1317, 40
        %v1659 = vpop.permute.xlu0 %1658
        %1660 = vrot.lane.b32.xlu0 %v1318, 40
        %v1661 = vpop.permute.xlu0 %1660
        %1662 = vrot.lane.b32.xlu0 %v1319, 40
        %v1663 = vpop.permute.xlu0 %1662
        %1664 = vrot.lane.b32.xlu0 %v1320, 40
        %v1665 = vpop.permute.xlu0 %1664
        %1666 = vrot.lane.b32.xlu0 %v1321, 40
        %v1667 = vpop.permute.xlu0 %1666
        %1668 = vrot.lane.b32.xlu0 %v1322, 40
        %v1669 = vpop.permute.xlu0 %1668
        %1670 = vrot.lane.b32.xlu0 %v1323, 40
        %v1671 = vpop.permute.xlu0 %1670
        %1672 = vrot.lane.b32.xlu0 %v1324, 40
        %v1673 = vpop.permute.xlu0 %1672
        %1674 = vrot.lane.b32.xlu0 %v1325, 40
        %v1675 = vpop.permute.xlu0 %1674
        %1676 = vrot.lane.b32.xlu0 %v1326, 40
        %v1677 = vpop.permute.xlu0 %1676
        %1678 = vrot.lane.b32.xlu0 %v1327, 40
        %v1679 = vpop.permute.xlu0 %1678
        %1680 = vrot.lane.b32.xlu0 %v1328, 40
        %v1681 = vpop.permute.xlu0 %1680
        %1682 = vrot.lane.b32.xlu0 %v1329, 40
        %v1683 = vpop.permute.xlu0 %1682
        %1684 = vrot.lane.b32.xlu0 %v1330, 40
        %v1685 = vpop.permute.xlu0 %1684
        %1686 = vrot.lane.b32.xlu0 %v1331, 40
        %v1687 = vpop.permute.xlu0 %1686
        %1688 = vrot.lane.b32.xlu0 %v1332, 40
        %v1689 = vpop.permute.xlu0 %1688
        %1690 = vrot.lane.b32.xlu0 %v1333, 40
        %v1691 = vpop.permute.xlu0 %1690
        %1692 = vrot.lane.b32.xlu0 %v1334, 40
        %v1693 = vpop.permute.xlu0 %1692
        %1694 = vrot.lane.b32.xlu0 %v1335, 40
        %v1695 = vpop.permute.xlu0 %1694
        %1696 = vrot.lane.b32.xlu0 %v1336, 40
        %v1697 = vpop.permute.xlu0 %1696
        %1698 = vrot.lane.b32.xlu0 %v1337, 40
        %v1699 = vpop.permute.xlu0 %1698
        %1700 = vrot.lane.b32.xlu0 %v1424, 40
        %v1701 = vpop.permute.xlu0 %1700
        %1702 = vrot.lane.b32.xlu0 %v1425, 40
        %v1703 = vpop.permute.xlu0 %1702
        %1704 = vrot.lane.b32.xlu0 %v1640, 40
        %v1705 = vpop.permute.xlu0 %1704
        %1706 = vrot.lane.b32.xlu0 %v1641, 40
        %v1707 = vpop.permute.xlu0 %1706
        %vm1740 = vcmask 490816
        %1741 = vst.msk [vmem:[#allocation4] sm:$0xff] %vm1740, %v1645
        %1742 = vst.msk [vmem:[#allocation4 + $0x8] sm:$0xff] %vm1740, %v1647
        %1743 = vst.msk [vmem:[#allocation4 + $0x10] sm:$0xff] %vm1740, %v1649
        %1744 = vst.msk [vmem:[#allocation4 + $0x18] sm:$0xff] %vm1740, %v1651
        %1745 = vst.msk [vmem:[#allocation4 + $0x20] sm:$0xff] %vm1740, %v1653
        %1746 = vst.msk [vmem:[#allocation4 + $0x28] sm:$0xff] %vm1740, %v1655
        %1747 = vst.msk [vmem:[#allocation4 + $0x30] sm:$0xff] %vm1740, %v1657
        %1748 = vst.msk [vmem:[#allocation4 + $0x38] sm:$0xff] %vm1740, %v1659
        %1749 = vst.msk [vmem:[#allocation4 + $0x40] sm:$0xff] %vm1740, %v1661
        %1750 = vst.msk [vmem:[#allocation4 + $0x48] sm:$0xff] %vm1740, %v1663
        %1751 = vst.msk [vmem:[#allocation4 + $0x50] sm:$0xff] %vm1740, %v1665
        %1752 = vst.msk [vmem:[#allocation4 + $0x58] sm:$0xff] %vm1740, %v1667
        %1753 = vst.msk [vmem:[#allocation4 + $0x60] sm:$0xff] %vm1740, %v1669
        %1754 = vst.msk [vmem:[#allocation4 + $0x68] sm:$0xff] %vm1740, %v1671
        %1755 = vst.msk [vmem:[#allocation4 + $0x70] sm:$0xff] %vm1740, %v1673
        %1756 = vst.msk [vmem:[#allocation4 + $0x78] sm:$0xff] %vm1740, %v1675
        %1757 = vst.msk [vmem:[#allocation4 + $0x80] sm:$0xff] %vm1740, %v1677
        %1758 = vst.msk [vmem:[#allocation4 + $0x88] sm:$0xff] %vm1740, %v1679
        %1759 = vst.msk [vmem:[#allocation4 + $0x90] sm:$0xff] %vm1740, %v1681
        %1760 = vst.msk [vmem:[#allocation4 + $0x98] sm:$0xff] %vm1740, %v1683
        %1761 = vst.msk [vmem:[#allocation4 + $0xa0] sm:$0xff] %vm1740, %v1685
        %1762 = vst.msk [vmem:[#allocation4 + $0xa8] sm:$0xff] %vm1740, %v1687
        %1763 = vst.msk [vmem:[#allocation4 + $0xb0] sm:$0xff] %vm1740, %v1689
        %1764 = vst.msk [vmem:[#allocation4 + $0xb8] sm:$0xff] %vm1740, %v1691
        %1765 = vst.msk [vmem:[#allocation4 + $0xc0] sm:$0xff] %vm1740, %v1693
        %1766 = vst.msk [vmem:[#allocation4 + $0xc8] sm:$0xff] %vm1740, %v1695
        %1767 = vst.msk [vmem:[#allocation4 + $0xd0] sm:$0xff] %vm1740, %v1697
        %1768 = vst.msk [vmem:[#allocation4 + $0xd8] sm:$0xff] %vm1740, %v1699
        %1769 = vst.msk [vmem:[#allocation4 + $0xe0] sm:$0xff] %vm1740, %v1701
        %1770 = vst.msk [vmem:[#allocation4 + $0xe8] sm:$0xff] %vm1740, %v1703
        %1771 = vst.msk [vmem:[#allocation4 + $0xf0] sm:$0xff] %vm1740, %v1705
        %1772 = vst.msk [vmem:[#allocation4 + $0xf8] sm:$0xff] %vm1740, %v1707
        %v1776 = vrot.slane %v445, 1
        %v1777 = vrot.slane %v446, 1
        %v1778 = vsel %vm499, %v1776, %v1777
        %v1779 = vrot.slane %v447, 1
        %v1780 = vsel %vm499, %v1777, %v1779
        %1781 = vrot.lane.b32.xlu0 %v1778, 4
        %v1782 = vpop.permute.xlu0 %1781
        %1783 = vrot.lane.b32.xlu0 %v1780, 4
        %v1784 = vpop.permute.xlu0 %1783
        %v1787 = vrot.slane %v445, 2
        %v1788 = vrot.slane %v446, 2
        %v1789 = vsel %vm676, %v1787, %v1788
        %v1790 = vrot.slane %v447, 2
        %v1791 = vsel %vm676, %v1788, %v1790
        %1792 = vrot.lane.b32.xlu0 %v1789, 8
        %v1793 = vpop.permute.xlu0 %1792
        %1794 = vrot.lane.b32.xlu0 %v1791, 8
        %v1795 = vpop.permute.xlu0 %1794
        %v1798 = vrot.slane %v445, 3
        %v1799 = vrot.slane %v446, 3
        %v1800 = vsel %vm853, %v1798, %v1799
        %v1801 = vrot.slane %v447, 3
        %v1802 = vsel %vm853, %v1799, %v1801
        %1803 = vrot.lane.b32.xlu0 %v1800, 12
        %v1804 = vpop.permute.xlu0 %1803
        %1805 = vrot.lane.b32.xlu0 %v1802, 12
        %v1806 = vpop.permute.xlu0 %1805
        %v1809 = vrot.slane %v445, 4
        %v1810 = vrot.slane %v446, 4
        %v1811 = vsel %vm1030, %v1809, %v1810
        %v1812 = vrot.slane %v447, 4
        %v1813 = vsel %vm1030, %v1810, %v1812
        %1814 = vrot.lane.b32.xlu0 %v1811, 16
        %v1815 = vpop.permute.xlu0 %1814
        %1816 = vrot.lane.b32.xlu0 %v1813, 16
        %v1817 = vpop.permute.xlu0 %1816
        %v1820 = vsel %vm278, %v445, %v1782
        %v1821 = vsel %vm278, %v446, %v1784
        %v1822 = vsel %vm1239, %v1820, %v1793
        %v1823 = vsel %vm1239, %v1821, %v1795
        %v1824 = vsel %vm1272, %v1822, %v1804
        %v1825 = vsel %vm1272, %v1823, %v1806
        %v1826 = vsel %vm1305, %v1824, %v1815
        %v1827 = vsel %vm1305, %v1825, %v1817
        %1830 = vrot.lane.b32.xlu0 %v1312, 60
        %v1831 = vpop.permute.xlu0 %1830
        %1832 = vrot.lane.b32.xlu0 %v1313, 60
        %v1833 = vpop.permute.xlu0 %1832
        %1834 = vrot.lane.b32.xlu0 %v1314, 60
        %v1835 = vpop.permute.xlu0 %1834
        %1836 = vrot.lane.b32.xlu0 %v1315, 60
        %v1837 = vpop.permute.xlu0 %1836
        %1838 = vrot.lane.b32.xlu0 %v1316, 60
        %v1839 = vpop.permute.xlu0 %1838
        %1840 = vrot.lane.b32.xlu0 %v1317, 60
        %v1841 = vpop.permute.xlu0 %1840
        %1842 = vrot.lane.b32.xlu0 %v1318, 60
        %v1843 = vpop.permute.xlu0 %1842
        %1844 = vrot.lane.b32.xlu0 %v1319, 60
        %v1845 = vpop.permute.xlu0 %1844
        %1846 = vrot.lane.b32.xlu0 %v1320, 60
        %v1847 = vpop.permute.xlu0 %1846
        %1848 = vrot.lane.b32.xlu0 %v1321, 60
        %v1849 = vpop.permute.xlu0 %1848
        %1850 = vrot.lane.b32.xlu0 %v1322, 60
        %v1851 = vpop.permute.xlu0 %1850
        %1852 = vrot.lane.b32.xlu0 %v1323, 60
        %v1853 = vpop.permute.xlu0 %1852
        %1854 = vrot.lane.b32.xlu0 %v1324, 60
        %v1855 = vpop.permute.xlu0 %1854
        %1856 = vrot.lane.b32.xlu0 %v1325, 60
        %v1857 = vpop.permute.xlu0 %1856
        %1858 = vrot.lane.b32.xlu0 %v1326, 60
        %v1859 = vpop.permute.xlu0 %1858
        %1860 = vrot.lane.b32.xlu0 %v1327, 60
        %v1861 = vpop.permute.xlu0 %1860
        %1862 = vrot.lane.b32.xlu0 %v1328, 60
        %v1863 = vpop.permute.xlu0 %1862
        %1864 = vrot.lane.b32.xlu0 %v1329, 60
        %v1865 = vpop.permute.xlu0 %1864
        %1866 = vrot.lane.b32.xlu0 %v1330, 60
        %v1867 = vpop.permute.xlu0 %1866
        %1868 = vrot.lane.b32.xlu0 %v1331, 60
        %v1869 = vpop.permute.xlu0 %1868
        %1870 = vrot.lane.b32.xlu0 %v1332, 60
        %v1871 = vpop.permute.xlu0 %1870
        %1872 = vrot.lane.b32.xlu0 %v1333, 60
        %v1873 = vpop.permute.xlu0 %1872
        %1874 = vrot.lane.b32.xlu0 %v1334, 60
        %v1875 = vpop.permute.xlu0 %1874
        %1876 = vrot.lane.b32.xlu0 %v1335, 60
        %v1877 = vpop.permute.xlu0 %1876
        %1878 = vrot.lane.b32.xlu0 %v1336, 60
        %v1879 = vpop.permute.xlu0 %1878
        %1880 = vrot.lane.b32.xlu0 %v1337, 60
        %v1881 = vpop.permute.xlu0 %1880
        %1882 = vrot.lane.b32.xlu0 %v1424, 60
        %v1883 = vpop.permute.xlu0 %1882
        %1884 = vrot.lane.b32.xlu0 %v1425, 60
        %v1885 = vpop.permute.xlu0 %1884
        %1886 = vrot.lane.b32.xlu0 %v1640, 60
        %v1887 = vpop.permute.xlu0 %1886
        %1888 = vrot.lane.b32.xlu0 %v1641, 60
        %v1889 = vpop.permute.xlu0 %1888
        %1890 = vrot.lane.b32.xlu0 %v1826, 60
        %v1891 = vpop.permute.xlu0 %1890
        %1892 = vrot.lane.b32.xlu0 %v1827, 60
        %v1893 = vpop.permute.xlu0 %1892
        %vm1926 = vcmask 654816
        %1927 = vst.msk [vmem:[#allocation4] sm:$0xff] %vm1926, %v1831
        %1928 = vst.msk [vmem:[#allocation4 + $0x8] sm:$0xff] %vm1926, %v1833
        %1929 = vst.msk [vmem:[#allocation4 + $0x10] sm:$0xff] %vm1926, %v1835
        %1930 = vst.msk [vmem:[#allocation4 + $0x18] sm:$0xff] %vm1926, %v1837
        %1931 = vst.msk [vmem:[#allocation4 + $0x20] sm:$0xff] %vm1926, %v1839
        %1932 = vst.msk [vmem:[#allocation4 + $0x28] sm:$0xff] %vm1926, %v1841
        %1933 = vst.msk [vmem:[#allocation4 + $0x30] sm:$0xff] %vm1926, %v1843
        %1934 = vst.msk [vmem:[#allocation4 + $0x38] sm:$0xff] %vm1926, %v1845
        %1935 = vst.msk [vmem:[#allocation4 + $0x40] sm:$0xff] %vm1926, %v1847
        %1936 = vst.msk [vmem:[#allocation4 + $0x48] sm:$0xff] %vm1926, %v1849
        %1937 = vst.msk [vmem:[#allocation4 + $0x50] sm:$0xff] %vm1926, %v1851
        %1938 = vst.msk [vmem:[#allocation4 + $0x58] sm:$0xff] %vm1926, %v1853
        %1939 = vst.msk [vmem:[#allocation4 + $0x60] sm:$0xff] %vm1926, %v1855
        %1940 = vst.msk [vmem:[#allocation4 + $0x68] sm:$0xff] %vm1926, %v1857
        %1941 = vst.msk [vmem:[#allocation4 + $0x70] sm:$0xff] %vm1926, %v1859
        %1942 = vst.msk [vmem:[#allocation4 + $0x78] sm:$0xff] %vm1926, %v1861
        %1943 = vst.msk [vmem:[#allocation4 + $0x80] sm:$0xff] %vm1926, %v1863
        %1944 = vst.msk [vmem:[#allocation4 + $0x88] sm:$0xff] %vm1926, %v1865
        %1945 = vst.msk [vmem:[#allocation4 + $0x90] sm:$0xff] %vm1926, %v1867
        %1946 = vst.msk [vmem:[#allocation4 + $0x98] sm:$0xff] %vm1926, %v1869
        %1947 = vst.msk [vmem:[#allocation4 + $0xa0] sm:$0xff] %vm1926, %v1871
        %1948 = vst.msk [vmem:[#allocation4 + $0xa8] sm:$0xff] %vm1926, %v1873
        %1949 = vst.msk [vmem:[#allocation4 + $0xb0] sm:$0xff] %vm1926, %v1875
        %1950 = vst.msk [vmem:[#allocation4 + $0xb8] sm:$0xff] %vm1926, %v1877
        %1951 = vst.msk [vmem:[#allocation4 + $0xc0] sm:$0xff] %vm1926, %v1879
        %1952 = vst.msk [vmem:[#allocation4 + $0xc8] sm:$0xff] %vm1926, %v1881
        %1953 = vst.msk [vmem:[#allocation4 + $0xd0] sm:$0xff] %vm1926, %v1883
        %1954 = vst.msk [vmem:[#allocation4 + $0xd8] sm:$0xff] %vm1926, %v1885
        %1955 = vst.msk [vmem:[#allocation4 + $0xe0] sm:$0xff] %vm1926, %v1887
        %1956 = vst.msk [vmem:[#allocation4 + $0xe8] sm:$0xff] %vm1926, %v1889
        %1957 = vst.msk [vmem:[#allocation4 + $0xf0] sm:$0xff] %vm1926, %v1891
        %1958 = vst.msk [vmem:[#allocation4 + $0xf8] sm:$0xff] %vm1926, %v1893
        %v1962 = vrot.slane %v448, 1
        %v1963 = vrot.slane %v449, 1
        %v1964 = vsel %vm499, %v1962, %v1963
        %v1965 = vrot.slane %v450, 1
        %v1966 = vsel %vm499, %v1963, %v1965
        %1967 = vrot.lane.b32.xlu0 %v1964, 4
        %v1968 = vpop.permute.xlu0 %1967
        %1969 = vrot.lane.b32.xlu0 %v1966, 4
        %v1970 = vpop.permute.xlu0 %1969
        %v1973 = vrot.slane %v448, 2
        %v1974 = vrot.slane %v449, 2
        %v1975 = vsel %vm676, %v1973, %v1974
        %v1976 = vrot.slane %v450, 2
        %v1977 = vsel %vm676, %v1974, %v1976
        %1978 = vrot.lane.b32.xlu0 %v1975, 8
        %v1979 = vpop.permute.xlu0 %1978
        %1980 = vrot.lane.b32.xlu0 %v1977, 8
        %v1981 = vpop.permute.xlu0 %1980
        %v1984 = vrot.slane %v448, 3
        %v1985 = vrot.slane %v449, 3
        %v1986 = vsel %vm853, %v1984, %v1985
        %v1987 = vrot.slane %v450, 3
        %v1988 = vsel %vm853, %v1985, %v1987
        %1989 = vrot.lane.b32.xlu0 %v1986, 12
        %v1990 = vpop.permute.xlu0 %1989
        %1991 = vrot.lane.b32.xlu0 %v1988, 12
        %v1992 = vpop.permute.xlu0 %1991
        %v1995 = vrot.slane %v448, 4
        %v1996 = vrot.slane %v449, 4
        %v1997 = vsel %vm1030, %v1995, %v1996
        %v1998 = vrot.slane %v450, 4
        %v1999 = vsel %vm1030, %v1996, %v1998
        %2000 = vrot.lane.b32.xlu0 %v1997, 16
        %v2001 = vpop.permute.xlu0 %2000
        %2002 = vrot.lane.b32.xlu0 %v1999, 16
        %v2003 = vpop.permute.xlu0 %2002
        %v2006 = vsel %vm278, %v448, %v1968
        %v2007 = vsel %vm278, %v449, %v1970
        %v2008 = vsel %vm1239, %v2006, %v1979
        %v2009 = vsel %vm1239, %v2007, %v1981
        %v2010 = vsel %vm1272, %v2008, %v1990
        %v2011 = vsel %vm1272, %v2009, %v1992
        %v2012 = vsel %vm1305, %v2010, %v2001
        %v2013 = vsel %vm1305, %v2011, %v2003
        %2016 = vrot.lane.b32.xlu0 %v1314, 80
        %v2017 = vpop.permute.xlu0 %2016
        %2018 = vrot.lane.b32.xlu0 %v1315, 80
        %v2019 = vpop.permute.xlu0 %2018
        %2020 = vrot.lane.b32.xlu0 %v1316, 80
        %v2021 = vpop.permute.xlu0 %2020
        %2022 = vrot.lane.b32.xlu0 %v1317, 80
        %v2023 = vpop.permute.xlu0 %2022
        %2024 = vrot.lane.b32.xlu0 %v1318, 80
        %v2025 = vpop.permute.xlu0 %2024
        %2026 = vrot.lane.b32.xlu0 %v1319, 80
        %v2027 = vpop.permute.xlu0 %2026
        %2028 = vrot.lane.b32.xlu0 %v1320, 80
        %v2029 = vpop.permute.xlu0 %2028
        %2030 = vrot.lane.b32.xlu0 %v1321, 80
        %v2031 = vpop.permute.xlu0 %2030
        %2032 = vrot.lane.b32.xlu0 %v1322, 80
        %v2033 = vpop.permute.xlu0 %2032
        %2034 = vrot.lane.b32.xlu0 %v1323, 80
        %v2035 = vpop.permute.xlu0 %2034
        %2036 = vrot.lane.b32.xlu0 %v1324, 80
        %v2037 = vpop.permute.xlu0 %2036
        %2038 = vrot.lane.b32.xlu0 %v1325, 80
        %v2039 = vpop.permute.xlu0 %2038
        %2040 = vrot.lane.b32.xlu0 %v1326, 80
        %v2041 = vpop.permute.xlu0 %2040
        %2042 = vrot.lane.b32.xlu0 %v1327, 80
        %v2043 = vpop.permute.xlu0 %2042
        %2044 = vrot.lane.b32.xlu0 %v1328, 80
        %v2045 = vpop.permute.xlu0 %2044
        %2046 = vrot.lane.b32.xlu0 %v1329, 80
        %v2047 = vpop.permute.xlu0 %2046
        %2048 = vrot.lane.b32.xlu0 %v1330, 80
        %v2049 = vpop.permute.xlu0 %2048
        %2050 = vrot.lane.b32.xlu0 %v1331, 80
        %v2051 = vpop.permute.xlu0 %2050
        %2052 = vrot.lane.b32.xlu0 %v1332, 80
        %v2053 = vpop.permute.xlu0 %2052
        %2054 = vrot.lane.b32.xlu0 %v1333, 80
        %v2055 = vpop.permute.xlu0 %2054
        %2056 = vrot.lane.b32.xlu0 %v1334, 80
        %v2057 = vpop.permute.xlu0 %2056
        %2058 = vrot.lane.b32.xlu0 %v1335, 80
        %v2059 = vpop.permute.xlu0 %2058
        %2060 = vrot.lane.b32.xlu0 %v1336, 80
        %v2061 = vpop.permute.xlu0 %2060
        %2062 = vrot.lane.b32.xlu0 %v1337, 80
        %v2063 = vpop.permute.xlu0 %2062
        %2064 = vrot.lane.b32.xlu0 %v1424, 80
        %v2065 = vpop.permute.xlu0 %2064
        %2066 = vrot.lane.b32.xlu0 %v1425, 80
        %v2067 = vpop.permute.xlu0 %2066
        %2068 = vrot.lane.b32.xlu0 %v1640, 80
        %v2069 = vpop.permute.xlu0 %2068
        %2070 = vrot.lane.b32.xlu0 %v1641, 80
        %v2071 = vpop.permute.xlu0 %2070
        %2072 = vrot.lane.b32.xlu0 %v1826, 80
        %v2073 = vpop.permute.xlu0 %2072
        %2074 = vrot.lane.b32.xlu0 %v1827, 80
        %v2075 = vpop.permute.xlu0 %2074
        %2076 = vrot.lane.b32.xlu0 %v2012, 80
        %v2077 = vpop.permute.xlu0 %2076
        %2078 = vrot.lane.b32.xlu0 %v2013, 80
        %v2079 = vpop.permute.xlu0 %2078
        %vm2112 = vcmask 818816
        %2113 = vst.msk [vmem:[#allocation4] sm:$0xff] %vm2112, %v2017
        %2114 = vst.msk [vmem:[#allocation4 + $0x8] sm:$0xff] %vm2112, %v2019
        %2115 = vst.msk [vmem:[#allocation4 + $0x10] sm:$0xff] %vm2112, %v2021
        %2116 = vst.msk [vmem:[#allocation4 + $0x18] sm:$0xff] %vm2112, %v2023
        %2117 = vst.msk [vmem:[#allocation4 + $0x20] sm:$0xff] %vm2112, %v2025
        %2118 = vst.msk [vmem:[#allocation4 + $0x28] sm:$0xff] %vm2112, %v2027
        %2119 = vst.msk [vmem:[#allocation4 + $0x30] sm:$0xff] %vm2112, %v2029
        %2120 = vst.msk [vmem:[#allocation4 + $0x38] sm:$0xff] %vm2112, %v2031
        %2121 = vst.msk [vmem:[#allocation4 + $0x40] sm:$0xff] %vm2112, %v2033
        %2122 = vst.msk [vmem:[#allocation4 + $0x48] sm:$0xff] %vm2112, %v2035
        %2123 = vst.msk [vmem:[#allocation4 + $0x50] sm:$0xff] %vm2112, %v2037
        %2124 = vst.msk [vmem:[#allocation4 + $0x58] sm:$0xff] %vm2112, %v2039
        %2125 = vst.msk [vmem:[#allocation4 + $0x60] sm:$0xff] %vm2112, %v2041
        %2126 = vst.msk [vmem:[#allocation4 + $0x68] sm:$0xff] %vm2112, %v2043
        %2127 = vst.msk [vmem:[#allocation4 + $0x70] sm:$0xff] %vm2112, %v2045
        %2128 = vst.msk [vmem:[#allocation4 + $0x78] sm:$0xff] %vm2112, %v2047
        %2129 = vst.msk [vmem:[#allocation4 + $0x80] sm:$0xff] %vm2112, %v2049
        %2130 = vst.msk [vmem:[#allocation4 + $0x88] sm:$0xff] %vm2112, %v2051
        %2131 = vst.msk [vmem:[#allocation4 + $0x90] sm:$0xff] %vm2112, %v2053
        %2132 = vst.msk [vmem:[#allocation4 + $0x98] sm:$0xff] %vm2112, %v2055
        %2133 = vst.msk [vmem:[#allocation4 + $0xa0] sm:$0xff] %vm2112, %v2057
        %2134 = vst.msk [vmem:[#allocation4 + $0xa8] sm:$0xff] %vm2112, %v2059
        %2135 = vst.msk [vmem:[#allocation4 + $0xb0] sm:$0xff] %vm2112, %v2061
        %2136 = vst.msk [vmem:[#allocation4 + $0xb8] sm:$0xff] %vm2112, %v2063
        %2137 = vst.msk [vmem:[#allocation4 + $0xc0] sm:$0xff] %vm2112, %v2065
        %2138 = vst.msk [vmem:[#allocation4 + $0xc8] sm:$0xff] %vm2112, %v2067
        %2139 = vst.msk [vmem:[#allocation4 + $0xd0] sm:$0xff] %vm2112, %v2069
        %2140 = vst.msk [vmem:[#allocation4 + $0xd8] sm:$0xff] %vm2112, %v2071
        %2141 = vst.msk [vmem:[#allocation4 + $0xe0] sm:$0xff] %vm2112, %v2073
        %2142 = vst.msk [vmem:[#allocation4 + $0xe8] sm:$0xff] %vm2112, %v2075
        %2143 = vst.msk [vmem:[#allocation4 + $0xf0] sm:$0xff] %vm2112, %v2077
        %2144 = vst.msk [vmem:[#allocation4 + $0xf8] sm:$0xff] %vm2112, %v2079
        %v2145 = vld [vmem:[#allocation4] sm:$0xff]
        %v2146 = vld [vmem:[#allocation4 + $0x8] sm:$0xff]
        %v2147 = vld [vmem:[#allocation4 + $0x10] sm:$0xff]
        %v2148 = vld [vmem:[#allocation4 + $0x18] sm:$0xff]
        %v2149 = vld [vmem:[#allocation4 + $0x20] sm:$0xff]
        %v2150 = vld [vmem:[#allocation4 + $0x28] sm:$0xff]
        %v2151 = vld [vmem:[#allocation4 + $0x30] sm:$0xff]
        %v2152 = vld [vmem:[#allocation4 + $0x38] sm:$0xff]
        %v2153 = vld [vmem:[#allocation4 + $0x40] sm:$0xff]
        %v2154 = vld [vmem:[#allocation4 + $0x48] sm:$0xff]
        %v2155 = vld [vmem:[#allocation4 + $0x50] sm:$0xff]
        %v2156 = vld [vmem:[#allocation4 + $0x58] sm:$0xff]
        %v2157 = vld [vmem:[#allocation4 + $0x60] sm:$0xff]
        %v2158 = vld [vmem:[#allocation4 + $0x68] sm:$0xff]
        %v2159 = vld [vmem:[#allocation4 + $0x70] sm:$0xff]
        %v2160 = vld [vmem:[#allocation4 + $0x78] sm:$0xff]
        %v2161 = vld [vmem:[#allocation4 + $0x80] sm:$0xff]
        %v2162 = vld [vmem:[#allocation4 + $0x88] sm:$0xff]
        %v2163 = vld [vmem:[#allocation4 + $0x90] sm:$0xff]
        %v2164 = vld [vmem:[#allocation4 + $0x98] sm:$0xff]
        %v2165 = vld [vmem:[#allocation4 + $0xa0] sm:$0xff]
        %v2166 = vld [vmem:[#allocation4 + $0xa8] sm:$0xff]
        %v2167 = vld [vmem:[#allocation4 + $0xb0] sm:$0xff]
        %v2168 = vld [vmem:[#allocation4 + $0xb8] sm:$0xff]
        %v2169 = vld [vmem:[#allocation4 + $0xc0] sm:$0xff]
        %v2170 = vld [vmem:[#allocation4 + $0xc8] sm:$0xff]
        %v2171 = vld [vmem:[#allocation4 + $0xd0] sm:$0xff]
        %v2172 = vld [vmem:[#allocation4 + $0xd8] sm:$0xff]
        %v2173 = vld [vmem:[#allocation4 + $0xe0] sm:$0xff]
        %v2174 = vld [vmem:[#allocation4 + $0xe8] sm:$0xff]
        %v2175 = vld [vmem:[#allocation4 + $0xf0] sm:$0xff]
        %v2176 = vld [vmem:[#allocation4 + $0xf8] sm:$0xff]
        %v2177 = vld [vmem:[%s1] sm:$0xff]
        %v2178 = vld [vmem:[%s1 + $0x8] sm:$0xff]
        %v2179 = vld [vmem:[%s1 + $0x10] sm:$0xff]
        %v2180 = vld [vmem:[%s1 + $0x18] sm:$0xff]
        %v2181 = vld [vmem:[%s1 + $0x20] sm:$0xff]
        %v2182 = vld [vmem:[%s1 + $0x28] sm:$0xff]
        %v2183 = vld [vmem:[%s1 + $0x30] sm:$0xff]
        %v2184 = vld [vmem:[%s1 + $0x38] sm:$0xff]
        %v2185 = vld [vmem:[%s1 + $0x40] sm:$0xff]
        %v2186 = vld [vmem:[%s1 + $0x48] sm:$0xff]
        %v2187 = vld [vmem:[%s1 + $0x50] sm:$0xff]
        %v2188 = vld [vmem:[%s1 + $0x58] sm:$0xff]
        %v2189 = vld [vmem:[%s1 + $0x60] sm:$0xf]
        %vm2190 = vcmask 818176
        %v2192 = vsel %vm2190, %v2145, 0
        %v2195 = vsel %vm2190, %v2146, 0
        %v2198 = vsel %vm2190, %v2147, 0
        %v2201 = vsel %vm2190, %v2148, 0
        %v2204 = vsel %vm2190, %v2149, 0
        %v2207 = vsel %vm2190, %v2150, 0
        %v2210 = vsel %vm2190, %v2151, 0
        %v2213 = vsel %vm2190, %v2152, 0
        %v2216 = vsel %vm2190, %v2153, 0
        %v2219 = vsel %vm2190, %v2154, 0
        %v2222 = vsel %vm2190, %v2155, 0
        %v2225 = vsel %vm2190, %v2156, 0
        %v2228 = vsel %vm2190, %v2157, 0
        %v2231 = vsel %vm2190, %v2158, 0
        %v2234 = vsel %vm2190, %v2159, 0
        %v2237 = vsel %vm2190, %v2160, 0
        %v2240 = vsel %vm2190, %v2161, 0
        %v2243 = vsel %vm2190, %v2162, 0
        %v2246 = vsel %vm2190, %v2163, 0
        %v2249 = vsel %vm2190, %v2164, 0
        %v2252 = vsel %vm2190, %v2165, 0
        %v2255 = vsel %vm2190, %v2166, 0
        %v2258 = vsel %vm2190, %v2167, 0
        %v2261 = vsel %vm2190, %v2168, 0
        %v2264 = vsel %vm2190, %v2169, 0
        %v2267 = vsel %vm2190, %v2170, 0
        %v2270 = vsel %vm2190, %v2171, 0
        %v2273 = vsel %vm2190, %v2172, 0
        %v2276 = vsel %vm2190, %v2173, 0
        %v2279 = vsel %vm2190, %v2174, 0
        %v2282 = vsel %vm2190, %v2175, 0
        %v2285 = vsel %vm2190, %v2176, 0
        %v2288 = vsel %vm1030, %v2189, 0
        %2290 = vmatprep.subr.mxu0 0.0
        %2291 = vmatpush1.msra.mxu0 %v2177
        %2292 = vmatprep.subr.mxu0 0.0
        %2293 = vmatpush1.msra.mxu0 %v2178
        %2294 = vmatprep.subr.mxu0 0.0
        %2295 = vmatpush1.msra.mxu0 %v2179
        %2296 = vmatprep.subr.mxu0 0.0
        %2297 = vmatpush1.msra.mxu0 %v2180
        %2298 = vmatprep.subr.mxu0 0.0
        %2299 = vmatpush1.msra.mxu0 %v2181
        %2300 = vmatprep.subr.mxu0 0.0
        %2301 = vmatpush1.msra.mxu0 %v2182
        %2302 = vmatprep.subr.mxu0 0.0
        %2303 = vmatpush1.msra.mxu0 %v2183
        %2304 = vmatprep.subr.mxu0 0.0
        %2305 = vmatpush1.msra.mxu0 %v2184
        %2306 = vmatprep.subr.mxu0 0.0
        %2307 = vmatpush1.msra.mxu0 %v2185
        %2308 = vmatprep.subr.mxu0 0.0
        %2309 = vmatpush1.msra.mxu0 %v2186
        %2310 = vmatprep.subr.mxu0 0.0
        %2311 = vmatpush1.msra.mxu0 %v2187
        %2312 = vmatprep.subr.mxu0 0.0
        %2313 = vmatpush1.msra.mxu0 %v2188
        %2314 = vmatprep.subr.mxu0 0.0
        %2315 = vmatpush1.msra.mxu0 %v2288
        %2316 = vmatprep.subr.mxu0 0.0
        %2317 = vmatpush1.msra.mxu0 0.0
        %2318 = vmatprep.subr.mxu0 0.0
        %2319 = vmatpush1.msra.mxu0 0.0
        %2320 = vmatprep.subr.mxu0 0.0
        %2321 = vmatpush1.msra.mxu0 0.0
        %2322 = vmatprep.subr.mxu0 0.0
        %2323 = vmatpush1.msra.mxu0 0.0
        %2324 = vmatprep.subr.mxu0 0.0
        %2325 = vmatpush1.msra.mxu0 0.0
        %2326 = vmatprep.subr.mxu0 0.0
        %2327 = vmatpush1.msra.mxu0 0.0
        %2328 = vmatprep.subr.mxu0 0.0
        %2329 = vmatpush1.msra.mxu0 0.0
        %2330 = vmatprep.subr.mxu0 0.0
        %2331 = vmatpush1.msra.mxu0 0.0
        %2332 = vmatprep.subr.mxu0 0.0
        %2333 = vmatpush1.msra.mxu0 0.0
        %2334 = vmatprep.subr.mxu0 0.0
        %2335 = vmatpush1.msra.mxu0 0.0
        %2336 = vmatprep.subr.mxu0 0.0
        %2337 = vmatpush1.msra.mxu0 0.0
        %2338 = vmatprep.subr.mxu0 0.0
        %2339 = vmatpush1.msra.mxu0 0.0
        %2340 = vmatprep.subr.mxu0 0.0
        %2341 = vmatpush1.msra.mxu0 0.0
        %2342 = vmatprep.subr.mxu0 0.0
        %2343 = vmatpush1.msra.mxu0 0.0
        %2344 = vmatprep.subr.mxu0 0.0
        %2345 = vmatpush1.msra.mxu0 0.0
        %2346 = vmatprep.subr.mxu0 0.0
        %2347 = vmatpush1.msra.mxu0 0.0
        %2348 = vmatprep.subr.mxu0 0.0
        %2349 = vmatpush1.msra.mxu0 0.0
        %2350 = vmatprep.subr.mxu0 0.0
        %2351 = vmatpush1.msra.mxu0 0.0
        %2352 = vmatprep.subr.mxu0 0.0
        %2353 = vmatpush1.msra.mxu0 0.0
        %2354 = vmatprep.mubr.f32.mxu0 0.0
        %2355 = vmatmul.mubr.f32.gmra.mrb[0].mxu0 %v2192
        %v2356 = vpop.f32.mrb[0].mxu0
        %v2357 = vadd.f32 0.0, %v2356
        %v2358 = vpop.f32.mrb[0].mxu0
        %2359 = vmatprep.mubr.f32.mxu0 0.0
        %2360 = vmatmul.mubr.f32.gmra.mrb[0].mxu0 %v2195
        %v2361 = vpop.f32.mrb[0].mxu0
        %v2362 = vadd.f32 0.0, %v2361
        %v2363 = vpop.f32.mrb[0].mxu0
        %2364 = vmatprep.mubr.f32.mxu0 0.0
        %2365 = vmatmul.mubr.f32.gmra.mrb[0].mxu0 %v2198
        %v2366 = vpop.f32.mrb[0].mxu0
        %v2367 = vadd.f32 0.0, %v2366
        %v2368 = vpop.f32.mrb[0].mxu0
        %2369 = vmatprep.mubr.f32.mxu0 0.0
        %2370 = vmatmul.mubr.f32.gmra.mrb[0].mxu0 %v2201
        %v2371 = vpop.f32.mrb[0].mxu0
        %v2372 = vadd.f32 0.0, %v2371
        %v2373 = vpop.f32.mrb[0].mxu0
        %2374 = vmatprep.mubr.f32.mxu0 0.0
        %2375 = vmatmul.mubr.f32.gmra.mrb[0].mxu0 %v2204
        %v2376 = vpop.f32.mrb[0].mxu0
        %v2377 = vadd.f32 0.0, %v2376
        %v2378 = vpop.f32.mrb[0].mxu0
        %2379 = vmatprep.mubr.f32.mxu0 0.0
        %2380 = vmatmul.mubr.f32.gmra.mrb[0].mxu0 %v2207
        %v2381 = vpop.f32.mrb[0].mxu0
        %v2382 = vadd.f32 0.0, %v2381
        %v2383 = vpop.f32.mrb[0].mxu0
        %2384 = vmatprep.mubr.f32.mxu0 0.0
        %2385 = vmatmul.mubr.f32.gmra.mrb[0].mxu0 %v2210
        %v2386 = vpop.f32.mrb[0].mxu0
        %v2387 = vadd.f32 0.0, %v2386
        %v2388 = vpop.f32.mrb[0].mxu0
        %2389 = vmatprep.mubr.f32.mxu0 0.0
        %2390 = vmatmul.mubr.f32.gmra.mrb[0].mxu0 %v2213
        %v2391 = vpop.f32.mrb[0].mxu0
        %v2392 = vadd.f32 0.0, %v2391
        %v2393 = vpop.f32.mrb[0].mxu0
        %2394 = vmatprep.mubr.f32.mxu0 0.0
        %2395 = vmatmul.mubr.f32.gmra.mrb[0].mxu0 %v2216
        %v2396 = vpop.f32.mrb[0].mxu0
        %v2397 = vadd.f32 0.0, %v2396
        %v2398 = vpop.f32.mrb[0].mxu0
        %2399 = vmatprep.mubr.f32.mxu0 0.0
        %2400 = vmatmul.mubr.f32.gmra.mrb[0].mxu0 %v2219
        %v2401 = vpop.f32.mrb[0].mxu0
        %v2402 = vadd.f32 0.0, %v2401
        %v2403 = vpop.f32.mrb[0].mxu0
        %2404 = vmatprep.mubr.f32.mxu0 0.0
        %2405 = vmatmul.mubr.f32.gmra.mrb[0].mxu0 %v2222
        %v2406 = vpop.f32.mrb[0].mxu0
        %v2407 = vadd.f32 0.0, %v2406
        %v2408 = vpop.f32.mrb[0].mxu0
        %2409 = vmatprep.mubr.f32.mxu0 0.0
        %2410 = vmatmul.mubr.f32.gmra.mrb[0].mxu0 %v2225
        %v2411 = vpop.f32.mrb[0].mxu0
        %v2412 = vadd.f32 0.0, %v2411
        %v2413 = vpop.f32.mrb[0].mxu0
        %2414 = vmatprep.mubr.f32.mxu0 0.0
        %2415 = vmatmul.mubr.f32.gmra.mrb[0].mxu0 %v2228
        %v2416 = vpop.f32.mrb[0].mxu0
        %v2417 = vadd.f32 0.0, %v2416
        %v2418 = vpop.f32.mrb[0].mxu0
        %2419 = vmatprep.mubr.f32.mxu0 0.0
        %2420 = vmatmul.mubr.f32.gmra.mrb[0].mxu0 %v2231
        %v2421 = vpop.f32.mrb[0].mxu0
        %v2422 = vadd.f32 0.0, %v2421
        %v2423 = vpop.f32.mrb[0].mxu0
        %2424 = vmatprep.mubr.f32.mxu0 0.0
        %2425 = vmatmul.mubr.f32.gmra.mrb[0].mxu0 %v2234
        %v2426 = vpop.f32.mrb[0].mxu0
        %v2427 = vadd.f32 0.0, %v2426
        %v2428 = vpop.f32.mrb[0].mxu0
        %2429 = vmatprep.mubr.f32.mxu0 0.0
        %2430 = vmatmul.mubr.f32.gmra.mrb[0].mxu0 %v2237
        %v2431 = vpop.f32.mrb[0].mxu0
        %v2432 = vadd.f32 0.0, %v2431
        %v2433 = vpop.f32.mrb[0].mxu0
        %2434 = vmatprep.mubr.f32.mxu0 0.0
        %2435 = vmatmul.mubr.f32.gmra.mrb[0].mxu0 %v2240
        %v2436 = vpop.f32.mrb[0].mxu0
        %v2437 = vadd.f32 0.0, %v2436
        %v2438 = vpop.f32.mrb[0].mxu0
        %2439 = vmatprep.mubr.f32.mxu0 0.0
        %2440 = vmatmul.mubr.f32.gmra.mrb[0].mxu0 %v2243
        %v2441 = vpop.f32.mrb[0].mxu0
        %v2442 = vadd.f32 0.0, %v2441
        %v2443 = vpop.f32.mrb[0].mxu0
        %2444 = vmatprep.mubr.f32.mxu0 0.0
        %2445 = vmatmul.mubr.f32.gmra.mrb[0].mxu0 %v2246
        %v2446 = vpop.f32.mrb[0].mxu0
        %v2447 = vadd.f32 0.0, %v2446
        %v2448 = vpop.f32.mrb[0].mxu0
        %2449 = vmatprep.mubr.f32.mxu0 0.0
        %2450 = vmatmul.mubr.f32.gmra.mrb[0].mxu0 %v2249
        %v2451 = vpop.f32.mrb[0].mxu0
        %v2452 = vadd.f32 0.0, %v2451
        %v2453 = vpop.f32.mrb[0].mxu0
        %2454 = vmatprep.mubr.f32.mxu0 0.0
        %2455 = vmatmul.mubr.f32.gmra.mrb[0].mxu0 %v2252
        %v2456 = vpop.f32.mrb[0].mxu0
        %v2457 = vadd.f32 0.0, %v2456
        %v2458 = vpop.f32.mrb[0].mxu0
        %2459 = vmatprep.mubr.f32.mxu0 0.0
        %2460 = vmatmul.mubr.f32.gmra.mrb[0].mxu0 %v2255
        %v2461 = vpop.f32.mrb[0].mxu0
        %v2462 = vadd.f32 0.0, %v2461
        %v2463 = vpop.f32.mrb[0].mxu0
        %2464 = vmatprep.mubr.f32.mxu0 0.0
        %2465 = vmatmul.mubr.f32.gmra.mrb[0].mxu0 %v2258
        %v2466 = vpop.f32.mrb[0].mxu0
        %v2467 = vadd.f32 0.0, %v2466
        %v2468 = vpop.f32.mrb[0].mxu0
        %2469 = vmatprep.mubr.f32.mxu0 0.0
        %2470 = vmatmul.mubr.f32.gmra.mrb[0].mxu0 %v2261
        %v2471 = vpop.f32.mrb[0].mxu0
        %v2472 = vadd.f32 0.0, %v2471
        %v2473 = vpop.f32.mrb[0].mxu0
        %2474 = vmatprep.mubr.f32.mxu0 0.0
        %2475 = vmatmul.mubr.f32.gmra.mrb[0].mxu0 %v2264
        %v2476 = vpop.f32.mrb[0].mxu0
        %v2477 = vadd.f32 0.0, %v2476
        %v2478 = vpop.f32.mrb[0].mxu0
        %2479 = vmatprep.mubr.f32.mxu0 0.0
        %2480 = vmatmul.mubr.f32.gmra.mrb[0].mxu0 %v2267
        %v2481 = vpop.f32.mrb[0].mxu0
        %v2482 = vadd.f32 0.0, %v2481
        %v2483 = vpop.f32.mrb[0].mxu0
        %2484 = vmatprep.mubr.f32.mxu0 0.0
        %2485 = vmatmul.mubr.f32.gmra.mrb[0].mxu0 %v2270
        %v2486 = vpop.f32.mrb[0].mxu0
        %v2487 = vadd.f32 0.0, %v2486
        %v2488 = vpop.f32.mrb[0].mxu0
        %2489 = vmatprep.mubr.f32.mxu0 0.0
        %2490 = vmatmul.mubr.f32.gmra.mrb[0].mxu0 %v2273
        %v2491 = vpop.f32.mrb[0].mxu0
        %v2492 = vadd.f32 0.0, %v2491
        %v2493 = vpop.f32.mrb[0].mxu0
        %2494 = vmatprep.mubr.f32.mxu0 0.0
        %2495 = vmatmul.mubr.f32.gmra.mrb[0].mxu0 %v2276
        %v2496 = vpop.f32.mrb[0].mxu0
        %v2497 = vadd.f32 0.0, %v2496
        %v2498 = vpop.f32.mrb[0].mxu0
        %2499 = vmatprep.mubr.f32.mxu0 0.0
        %2500 = vmatmul.mubr.f32.gmra.mrb[0].mxu0 %v2279
        %v2501 = vpop.f32.mrb[0].mxu0
        %v2502 = vadd.f32 0.0, %v2501
        %v2503 = vpop.f32.mrb[0].mxu0
        %2504 = vmatprep.mubr.f32.mxu0 0.0
        %2505 = vmatmul.mubr.f32.gmra.mrb[0].mxu0 %v2282
        %v2506 = vpop.f32.mrb[0].mxu0
        %v2507 = vadd.f32 0.0, %v2506
        %v2508 = vpop.f32.mrb[0].mxu0
        %2509 = vmatprep.mubr.f32.mxu0 0.0
        %2510 = vmatmul.mubr.f32.gmra.mrb[0].mxu0 %v2285
        %v2511 = vpop.f32.mrb[0].mxu0
        %v2512 = vadd.f32 0.0, %v2511
        %v2513 = vpop.f32.mrb[0].mxu0
        %2514 = vdwg.mxu0
        %v2515 = vld [vmem:[%s2] sm:$0x1]
        %v2517 = vlaneseq
        %v2518 = vshrl.u32 %v2517, 7
        %v2519 = vsub.s32 0, %v2518
        %v2520 = vrot.slane %v2515, %v2519
        %v2522 = vmul.f32 %v2357, %v2520
        %v2523 = vmul.f32 %v2362, %v2520
        %v2524 = vmul.f32 %v2367, %v2520
        %v2525 = vmul.f32 %v2372, %v2520
        %v2526 = vmul.f32 %v2377, %v2520
        %v2527 = vmul.f32 %v2382, %v2520
        %v2528 = vmul.f32 %v2387, %v2520
        %v2529 = vmul.f32 %v2392, %v2520
        %v2530 = vmul.f32 %v2397, %v2520
        %v2531 = vmul.f32 %v2402, %v2520
        %v2532 = vmul.f32 %v2407, %v2520
        %v2533 = vmul.f32 %v2412, %v2520
        %v2534 = vmul.f32 %v2417, %v2520
        %v2535 = vmul.f32 %v2422, %v2520
        %v2536 = vmul.f32 %v2427, %v2520
        %v2537 = vmul.f32 %v2432, %v2520
        %v2538 = vmul.f32 %v2437, %v2520
        %v2539 = vmul.f32 %v2442, %v2520
        %v2540 = vmul.f32 %v2447, %v2520
        %v2541 = vmul.f32 %v2452, %v2520
        %v2542 = vmul.f32 %v2457, %v2520
        %v2543 = vmul.f32 %v2462, %v2520
        %v2544 = vmul.f32 %v2467, %v2520
        %v2545 = vmul.f32 %v2472, %v2520
        %v2546 = vmul.f32 %v2477, %v2520
        %v2547 = vmul.f32 %v2482, %v2520
        %v2548 = vmul.f32 %v2487, %v2520
        %v2549 = vmul.f32 %v2492, %v2520
        %v2550 = vmul.f32 %v2497, %v2520
        %v2551 = vmul.f32 %v2502, %v2520
        %v2552 = vmul.f32 %v2507, %v2520
        %v2553 = vmul.f32 %v2512, %v2520
        %v2554 = vld [vmem:[%s3] sm:$0x1]
        %v2556 = vlaneseq
        %v2557 = vshrl.u32 %v2556, 7
        %v2558 = vsub.s32 0, %v2557
        %v2559 = vrot.slane %v2554, %v2558
        %v2561 = vadd.f32 %v2522, %v2559
        %v2562 = vadd.f32 %v2523, %v2559
        %v2563 = vadd.f32 %v2524, %v2559
        %v2564 = vadd.f32 %v2525, %v2559
        %v2565 = vadd.f32 %v2526, %v2559
        %v2566 = vadd.f32 %v2527, %v2559
        %v2567 = vadd.f32 %v2528, %v2559
        %v2568 = vadd.f32 %v2529, %v2559
        %v2569 = vadd.f32 %v2530, %v2559
        %v2570 = vadd.f32 %v2531, %v2559
        %v2571 = vadd.f32 %v2532, %v2559
        %v2572 = vadd.f32 %v2533, %v2559
        %v2573 = vadd.f32 %v2534, %v2559
        %v2574 = vadd.f32 %v2535, %v2559
        %v2575 = vadd.f32 %v2536, %v2559
        %v2576 = vadd.f32 %v2537, %v2559
        %v2577 = vadd.f32 %v2538, %v2559
        %v2578 = vadd.f32 %v2539, %v2559
        %v2579 = vadd.f32 %v2540, %v2559
        %v2580 = vadd.f32 %v2541, %v2559
        %v2581 = vadd.f32 %v2542, %v2559
        %v2582 = vadd.f32 %v2543, %v2559
        %v2583 = vadd.f32 %v2544, %v2559
        %v2584 = vadd.f32 %v2545, %v2559
        %v2585 = vadd.f32 %v2546, %v2559
        %v2586 = vadd.f32 %v2547, %v2559
        %v2587 = vadd.f32 %v2548, %v2559
        %v2588 = vadd.f32 %v2549, %v2559
        %v2589 = vadd.f32 %v2550, %v2559
        %v2590 = vadd.f32 %v2551, %v2559
        %v2591 = vadd.f32 %v2552, %v2559
        %v2592 = vadd.f32 %v2553, %v2559
        %v2593 = vmax.f32 %v2561, 0.0
        %v2594 = vmax.f32 %v2562, 0.0
        %v2595 = vmax.f32 %v2563, 0.0
        %v2596 = vmax.f32 %v2564, 0.0
        %v2597 = vmax.f32 %v2565, 0.0
        %v2598 = vmax.f32 %v2566, 0.0
        %v2599 = vmax.f32 %v2567, 0.0
        %v2600 = vmax.f32 %v2568, 0.0
        %v2601 = vmax.f32 %v2569, 0.0
        %v2602 = vmax.f32 %v2570, 0.0
        %v2603 = vmax.f32 %v2571, 0.0
        %v2604 = vmax.f32 %v2572, 0.0
        %v2605 = vmax.f32 %v2573, 0.0
        %v2606 = vmax.f32 %v2574, 0.0
        %v2607 = vmax.f32 %v2575, 0.0
        %v2608 = vmax.f32 %v2576, 0.0
        %v2609 = vmax.f32 %v2577, 0.0
        %v2610 = vmax.f32 %v2578, 0.0
        %v2611 = vmax.f32 %v2579, 0.0
        %v2612 = vmax.f32 %v2580, 0.0
        %v2613 = vmax.f32 %v2581, 0.0
        %v2614 = vmax.f32 %v2582, 0.0
        %v2615 = vmax.f32 %v2583, 0.0
        %v2616 = vmax.f32 %v2584, 0.0
        %v2617 = vmax.f32 %v2585, 0.0
        %v2618 = vmax.f32 %v2586, 0.0
        %v2619 = vmax.f32 %v2587, 0.0
        %v2620 = vmax.f32 %v2588, 0.0
        %v2621 = vmax.f32 %v2589, 0.0
        %v2622 = vmax.f32 %v2590, 0.0
        %v2623 = vmax.f32 %v2591, 0.0
        %v2624 = vmax.f32 %v2592, 0.0
        %2625 = vst.msk [vmem:[#allocation3] sm:$0xff] %vm1338, 0.0
        %2626 = vst.msk [vmem:[#allocation3 + $0x8] sm:$0xff] %vm1338, 0.0
        %vm2627 = vcmask 156672
        %2628 = vst.msk [vmem:[#allocation3 + $0x10] sm:$0x3] %vm2627, 0.0
        %s2629 = scalar_lea.vmem [#allocation3], 408
        %2630 = vst.msk [vmem:[%s2629] sm:$0xff] %vm1338, 0.0
        %2631 = vst.msk [vmem:[%s2629 + $0x8] sm:$0xff] %vm1338, 0.0
        %2632 = vst.msk [vmem:[%s2629 + $0x10] sm:$0x3] %vm2627, 0.0
        %s2633 = scalar_lea.vmem [#allocation3], 24
        %vm2634 = vcmask 155648
        %2635 = vst.msk [vmem:[%s2633] sm:$0x1] %vm2634, 0.0
        %2636 = vst.msk [vmem:[%s2633 + $0x18] sm:$0x1] %vm2634, 0.0
        %2637 = vst.msk [vmem:[%s2633 + $0x30] sm:$0x1] %vm2634, 0.0
        %2638 = vst.msk [vmem:[%s2633 + $0x48] sm:$0x1] %vm2634, 0.0
        %2639 = vst.msk [vmem:[%s2633 + $0x60] sm:$0x1] %vm2634, 0.0
        %2640 = vst.msk [vmem:[%s2633 + $0x78] sm:$0x1] %vm2634, 0.0
        %2641 = vst.msk [vmem:[%s2633 + $0x90] sm:$0x1] %vm2634, 0.0
        %2642 = vst.msk [vmem:[%s2633 + $0xa8] sm:$0x1] %vm2634, 0.0
        %2643 = vst.msk [vmem:[%s2633 + $0xc0] sm:$0x1] %vm2634, 0.0
        %2644 = vst.msk [vmem:[%s2633 + $0xd8] sm:$0x1] %vm2634, 0.0
        %2645 = vst.msk [vmem:[%s2633 + $0xf0] sm:$0x1] %vm2634, 0.0
        %2646 = vst.msk [vmem:[%s2633 + $0x108] sm:$0x1] %vm2634, 0.0
        %2647 = vst.msk [vmem:[%s2633 + $0x120] sm:$0x1] %vm2634, 0.0
        %2648 = vst.msk [vmem:[%s2633 + $0x138] sm:$0x1] %vm2634, 0.0
        %2649 = vst.msk [vmem:[%s2633 + $0x150] sm:$0x1] %vm2634, 0.0
        %2650 = vst.msk [vmem:[%s2633 + $0x168] sm:$0x1] %vm2634, 0.0
        %2651 = vst.msk [vmem:[%s2633 + $0x11] sm:$0x1] %vm2634, 0.0
        %2652 = vst.msk [vmem:[%s2633 + $0x29] sm:$0x1] %vm2634, 0.0
        %2653 = vst.msk [vmem:[%s2633 + $0x41] sm:$0x1] %vm2634, 0.0
        %2654 = vst.msk [vmem:[%s2633 + $0x59] sm:$0x1] %vm2634, 0.0
        %2655 = vst.msk [vmem:[%s2633 + $0x71] sm:$0x1] %vm2634, 0.0
        %2656 = vst.msk [vmem:[%s2633 + $0x89] sm:$0x1] %vm2634, 0.0
        %2657 = vst.msk [vmem:[%s2633 + $0xa1] sm:$0x1] %vm2634, 0.0
        %2658 = vst.msk [vmem:[%s2633 + $0xb9] sm:$0x1] %vm2634, 0.0
        %2659 = vst.msk [vmem:[%s2633 + $0xd1] sm:$0x1] %vm2634, 0.0
        %2660 = vst.msk [vmem:[%s2633 + $0xe9] sm:$0x1] %vm2634, 0.0
        %2661 = vst.msk [vmem:[%s2633 + $0x101] sm:$0x1] %vm2634, 0.0
        %2662 = vst.msk [vmem:[%s2633 + $0x119] sm:$0x1] %vm2634, 0.0
        %2663 = vst.msk [vmem:[%s2633 + $0x131] sm:$0x1] %vm2634, 0.0
        %2664 = vst.msk [vmem:[%s2633 + $0x149] sm:$0x1] %vm2634, 0.0
        %2665 = vst.msk [vmem:[%s2633 + $0x161] sm:$0x1] %vm2634, 0.0
        %2666 = vst.msk [vmem:[%s2633 + $0x179] sm:$0x1] %vm2634, 0.0
        %2667 = vst.msk [vmem:[%s2633 + $0x1] sm:$0xff] %vm1305, %v2593
        %2668 = vst.msk [vmem:[%s2633 + $0x9] sm:$0xff] %vm1305, %v2594
        %2669 = vst.msk [vmem:[%s2633 + $0x19] sm:$0xff] %vm1305, %v2595
        %2670 = vst.msk [vmem:[%s2633 + $0x21] sm:$0xff] %vm1305, %v2596
        %2671 = vst.msk [vmem:[%s2633 + $0x31] sm:$0xff] %vm1305, %v2597
        %2672 = vst.msk [vmem:[%s2633 + $0x39] sm:$0xff] %vm1305, %v2598
        %2673 = vst.msk [vmem:[%s2633 + $0x49] sm:$0xff] %vm1305, %v2599
        %2674 = vst.msk [vmem:[%s2633 + $0x51] sm:$0xff] %vm1305, %v2600
        %2675 = vst.msk [vmem:[%s2633 + $0x61] sm:$0xff] %vm1305, %v2601
        %2676 = vst.msk [vmem:[%s2633 + $0x69] sm:$0xff] %vm1305, %v2602
        %2677 = vst.msk [vmem:[%s2633 + $0x79] sm:$0xff] %vm1305, %v2603
        %2678 = vst.msk [vmem:[%s2633 + $0x81] sm:$0xff] %vm1305, %v2604
        %2679 = vst.msk [vmem:[%s2633 + $0x91] sm:$0xff] %vm1305, %v2605
        %2680 = vst.msk [vmem:[%s2633 + $0x99] sm:$0xff] %vm1305, %v2606
        %2681 = vst.msk [vmem:[%s2633 + $0xa9] sm:$0xff] %vm1305, %v2607
        %2682 = vst.msk [vmem:[%s2633 + $0xb1] sm:$0xff] %vm1305, %v2608
        %2683 = vst.msk [vmem:[%s2633 + $0xc1] sm:$0xff] %vm1305, %v2609
        %2684 = vst.msk [vmem:[%s2633 + $0xc9] sm:$0xff] %vm1305, %v2610
        %2685 = vst.msk [vmem:[%s2633 + $0xd9] sm:$0xff] %vm1305, %v2611
        %2686 = vst.msk [vmem:[%s2633 + $0xe1] sm:$0xff] %vm1305, %v2612
        %2687 = vst.msk [vmem:[%s2633 + $0xf1] sm:$0xff] %vm1305, %v2613
        %2688 = vst.msk [vmem:[%s2633 + $0xf9] sm:$0xff] %vm1305, %v2614
        %2689 = vst.msk [vmem:[%s2633 + $0x109] sm:$0xff] %vm1305, %v2615
        %2690 = vst.msk [vmem:[%s2633 + $0x111] sm:$0xff] %vm1305, %v2616
        %2691 = vst.msk [vmem:[%s2633 + $0x121] sm:$0xff] %vm1305, %v2617
        %2692 = vst.msk [vmem:[%s2633 + $0x129] sm:$0xff] %vm1305, %v2618
        %2693 = vst.msk [vmem:[%s2633 + $0x139] sm:$0xff] %vm1305, %v2619
        %2694 = vst.msk [vmem:[%s2633 + $0x141] sm:$0xff] %vm1305, %v2620
        %2695 = vst.msk [vmem:[%s2633 + $0x151] sm:$0xff] %vm1305, %v2621
        %2696 = vst.msk [vmem:[%s2633 + $0x159] sm:$0xff] %vm1305, %v2622
        %2697 = vst.msk [vmem:[%s2633 + $0x169] sm:$0xff] %vm1305, %v2623
        %2698 = vst.msk [vmem:[%s2633 + $0x171] sm:$0xff] %vm1305, %v2624
        %2731 = vrot.lane.b32.xlu0 %v2357, 112
        %v2732 = vpop.permute.xlu0 %2731
        %2733 = vrot.lane.b32.xlu0 %v2362, 112
        %v2734 = vpop.permute.xlu0 %2733
        %2735 = vrot.lane.b32.xlu0 %v2367, 112
        %v2736 = vpop.permute.xlu0 %2735
        %2737 = vrot.lane.b32.xlu0 %v2372, 112
        %v2738 = vpop.permute.xlu0 %2737
        %2739 = vrot.lane.b32.xlu0 %v2377, 112
        %v2740 = vpop.permute.xlu0 %2739
        %2741 = vrot.lane.b32.xlu0 %v2382, 112
        %v2742 = vpop.permute.xlu0 %2741
        %2743 = vrot.lane.b32.xlu0 %v2387, 112
        %v2744 = vpop.permute.xlu0 %2743
        %2745 = vrot.lane.b32.xlu0 %v2392, 112
        %v2746 = vpop.permute.xlu0 %2745
        %2747 = vrot.lane.b32.xlu0 %v2397, 112
        %v2748 = vpop.permute.xlu0 %2747
        %2749 = vrot.lane.b32.xlu0 %v2402, 112
        %v2750 = vpop.permute.xlu0 %2749
        %2751 = vrot.lane.b32.xlu0 %v2407, 112
        %v2752 = vpop.permute.xlu0 %2751
        %2753 = vrot.lane.b32.xlu0 %v2412, 112
        %v2754 = vpop.permute.xlu0 %2753
        %2755 = vrot.lane.b32.xlu0 %v2417, 112
        %v2756 = vpop.permute.xlu0 %2755
        %2757 = vrot.lane.b32.xlu0 %v2422, 112
        %v2758 = vpop.permute.xlu0 %2757
        %2759 = vrot.lane.b32.xlu0 %v2427, 112
        %v2760 = vpop.permute.xlu0 %2759
        %2761 = vrot.lane.b32.xlu0 %v2432, 112
        %v2762 = vpop.permute.xlu0 %2761
        %2763 = vrot.lane.b32.xlu0 %v2437, 112
        %v2764 = vpop.permute.xlu0 %2763
        %2765 = vrot.lane.b32.xlu0 %v2442, 112
        %v2766 = vpop.permute.xlu0 %2765
        %2767 = vrot.lane.b32.xlu0 %v2447, 112
        %v2768 = vpop.permute.xlu0 %2767
        %2769 = vrot.lane.b32.xlu0 %v2452, 112
        %v2770 = vpop.permute.xlu0 %2769
        %2771 = vrot.lane.b32.xlu0 %v2457, 112
        %v2772 = vpop.permute.xlu0 %2771
        %2773 = vrot.lane.b32.xlu0 %v2462, 112
        %v2774 = vpop.permute.xlu0 %2773
        %2775 = vrot.lane.b32.xlu0 %v2467, 112
        %v2776 = vpop.permute.xlu0 %2775
        %2777 = vrot.lane.b32.xlu0 %v2472, 112
        %v2778 = vpop.permute.xlu0 %2777
        %2779 = vrot.lane.b32.xlu0 %v2477, 112
        %v2780 = vpop.permute.xlu0 %2779
        %2781 = vrot.lane.b32.xlu0 %v2482, 112
        %v2782 = vpop.permute.xlu0 %2781
        %2783 = vrot.lane.b32.xlu0 %v2487, 112
        %v2784 = vpop.permute.xlu0 %2783
        %2785 = vrot.lane.b32.xlu0 %v2492, 112
        %v2786 = vpop.permute.xlu0 %2785
        %2787 = vrot.lane.b32.xlu0 %v2497, 112
        %v2788 = vpop.permute.xlu0 %2787
        %2789 = vrot.lane.b32.xlu0 %v2502, 112
        %v2790 = vpop.permute.xlu0 %2789
        %2791 = vrot.lane.b32.xlu0 %v2507, 112
        %v2792 = vpop.permute.xlu0 %2791
        %2793 = vrot.lane.b32.xlu0 %v2512, 112
        %v2794 = vpop.permute.xlu0 %2793
        %vm2827 = vcmask 162944
        %2828 = vst.msk [vmem:[%s2633 + $0x1] sm:$0xff] %vm2827, %v2732
        %2829 = vst.msk [vmem:[%s2633 + $0x9] sm:$0xff] %vm2827, %v2734
        %2830 = vst.msk [vmem:[%s2633 + $0x19] sm:$0xff] %vm2827, %v2736
        %2831 = vst.msk [vmem:[%s2633 + $0x21] sm:$0xff] %vm2827, %v2738
        %2832 = vst.msk [vmem:[%s2633 + $0x31] sm:$0xff] %vm2827, %v2740
        %2833 = vst.msk [vmem:[%s2633 + $0x39] sm:$0xff] %vm2827, %v2742
        %2834 = vst.msk [vmem:[%s2633 + $0x49] sm:$0xff] %vm2827, %v2744
        %2835 = vst.msk [vmem:[%s2633 + $0x51] sm:$0xff] %vm2827, %v2746
        %2836 = vst.msk [vmem:[%s2633 + $0x61] sm:$0xff] %vm2827, %v2748
        %2837 = vst.msk [vmem:[%s2633 + $0x69] sm:$0xff] %vm2827, %v2750
        %2838 = vst.msk [vmem:[%s2633 + $0x79] sm:$0xff] %vm2827, %v2752
        %2839 = vst.msk [vmem:[%s2633 + $0x81] sm:$0xff] %vm2827, %v2754
        %2840 = vst.msk [vmem:[%s2633 + $0x91] sm:$0xff] %vm2827, %v2756
        %2841 = vst.msk [vmem:[%s2633 + $0x99] sm:$0xff] %vm2827, %v2758
        %2842 = vst.msk [vmem:[%s2633 + $0xa9] sm:$0xff] %vm2827, %v2760
        %2843 = vst.msk [vmem:[%s2633 + $0xb1] sm:$0xff] %vm2827, %v2762
        %2844 = vst.msk [vmem:[%s2633 + $0xc1] sm:$0xff] %vm2827, %v2764
        %2845 = vst.msk [vmem:[%s2633 + $0xc9] sm:$0xff] %vm2827, %v2766
        %2846 = vst.msk [vmem:[%s2633 + $0xd9] sm:$0xff] %vm2827, %v2768
        %2847 = vst.msk [vmem:[%s2633 + $0xe1] sm:$0xff] %vm2827, %v2770
        %2848 = vst.msk [vmem:[%s2633 + $0xf1] sm:$0xff] %vm2827, %v2772
        %2849 = vst.msk [vmem:[%s2633 + $0xf9] sm:$0xff] %vm2827, %v2774
        %2850 = vst.msk [vmem:[%s2633 + $0x109] sm:$0xff] %vm2827, %v2776
        %2851 = vst.msk [vmem:[%s2633 + $0x111] sm:$0xff] %vm2827, %v2778
        %2852 = vst.msk [vmem:[%s2633 + $0x121] sm:$0xff] %vm2827, %v2780
        %2853 = vst.msk [vmem:[%s2633 + $0x129] sm:$0xff] %vm2827, %v2782
        %2854 = vst.msk [vmem:[%s2633 + $0x139] sm:$0xff] %vm2827, %v2784
        %2855 = vst.msk [vmem:[%s2633 + $0x141] sm:$0xff] %vm2827, %v2786
        %2856 = vst.msk [vmem:[%s2633 + $0x151] sm:$0xff] %vm2827, %v2788
        %2857 = vst.msk [vmem:[%s2633 + $0x159] sm:$0xff] %vm2827, %v2790
        %2858 = vst.msk [vmem:[%s2633 + $0x169] sm:$0xff] %vm2827, %v2792
        %2859 = vst.msk [vmem:[%s2633 + $0x171] sm:$0xff] %vm2827, %v2794
        %v2860 = vld [vmem:[#allocation3] sm:$0xff]
        %v2861 = vld [vmem:[#allocation3 + $0x8] sm:$0xff]
        %v2862 = vld [vmem:[#allocation3 + $0x10] sm:$0x3]
        %v2863 = vld [vmem:[#allocation3 + $0x18] sm:$0xff]
        %v2864 = vld [vmem:[#allocation3 + $0x20] sm:$0xff]
        %v2865 = vld [vmem:[#allocation3 + $0x28] sm:$0x3]
        %v2866 = vld [vmem:[#allocation3 + $0x30] sm:$0xff]
        %v2867 = vld [vmem:[#allocation3 + $0x38] sm:$0xff]
        %v2868 = vld [vmem:[#allocation3 + $0x40] sm:$0x3]
        %v2869 = vld [vmem:[#allocation3 + $0x48] sm:$0xff]
        %v2870 = vld [vmem:[#allocation3 + $0x50] sm:$0xff]
        %v2871 = vld [vmem:[#allocation3 + $0x58] sm:$0x3]
        %v2872 = vld [vmem:[#allocation3 + $0x60] sm:$0xff]
        %v2873 = vld [vmem:[#allocation3 + $0x68] sm:$0xff]
        %v2874 = vld [vmem:[#allocation3 + $0x70] sm:$0x3]
        %v2875 = vld [vmem:[#allocation3 + $0x78] sm:$0xff]
        %v2876 = vld [vmem:[#allocation3 + $0x80] sm:$0xff]
        %v2877 = vld [vmem:[#allocation3 + $0x88] sm:$0x3]
        %v2878 = vld [vmem:[#allocation3 + $0x90] sm:$0xff]
        %v2879 = vld [vmem:[#allocation3 + $0x98] sm:$0xff]
        %v2880 = vld [vmem:[#allocation3 + $0xa0] sm:$0x3]
        %v2881 = vld [vmem:[#allocation3 + $0xa8] sm:$0xff]
        %v2882 = vld [vmem:[#allocation3 + $0xb0] sm:$0xff]
        %v2883 = vld [vmem:[#allocation3 + $0xb8] sm:$0x3]
        %v2884 = vld [vmem:[#allocation3 + $0xc0] sm:$0xff]
        %v2885 = vld [vmem:[#allocation3 + $0xc8] sm:$0xff]
        %v2886 = vld [vmem:[#allocation3 + $0xd0] sm:$0x3]
        %v2887 = vld [vmem:[#allocation3 + $0xd8] sm:$0xff]
        %v2888 = vld [vmem:[#allocation3 + $0xe0] sm:$0xff]
        %v2889 = vld [vmem:[#allocation3 + $0xe8] sm:$0x3]
        %v2890 = vld [vmem:[#allocation3 + $0xf0] sm:$0xff]
        %v2891 = vld [vmem:[#allocation3 + $0xf8] sm:$0xff]
        %v2892 = vld [vmem:[#allocation3 + $0x100] sm:$0x3]
        %v2893 = vld [vmem:[#allocation3 + $0x108] sm:$0xff]
        %v2894 = vld [vmem:[#allocation3 + $0x110] sm:$0xff]
        %v2895 = vld [vmem:[#allocation3 + $0x118] sm:$0x3]
        %v2896 = vld [vmem:[#allocation3 + $0x120] sm:$0xff]
        %v2897 = vld [vmem:[#allocation3 + $0x128] sm:$0xff]
        %v2898 = vld [vmem:[#allocation3 + $0x130] sm:$0x3]
        %v2899 = vld [vmem:[#allocation3 + $0x138] sm:$0xff]
        %v2900 = vld [vmem:[#allocation3 + $0x140] sm:$0xff]
        %v2901 = vld [vmem:[#allocation3 + $0x148] sm:$0x3]
        %v2902 = vld [vmem:[#allocation3 + $0x150] sm:$0xff]
        %v2903 = vld [vmem:[#allocation3 + $0x158] sm:$0xff]
        %v2904 = vld [vmem:[#allocation3 + $0x160] sm:$0x3]
        %v2905 = vld [vmem:[#allocation3 + $0x168] sm:$0xff]
        %v2906 = vld [vmem:[#allocation3 + $0x170] sm:$0xff]
        %v2907 = vld [vmem:[#allocation3 + $0x178] sm:$0x3]
        %v2908 = vld [vmem:[#allocation3 + $0x180] sm:$0xff]
        %v2909 = vld [vmem:[#allocation3 + $0x188] sm:$0xff]
        %v2910 = vld [vmem:[#allocation3 + $0x190] sm:$0x3]
        %v2911 = vld [vmem:[#allocation3 + $0x198] sm:$0xff]
        %v2912 = vld [vmem:[#allocation3 + $0x1a0] sm:$0xff]
        %v2913 = vld [vmem:[#allocation3 + $0x1a8] sm:$0x3]
        %v2962 = vrot.slane %v2860, 1
        %v2963 = vrot.slane %v2861, 1
        %v2964 = vsel %vm499, %v2962, %v2963
        %v2965 = vrot.slane %v2862, 1
        %v2966 = vsel %vm499, %v2963, %v2965
        %v2967 = vrot.slane %v2863, 1
        %v2968 = vrot.slane %v2864, 1
        %v2969 = vsel %vm499, %v2967, %v2968
        %v2970 = vrot.slane %v2865, 1
        %v2971 = vsel %vm499, %v2968, %v2970
        %v2972 = vrot.slane %v2866, 1
        %v2973 = vrot.slane %v2867, 1
        %v2974 = vsel %vm499, %v2972, %v2973
        %v2975 = vrot.slane %v2868, 1
        %v2976 = vsel %vm499, %v2973, %v2975
        %v2977 = vrot.slane %v2869, 1
        %v2978 = vrot.slane %v2870, 1
        %v2979 = vsel %vm499, %v2977, %v2978
        %v2980 = vrot.slane %v2871, 1
        %v2981 = vsel %vm499, %v2978, %v2980
        %v2982 = vrot.slane %v2872, 1
        %v2983 = vrot.slane %v2873, 1
        %v2984 = vsel %vm499, %v2982, %v2983
        %v2985 = vrot.slane %v2874, 1
        %v2986 = vsel %vm499, %v2983, %v2985
        %v2987 = vrot.slane %v2875, 1
        %v2988 = vrot.slane %v2876, 1
        %v2989 = vsel %vm499, %v2987, %v2988
        %v2990 = vrot.slane %v2877, 1
        %v2991 = vsel %vm499, %v2988, %v2990
        %v2992 = vrot.slane %v2878, 1
        %v2993 = vrot.slane %v2879, 1
        %v2994 = vsel %vm499, %v2992, %v2993
        %v2995 = vrot.slane %v2880, 1
        %v2996 = vsel %vm499, %v2993, %v2995
        %v2997 = vrot.slane %v2881, 1
        %v2998 = vrot.slane %v2882, 1
        %v2999 = vsel %vm499, %v2997, %v2998
        %v3000 = vrot.slane %v2883, 1
        %v3001 = vsel %vm499, %v2998, %v3000
        %v3002 = vrot.slane %v2884, 1
        %v3003 = vrot.slane %v2885, 1
        %v3004 = vsel %vm499, %v3002, %v3003
        %v3005 = vrot.slane %v2886, 1
        %v3006 = vsel %vm499, %v3003, %v3005
        %v3007 = vrot.slane %v2887, 1
        %v3008 = vrot.slane %v2888, 1
        %v3009 = vsel %vm499, %v3007, %v3008
        %v3010 = vrot.slane %v2889, 1
        %v3011 = vsel %vm499, %v3008, %v3010
        %v3012 = vrot.slane %v2890, 1
        %v3013 = vrot.slane %v2891, 1
        %v3014 = vsel %vm499, %v3012, %v3013
        %v3015 = vrot.slane %v2892, 1
        %v3016 = vsel %vm499, %v3013, %v3015
        %v3017 = vrot.slane %v2893, 1
        %v3018 = vrot.slane %v2894, 1
        %v3019 = vsel %vm499, %v3017, %v3018
        %v3020 = vrot.slane %v2895, 1
        %v3021 = vsel %vm499, %v3018, %v3020
        %v3022 = vrot.slane %v2896, 1
        %v3023 = vrot.slane %v2897, 1
        %v3024 = vsel %vm499, %v3022, %v3023
        %v3025 = vrot.slane %v2898, 1
        %v3026 = vsel %vm499, %v3023, %v3025
        %v3027 = vrot.slane %v2899, 1
        %v3028 = vrot.slane %v2900, 1
        %v3029 = vsel %vm499, %v3027, %v3028
        %v3030 = vrot.slane %v2901, 1
        %v3031 = vsel %vm499, %v3028, %v3030
        %v3032 = vrot.slane %v2902, 1
        %v3033 = vrot.slane %v2903, 1
        %v3034 = vsel %vm499, %v3032, %v3033
        %v3035 = vrot.slane %v2904, 1
        %v3036 = vsel %vm499, %v3033, %v3035
        %v3037 = vrot.slane %v2905, 1
        %v3038 = vrot.slane %v2906, 1
        %v3039 = vsel %vm499, %v3037, %v3038
        %v3040 = vrot.slane %v2907, 1
        %v3041 = vsel %vm499, %v3038, %v3040
        %3042 = vrot.lane.b32.xlu0 %v2964, 20
        %v3043 = vpop.permute.xlu0 %3042
        %3044 = vrot.lane.b32.xlu0 %v2966, 20
        %v3045 = vpop.permute.xlu0 %3044
        %3046 = vrot.lane.b32.xlu0 %v2969, 20
        %v3047 = vpop.permute.xlu0 %3046
        %3048 = vrot.lane.b32.xlu0 %v2971, 20
        %v3049 = vpop.permute.xlu0 %3048
        %3050 = vrot.lane.b32.xlu0 %v2974, 20
        %v3051 = vpop.permute.xlu0 %3050
        %3052 = vrot.lane.b32.xlu0 %v2976, 20
        %v3053 = vpop.permute.xlu0 %3052
        %3054 = vrot.lane.b32.xlu0 %v2979, 20
        %v3055 = vpop.permute.xlu0 %3054
        %3056 = vrot.lane.b32.xlu0 %v2981, 20
        %v3057 = vpop.permute.xlu0 %3056
        %3058 = vrot.lane.b32.xlu0 %v2984, 20
        %v3059 = vpop.permute.xlu0 %3058
        %3060 = vrot.lane.b32.xlu0 %v2986, 20
        %v3061 = vpop.permute.xlu0 %3060
        %3062 = vrot.lane.b32.xlu0 %v2989, 20
        %v3063 = vpop.permute.xlu0 %3062
        %3064 = vrot.lane.b32.xlu0 %v2991, 20
        %v3065 = vpop.permute.xlu0 %3064
        %3066 = vrot.lane.b32.xlu0 %v2994, 20
        %v3067 = vpop.permute.xlu0 %3066
        %3068 = vrot.lane.b32.xlu0 %v2996, 20
        %v3069 = vpop.permute.xlu0 %3068
        %3070 = vrot.lane.b32.xlu0 %v2999, 20
        %v3071 = vpop.permute.xlu0 %3070
        %3072 = vrot.lane.b32.xlu0 %v3001, 20
        %v3073 = vpop.permute.xlu0 %3072
        %3074 = vrot.lane.b32.xlu0 %v3004, 20
        %v3075 = vpop.permute.xlu0 %3074
        %3076 = vrot.lane.b32.xlu0 %v3006, 20
        %v3077 = vpop.permute.xlu0 %3076
        %3078 = vrot.lane.b32.xlu0 %v3009, 20
        %v3079 = vpop.permute.xlu0 %3078
        %3080 = vrot.lane.b32.xlu0 %v3011, 20
        %v3081 = vpop.permute.xlu0 %3080
        %3082 = vrot.lane.b32.xlu0 %v3014, 20
        %v3083 = vpop.permute.xlu0 %3082
        %3084 = vrot.lane.b32.xlu0 %v3016, 20
        %v3085 = vpop.permute.xlu0 %3084
        %3086 = vrot.lane.b32.xlu0 %v3019, 20
        %v3087 = vpop.permute.xlu0 %3086
        %3088 = vrot.lane.b32.xlu0 %v3021, 20
        %v3089 = vpop.permute.xlu0 %3088
        %3090 = vrot.lane.b32.xlu0 %v3024, 20
        %v3091 = vpop.permute.xlu0 %3090
        %3092 = vrot.lane.b32.xlu0 %v3026, 20
        %v3093 = vpop.permute.xlu0 %3092
        %3094 = vrot.lane.b32.xlu0 %v3029, 20
        %v3095 = vpop.permute.xlu0 %3094
        %3096 = vrot.lane.b32.xlu0 %v3031, 20
        %v3097 = vpop.permute.xlu0 %3096
        %3098 = vrot.lane.b32.xlu0 %v3034, 20
        %v3099 = vpop.permute.xlu0 %3098
        %3100 = vrot.lane.b32.xlu0 %v3036, 20
        %v3101 = vpop.permute.xlu0 %3100
        %3102 = vrot.lane.b32.xlu0 %v3039, 20
        %v3103 = vpop.permute.xlu0 %3102
        %3104 = vrot.lane.b32.xlu0 %v3041, 20
        %v3105 = vpop.permute.xlu0 %3104
        %v3138 = vrot.slane %v2860, 2
        %v3139 = vrot.slane %v2861, 2
        %v3140 = vsel %vm676, %v3138, %v3139
        %v3141 = vrot.slane %v2862, 2
        %v3142 = vsel %vm676, %v3139, %v3141
        %v3143 = vrot.slane %v2863, 2
        %v3144 = vrot.slane %v2864, 2
        %v3145 = vsel %vm676, %v3143, %v3144
        %v3146 = vrot.slane %v2865, 2
        %v3147 = vsel %vm676, %v3144, %v3146
        %v3148 = vrot.slane %v2866, 2
        %v3149 = vrot.slane %v2867, 2
        %v3150 = vsel %vm676, %v3148, %v3149
        %v3151 = vrot.slane %v2868, 2
        %v3152 = vsel %vm676, %v3149, %v3151
        %v3153 = vrot.slane %v2869, 2
        %v3154 = vrot.slane %v2870, 2
        %v3155 = vsel %vm676, %v3153, %v3154
        %v3156 = vrot.slane %v2871, 2
        %v3157 = vsel %vm676, %v3154, %v3156
        %v3158 = vrot.slane %v2872, 2
        %v3159 = vrot.slane %v2873, 2
        %v3160 = vsel %vm676, %v3158, %v3159
        %v3161 = vrot.slane %v2874, 2
        %v3162 = vsel %vm676, %v3159, %v3161
        %v3163 = vrot.slane %v2875, 2
        %v3164 = vrot.slane %v2876, 2
        %v3165 = vsel %vm676, %v3163, %v3164
        %v3166 = vrot.slane %v2877, 2
        %v3167 = vsel %vm676, %v3164, %v3166
        %v3168 = vrot.slane %v2878, 2
        %v3169 = vrot.slane %v2879, 2
        %v3170 = vsel %vm676, %v3168, %v3169
        %v3171 = vrot.slane %v2880, 2
        %v3172 = vsel %vm676, %v3169, %v3171
        %v3173 = vrot.slane %v2881, 2
        %v3174 = vrot.slane %v2882, 2
        %v3175 = vsel %vm676, %v3173, %v3174
        %v3176 = vrot.slane %v2883, 2
        %v3177 = vsel %vm676, %v3174, %v3176
        %v3178 = vrot.slane %v2884, 2
        %v3179 = vrot.slane %v2885, 2
        %v3180 = vsel %vm676, %v3178, %v3179
        %v3181 = vrot.slane %v2886, 2
        %v3182 = vsel %vm676, %v3179, %v3181
        %v3183 = vrot.slane %v2887, 2
        %v3184 = vrot.slane %v2888, 2
        %v3185 = vsel %vm676, %v3183, %v3184
        %v3186 = vrot.slane %v2889, 2
        %v3187 = vsel %vm676, %v3184, %v3186
        %v3188 = vrot.slane %v2890, 2
        %v3189 = vrot.slane %v2891, 2
        %v3190 = vsel %vm676, %v3188, %v3189
        %v3191 = vrot.slane %v2892, 2
        %v3192 = vsel %vm676, %v3189, %v3191
        %v3193 = vrot.slane %v2893, 2
        %v3194 = vrot.slane %v2894, 2
        %v3195 = vsel %vm676, %v3193, %v3194
        %v3196 = vrot.slane %v2895, 2
        %v3197 = vsel %vm676, %v3194, %v3196
        %v3198 = vrot.slane %v2896, 2
        %v3199 = vrot.slane %v2897, 2
        %v3200 = vsel %vm676, %v3198, %v3199
        %v3201 = vrot.slane %v2898, 2
        %v3202 = vsel %vm676, %v3199, %v3201
        %v3203 = vrot.slane %v2899, 2
        %v3204 = vrot.slane %v2900, 2
        %v3205 = vsel %vm676, %v3203, %v3204
        %v3206 = vrot.slane %v2901, 2
        %v3207 = vsel %vm676, %v3204, %v3206
        %v3208 = vrot.slane %v2902, 2
        %v3209 = vrot.slane %v2903, 2
        %v3210 = vsel %vm676, %v3208, %v3209
        %v3211 = vrot.slane %v2904, 2
        %v3212 = vsel %vm676, %v3209, %v3211
        %v3213 = vrot.slane %v2905, 2
        %v3214 = vrot.slane %v2906, 2
        %v3215 = vsel %vm676, %v3213, %v3214
        %v3216 = vrot.slane %v2907, 2
        %v3217 = vsel %vm676, %v3214, %v3216
        %3218 = vrot.lane.b32.xlu0 %v3140, 40
        %v3219 = vpop.permute.xlu0 %3218
        %3220 = vrot.lane.b32.xlu0 %v3142, 40
        %v3221 = vpop.permute.xlu0 %3220
        %3222 = vrot.lane.b32.xlu0 %v3145, 40
        %v3223 = vpop.permute.xlu0 %3222
        %3224 = vrot.lane.b32.xlu0 %v3147, 40
        %v3225 = vpop.permute.xlu0 %3224
        %3226 = vrot.lane.b32.xlu0 %v3150, 40
        %v3227 = vpop.permute.xlu0 %3226
        %3228 = vrot.lane.b32.xlu0 %v3152, 40
        %v3229 = vpop.permute.xlu0 %3228
        %3230 = vrot.lane.b32.xlu0 %v3155, 40
        %v3231 = vpop.permute.xlu0 %3230
        %3232 = vrot.lane.b32.xlu0 %v3157, 40
        %v3233 = vpop.permute.xlu0 %3232
        %3234 = vrot.lane.b32.xlu0 %v3160, 40
        %v3235 = vpop.permute.xlu0 %3234
        %3236 = vrot.lane.b32.xlu0 %v3162, 40
        %v3237 = vpop.permute.xlu0 %3236
        %3238 = vrot.lane.b32.xlu0 %v3165, 40
        %v3239 = vpop.permute.xlu0 %3238
        %3240 = vrot.lane.b32.xlu0 %v3167, 40
        %v3241 = vpop.permute.xlu0 %3240
        %3242 = vrot.lane.b32.xlu0 %v3170, 40
        %v3243 = vpop.permute.xlu0 %3242
        %3244 = vrot.lane.b32.xlu0 %v3172, 40
        %v3245 = vpop.permute.xlu0 %3244
        %3246 = vrot.lane.b32.xlu0 %v3175, 40
        %v3247 = vpop.permute.xlu0 %3246
        %3248 = vrot.lane.b32.xlu0 %v3177, 40
        %v3249 = vpop.permute.xlu0 %3248
        %3250 = vrot.lane.b32.xlu0 %v3180, 40
        %v3251 = vpop.permute.xlu0 %3250
        %3252 = vrot.lane.b32.xlu0 %v3182, 40
        %v3253 = vpop.permute.xlu0 %3252
        %3254 = vrot.lane.b32.xlu0 %v3185, 40
        %v3255 = vpop.permute.xlu0 %3254
        %3256 = vrot.lane.b32.xlu0 %v3187, 40
        %v3257 = vpop.permute.xlu0 %3256
        %3258 = vrot.lane.b32.xlu0 %v3190, 40
        %v3259 = vpop.permute.xlu0 %3258
        %3260 = vrot.lane.b32.xlu0 %v3192, 40
        %v3261 = vpop.permute.xlu0 %3260
        %3262 = vrot.lane.b32.xlu0 %v3195, 40
        %v3263 = vpop.permute.xlu0 %3262
        %3264 = vrot.lane.b32.xlu0 %v3197, 40
        %v3265 = vpop.permute.xlu0 %3264
        %3266 = vrot.lane.b32.xlu0 %v3200, 40
        %v3267 = vpop.permute.xlu0 %3266
        %3268 = vrot.lane.b32.xlu0 %v3202, 40
        %v3269 = vpop.permute.xlu0 %3268
        %3270 = vrot.lane.b32.xlu0 %v3205, 40
        %v3271 = vpop.permute.xlu0 %3270
        %3272 = vrot.lane.b32.xlu0 %v3207, 40
        %v3273 = vpop.permute.xlu0 %3272
        %3274 = vrot.lane.b32.xlu0 %v3210, 40
        %v3275 = vpop.permute.xlu0 %3274
        %3276 = vrot.lane.b32.xlu0 %v3212, 40
        %v3277 = vpop.permute.xlu0 %3276
        %3278 = vrot.lane.b32.xlu0 %v3215, 40
        %v3279 = vpop.permute.xlu0 %3278
        %3280 = vrot.lane.b32.xlu0 %v3217, 40
        %v3281 = vpop.permute.xlu0 %3280
        %v3314 = vsel %vm1338, %v2860, %v3043
        %v3315 = vsel %vm1338, %v2861, %v3045
        %v3316 = vsel %vm1338, %v2863, %v3047
        %v3317 = vsel %vm1338, %v2864, %v3049
        %v3318 = vsel %vm1338, %v2866, %v3051
        %v3319 = vsel %vm1338, %v2867, %v3053
        %v3320 = vsel %vm1338, %v2869, %v3055
        %v3321 = vsel %vm1338, %v2870, %v3057
        %v3322 = vsel %vm1338, %v2872, %v3059
        %v3323 = vsel %vm1338, %v2873, %v3061
        %v3324 = vsel %vm1338, %v2875, %v3063
        %v3325 = vsel %vm1338, %v2876, %v3065
        %v3326 = vsel %vm1338, %v2878, %v3067
        %v3327 = vsel %vm1338, %v2879, %v3069
        %v3328 = vsel %vm1338, %v2881, %v3071
        %v3329 = vsel %vm1338, %v2882, %v3073
        %v3330 = vsel %vm1338, %v2884, %v3075
        %v3331 = vsel %vm1338, %v2885, %v3077
        %v3332 = vsel %vm1338, %v2887, %v3079
        %v3333 = vsel %vm1338, %v2888, %v3081
        %v3334 = vsel %vm1338, %v2890, %v3083
        %v3335 = vsel %vm1338, %v2891, %v3085
        %v3336 = vsel %vm1338, %v2893, %v3087
        %v3337 = vsel %vm1338, %v2894, %v3089
        %v3338 = vsel %vm1338, %v2896, %v3091
        %v3339 = vsel %vm1338, %v2897, %v3093
        %v3340 = vsel %vm1338, %v2899, %v3095
        %v3341 = vsel %vm1338, %v2900, %v3097
        %v3342 = vsel %vm1338, %v2902, %v3099
        %v3343 = vsel %vm1338, %v2903, %v3101
        %v3344 = vsel %vm1338, %v2905, %v3103
        %v3345 = vsel %vm1338, %v2906, %v3105
        %vm3346 = vcmask 326656
        %v3347 = vsel %vm3346, %v3314, %v3219
        %v3348 = vsel %vm3346, %v3315, %v3221
        %v3349 = vsel %vm3346, %v3316, %v3223
        %v3350 = vsel %vm3346, %v3317, %v3225
        %v3351 = vsel %vm3346, %v3318, %v3227
        %v3352 = vsel %vm3346, %v3319, %v3229
        %v3353 = vsel %vm3346, %v3320, %v3231
        %v3354 = vsel %vm3346, %v3321, %v3233
        %v3355 = vsel %vm3346, %v3322, %v3235
        %v3356 = vsel %vm3346, %v3323, %v3237
        %v3357 = vsel %vm3346, %v3324, %v3239
        %v3358 = vsel %vm3346, %v3325, %v3241
        %v3359 = vsel %vm3346, %v3326, %v3243
        %v3360 = vsel %vm3346, %v3327, %v3245
        %v3361 = vsel %vm3346, %v3328, %v3247
        %v3362 = vsel %vm3346, %v3329, %v3249
        %v3363 = vsel %vm3346, %v3330, %v3251
        %v3364 = vsel %vm3346, %v3331, %v3253
        %v3365 = vsel %vm3346, %v3332, %v3255
        %v3366 = vsel %vm3346, %v3333, %v3257
        %v3367 = vsel %vm3346, %v3334, %v3259
        %v3368 = vsel %vm3346, %v3335, %v3261
        %v3369 = vsel %vm3346, %v3336, %v3263
        %v3370 = vsel %vm3346, %v3337, %v3265
        %v3371 = vsel %vm3346, %v3338, %v3267
        %v3372 = vsel %vm3346, %v3339, %v3269
        %v3373 = vsel %vm3346, %v3340, %v3271
        %v3374 = vsel %vm3346, %v3341, %v3273
        %v3375 = vsel %vm3346, %v3342, %v3275
        %v3376 = vsel %vm3346, %v3343, %v3277
        %v3377 = vsel %vm3346, %v3344, %v3279
        %v3378 = vsel %vm3346, %v3345, %v3281
        %vm3379 = vcmask 490496
        %3380 = vst.msk [vmem:[#allocation5] sm:$0xff] %vm3379, %v3347
        %3381 = vst.msk [vmem:[#allocation5 + $0x10] sm:$0xff] %vm3379, %v3348
        %3382 = vst.msk [vmem:[#allocation5 + $0x20] sm:$0xff] %vm3379, %v3349
        %3383 = vst.msk [vmem:[#allocation5 + $0x30] sm:$0xff] %vm3379, %v3350
        %3384 = vst.msk [vmem:[#allocation5 + $0x40] sm:$0xff] %vm3379, %v3351
        %3385 = vst.msk [vmem:[#allocation5 + $0x50] sm:$0xff] %vm3379, %v3352
        %3386 = vst.msk [vmem:[#allocation5 + $0x60] sm:$0xff] %vm3379, %v3353
        %3387 = vst.msk [vmem:[#allocation5 + $0x70] sm:$0xff] %vm3379, %v3354
        %3388 = vst.msk [vmem:[#allocation5 + $0x80] sm:$0xff] %vm3379, %v3355
        %3389 = vst.msk [vmem:[#allocation5 + $0x90] sm:$0xff] %vm3379, %v3356
        %3390 = vst.msk [vmem:[#allocation5 + $0xa0] sm:$0xff] %vm3379, %v3357
        %3391 = vst.msk [vmem:[#allocation5 + $0xb0] sm:$0xff] %vm3379, %v3358
        %3392 = vst.msk [vmem:[#allocation5 + $0xc0] sm:$0xff] %vm3379, %v3359
        %3393 = vst.msk [vmem:[#allocation5 + $0xd0] sm:$0xff] %vm3379, %v3360
        %3394 = vst.msk [vmem:[#allocation5 + $0xe0] sm:$0xff] %vm3379, %v3361
        %3395 = vst.msk [vmem:[#allocation5 + $0xf0] sm:$0xff] %vm3379, %v3362
        %3396 = vst.msk [vmem:[#allocation5 + $0x100] sm:$0xff] %vm3379, %v3363
        %3397 = vst.msk [vmem:[#allocation5 + $0x110] sm:$0xff] %vm3379, %v3364
        %3398 = vst.msk [vmem:[#allocation5 + $0x120] sm:$0xff] %vm3379, %v3365
        %3399 = vst.msk [vmem:[#allocation5 + $0x130] sm:$0xff] %vm3379, %v3366
        %3400 = vst.msk [vmem:[#allocation5 + $0x140] sm:$0xff] %vm3379, %v3367
        %3401 = vst.msk [vmem:[#allocation5 + $0x150] sm:$0xff] %vm3379, %v3368
        %3402 = vst.msk [vmem:[#allocation5 + $0x160] sm:$0xff] %vm3379, %v3369
        %3403 = vst.msk [vmem:[#allocation5 + $0x170] sm:$0xff] %vm3379, %v3370
        %3404 = vst.msk [vmem:[#allocation5 + $0x180] sm:$0xff] %vm3379, %v3371
        %3405 = vst.msk [vmem:[#allocation5 + $0x190] sm:$0xff] %vm3379, %v3372
        %3406 = vst.msk [vmem:[#allocation5 + $0x1a0] sm:$0xff] %vm3379, %v3373
        %3407 = vst.msk [vmem:[#allocation5 + $0x1b0] sm:$0xff] %vm3379, %v3374
        %3408 = vst.msk [vmem:[#allocation5 + $0x1c0] sm:$0xff] %vm3379, %v3375
        %3409 = vst.msk [vmem:[#allocation5 + $0x1d0] sm:$0xff] %vm3379, %v3376
        %3410 = vst.msk [vmem:[#allocation5 + $0x1e0] sm:$0xff] %vm3379, %v3377
        %3411 = vst.msk [vmem:[#allocation5 + $0x1f0] sm:$0xff] %vm3379, %v3378
        %v3415 = vrot.slane %v2908, 1
        %v3416 = vrot.slane %v2909, 1
        %v3417 = vsel %vm499, %v3415, %v3416
        %v3418 = vrot.slane %v2910, 1
        %v3419 = vsel %vm499, %v3416, %v3418
        %3420 = vrot.lane.b32.xlu0 %v3417, 20
        %v3421 = vpop.permute.xlu0 %3420
        %3422 = vrot.lane.b32.xlu0 %v3419, 20
        %v3423 = vpop.permute.xlu0 %3422
        %v3426 = vrot.slane %v2908, 2
        %v3427 = vrot.slane %v2909, 2
        %v3428 = vsel %vm676, %v3426, %v3427
        %v3429 = vrot.slane %v2910, 2
        %v3430 = vsel %vm676, %v3427, %v3429
        %3431 = vrot.lane.b32.xlu0 %v3428, 40
        %v3432 = vpop.permute.xlu0 %3431
        %3433 = vrot.lane.b32.xlu0 %v3430, 40
        %v3434 = vpop.permute.xlu0 %3433
        %v3437 = vsel %vm1338, %v2908, %v3421
        %v3438 = vsel %vm1338, %v2909, %v3423
        %v3439 = vsel %vm3346, %v3437, %v3432
        %v3440 = vsel %vm3346, %v3438, %v3434
        %3473 = vrot.lane.b32.xlu0 %v3349, 60
        %v3474 = vpop.permute.xlu0 %3473
        %3475 = vrot.lane.b32.xlu0 %v3350, 60
        %v3476 = vpop.permute.xlu0 %3475
        %3477 = vrot.lane.b32.xlu0 %v3351, 60
        %v3478 = vpop.permute.xlu0 %3477
        %3479 = vrot.lane.b32.xlu0 %v3352, 60
        %v3480 = vpop.permute.xlu0 %3479
        %3481 = vrot.lane.b32.xlu0 %v3353, 60
        %v3482 = vpop.permute.xlu0 %3481
        %3483 = vrot.lane.b32.xlu0 %v3354, 60
        %v3484 = vpop.permute.xlu0 %3483
        %3485 = vrot.lane.b32.xlu0 %v3355, 60
        %v3486 = vpop.permute.xlu0 %3485
        %3487 = vrot.lane.b32.xlu0 %v3356, 60
        %v3488 = vpop.permute.xlu0 %3487
        %3489 = vrot.lane.b32.xlu0 %v3357, 60
        %v3490 = vpop.permute.xlu0 %3489
        %3491 = vrot.lane.b32.xlu0 %v3358, 60
        %v3492 = vpop.permute.xlu0 %3491
        %3493 = vrot.lane.b32.xlu0 %v3359, 60
        %v3494 = vpop.permute.xlu0 %3493
        %3495 = vrot.lane.b32.xlu0 %v3360, 60
        %v3496 = vpop.permute.xlu0 %3495
        %3497 = vrot.lane.b32.xlu0 %v3361, 60
        %v3498 = vpop.permute.xlu0 %3497
        %3499 = vrot.lane.b32.xlu0 %v3362, 60
        %v3500 = vpop.permute.xlu0 %3499
        %3501 = vrot.lane.b32.xlu0 %v3363, 60
        %v3502 = vpop.permute.xlu0 %3501
        %3503 = vrot.lane.b32.xlu0 %v3364, 60
        %v3504 = vpop.permute.xlu0 %3503
        %3505 = vrot.lane.b32.xlu0 %v3365, 60
        %v3506 = vpop.permute.xlu0 %3505
        %3507 = vrot.lane.b32.xlu0 %v3366, 60
        %v3508 = vpop.permute.xlu0 %3507
        %3509 = vrot.lane.b32.xlu0 %v3367, 60
        %v3510 = vpop.permute.xlu0 %3509
        %3511 = vrot.lane.b32.xlu0 %v3368, 60
        %v3512 = vpop.permute.xlu0 %3511
        %3513 = vrot.lane.b32.xlu0 %v3369, 60
        %v3514 = vpop.permute.xlu0 %3513
        %3515 = vrot.lane.b32.xlu0 %v3370, 60
        %v3516 = vpop.permute.xlu0 %3515
        %3517 = vrot.lane.b32.xlu0 %v3371, 60
        %v3518 = vpop.permute.xlu0 %3517
        %3519 = vrot.lane.b32.xlu0 %v3372, 60
        %v3520 = vpop.permute.xlu0 %3519
        %3521 = vrot.lane.b32.xlu0 %v3373, 60
        %v3522 = vpop.permute.xlu0 %3521
        %3523 = vrot.lane.b32.xlu0 %v3374, 60
        %v3524 = vpop.permute.xlu0 %3523
        %3525 = vrot.lane.b32.xlu0 %v3375, 60
        %v3526 = vpop.permute.xlu0 %3525
        %3527 = vrot.lane.b32.xlu0 %v3376, 60
        %v3528 = vpop.permute.xlu0 %3527
        %3529 = vrot.lane.b32.xlu0 %v3377, 60
        %v3530 = vpop.permute.xlu0 %3529
        %3531 = vrot.lane.b32.xlu0 %v3378, 60
        %v3532 = vpop.permute.xlu0 %3531
        %3533 = vrot.lane.b32.xlu0 %v3439, 60
        %v3534 = vpop.permute.xlu0 %3533
        %3535 = vrot.lane.b32.xlu0 %v3440, 60
        %v3536 = vpop.permute.xlu0 %3535
        %vm3569 = vcmask 982496
        %3570 = vst.msk [vmem:[#allocation5] sm:$0xff] %vm3569, %v3474
        %3571 = vst.msk [vmem:[#allocation5 + $0x10] sm:$0xff] %vm3569, %v3476
        %3572 = vst.msk [vmem:[#allocation5 + $0x20] sm:$0xff] %vm3569, %v3478
        %3573 = vst.msk [vmem:[#allocation5 + $0x30] sm:$0xff] %vm3569, %v3480
        %3574 = vst.msk [vmem:[#allocation5 + $0x40] sm:$0xff] %vm3569, %v3482
        %3575 = vst.msk [vmem:[#allocation5 + $0x50] sm:$0xff] %vm3569, %v3484
        %3576 = vst.msk [vmem:[#allocation5 + $0x60] sm:$0xff] %vm3569, %v3486
        %3577 = vst.msk [vmem:[#allocation5 + $0x70] sm:$0xff] %vm3569, %v3488
        %3578 = vst.msk [vmem:[#allocation5 + $0x80] sm:$0xff] %vm3569, %v3490
        %3579 = vst.msk [vmem:[#allocation5 + $0x90] sm:$0xff] %vm3569, %v3492
        %3580 = vst.msk [vmem:[#allocation5 + $0xa0] sm:$0xff] %vm3569, %v3494
        %3581 = vst.msk [vmem:[#allocation5 + $0xb0] sm:$0xff] %vm3569, %v3496
        %3582 = vst.msk [vmem:[#allocation5 + $0xc0] sm:$0xff] %vm3569, %v3498
        %3583 = vst.msk [vmem:[#allocation5 + $0xd0] sm:$0xff] %vm3569, %v3500
        %3584 = vst.msk [vmem:[#allocation5 + $0xe0] sm:$0xff] %vm3569, %v3502
        %3585 = vst.msk [vmem:[#allocation5 + $0xf0] sm:$0xff] %vm3569, %v3504
        %3586 = vst.msk [vmem:[#allocation5 + $0x100] sm:$0xff] %vm3569, %v3506
        %3587 = vst.msk [vmem:[#allocation5 + $0x110] sm:$0xff] %vm3569, %v3508
        %3588 = vst.msk [vmem:[#allocation5 + $0x120] sm:$0xff] %vm3569, %v3510
        %3589 = vst.msk [vmem:[#allocation5 + $0x130] sm:$0xff] %vm3569, %v3512
        %3590 = vst.msk [vmem:[#allocation5 + $0x140] sm:$0xff] %vm3569, %v3514
        %3591 = vst.msk [vmem:[#allocation5 + $0x150] sm:$0xff] %vm3569, %v3516
        %3592 = vst.msk [vmem:[#allocation5 + $0x160] sm:$0xff] %vm3569, %v3518
        %3593 = vst.msk [vmem:[#allocation5 + $0x170] sm:$0xff] %vm3569, %v3520
        %3594 = vst.msk [vmem:[#allocation5 + $0x180] sm:$0xff] %vm3569, %v3522
        %3595 = vst.msk [vmem:[#allocation5 + $0x190] sm:$0xff] %vm3569, %v3524
        %3596 = vst.msk [vmem:[#allocation5 + $0x1a0] sm:$0xff] %vm3569, %v3526
        %3597 = vst.msk [vmem:[#allocation5 + $0x1b0] sm:$0xff] %vm3569, %v3528
        %3598 = vst.msk [vmem:[#allocation5 + $0x1c0] sm:$0xff] %vm3569, %v3530
        %3599 = vst.msk [vmem:[#allocation5 + $0x1d0] sm:$0xff] %vm3569, %v3532
        %3600 = vst.msk [vmem:[#allocation5 + $0x1e0] sm:$0xff] %vm3569, %v3534
        %3601 = vst.msk [vmem:[#allocation5 + $0x1f0] sm:$0xff] %vm3569, %v3536
        %v3605 = vrot.slane %v2911, 1
        %v3606 = vrot.slane %v2912, 1
        %v3607 = vsel %vm499, %v3605, %v3606
        %v3608 = vrot.slane %v2913, 1
        %v3609 = vsel %vm499, %v3606, %v3608
        %3610 = vrot.lane.b32.xlu0 %v3607, 20
        %v3611 = vpop.permute.xlu0 %3610
        %3612 = vrot.lane.b32.xlu0 %v3609, 20
        %v3613 = vpop.permute.xlu0 %3612
        %v3616 = vrot.slane %v2911, 2
        %v3617 = vrot.slane %v2912, 2
        %v3618 = vsel %vm676, %v3616, %v3617
        %v3619 = vrot.slane %v2913, 2
        %v3620 = vsel %vm676, %v3617, %v3619
        %3621 = vrot.lane.b32.xlu0 %v3618, 40
        %v3622 = vpop.permute.xlu0 %3621
        %3623 = vrot.lane.b32.xlu0 %v3620, 40
        %v3624 = vpop.permute.xlu0 %3623
        %v3627 = vsel %vm1338, %v2911, %v3611
        %v3628 = vsel %vm1338, %v2912, %v3613
        %v3629 = vsel %vm3346, %v3627, %v3622
        %v3630 = vsel %vm3346, %v3628, %v3624
        %3633 = vrot.lane.b32.xlu0 %v3351, 120
        %v3634 = vpop.permute.xlu0 %3633
        %3635 = vrot.lane.b32.xlu0 %v3352, 120
        %v3636 = vpop.permute.xlu0 %3635
        %3637 = vrot.lane.b32.xlu0 %v3353, 120
        %v3638 = vpop.permute.xlu0 %3637
        %3639 = vrot.lane.b32.xlu0 %v3354, 120
        %v3640 = vpop.permute.xlu0 %3639
        %3641 = vrot.lane.b32.xlu0 %v3355, 120
        %v3642 = vpop.permute.xlu0 %3641
        %3643 = vrot.lane.b32.xlu0 %v3356, 120
        %v3644 = vpop.permute.xlu0 %3643
        %3645 = vrot.lane.b32.xlu0 %v3357, 120
        %v3646 = vpop.permute.xlu0 %3645
        %3647 = vrot.lane.b32.xlu0 %v3358, 120
        %v3648 = vpop.permute.xlu0 %3647
        %3649 = vrot.lane.b32.xlu0 %v3359, 120
        %v3650 = vpop.permute.xlu0 %3649
        %3651 = vrot.lane.b32.xlu0 %v3360, 120
        %v3652 = vpop.permute.xlu0 %3651
        %3653 = vrot.lane.b32.xlu0 %v3361, 120
        %v3654 = vpop.permute.xlu0 %3653
        %3655 = vrot.lane.b32.xlu0 %v3362, 120
        %v3656 = vpop.permute.xlu0 %3655
        %3657 = vrot.lane.b32.xlu0 %v3363, 120
        %v3658 = vpop.permute.xlu0 %3657
        %3659 = vrot.lane.b32.xlu0 %v3364, 120
        %v3660 = vpop.permute.xlu0 %3659
        %3661 = vrot.lane.b32.xlu0 %v3365, 120
        %v3662 = vpop.permute.xlu0 %3661
        %3663 = vrot.lane.b32.xlu0 %v3366, 120
        %v3664 = vpop.permute.xlu0 %3663
        %3665 = vrot.lane.b32.xlu0 %v3367, 120
        %v3666 = vpop.permute.xlu0 %3665
        %3667 = vrot.lane.b32.xlu0 %v3368, 120
        %v3668 = vpop.permute.xlu0 %3667
        %3669 = vrot.lane.b32.xlu0 %v3369, 120
        %v3670 = vpop.permute.xlu0 %3669
        %3671 = vrot.lane.b32.xlu0 %v3370, 120
        %v3672 = vpop.permute.xlu0 %3671
        %3673 = vrot.lane.b32.xlu0 %v3371, 120
        %v3674 = vpop.permute.xlu0 %3673
        %3675 = vrot.lane.b32.xlu0 %v3372, 120
        %v3676 = vpop.permute.xlu0 %3675
        %3677 = vrot.lane.b32.xlu0 %v3373, 120
        %v3678 = vpop.permute.xlu0 %3677
        %3679 = vrot.lane.b32.xlu0 %v3374, 120
        %v3680 = vpop.permute.xlu0 %3679
        %3681 = vrot.lane.b32.xlu0 %v3375, 120
        %v3682 = vpop.permute.xlu0 %3681
        %3683 = vrot.lane.b32.xlu0 %v3376, 120
        %v3684 = vpop.permute.xlu0 %3683
        %3685 = vrot.lane.b32.xlu0 %v3377, 120
        %v3686 = vpop.permute.xlu0 %3685
        %3687 = vrot.lane.b32.xlu0 %v3378, 120
        %v3688 = vpop.permute.xlu0 %3687
        %3689 = vrot.lane.b32.xlu0 %v3439, 120
        %v3690 = vpop.permute.xlu0 %3689
        %3691 = vrot.lane.b32.xlu0 %v3440, 120
        %v3692 = vpop.permute.xlu0 %3691
        %3693 = vrot.lane.b32.xlu0 %v3629, 120
        %v3694 = vpop.permute.xlu0 %3693
        %3695 = vrot.lane.b32.xlu0 %v3630, 120
        %v3696 = vpop.permute.xlu0 %3695
        %vm3729 = vcmask 1048512
        %3730 = vst.msk [vmem:[#allocation5] sm:$0xff] %vm3729, %v3634
        %vm3731 = vcmask 424960
        %3732 = vst.msk [vmem:[#allocation5 + $0x8] sm:$0xff] %vm3731, %v3634
        %3733 = vst.msk [vmem:[#allocation5 + $0x10] sm:$0xff] %vm3729, %v3636
        %3734 = vst.msk [vmem:[#allocation5 + $0x18] sm:$0xff] %vm3731, %v3636
        %3735 = vst.msk [vmem:[#allocation5 + $0x20] sm:$0xff] %vm3729, %v3638
        %3736 = vst.msk [vmem:[#allocation5 + $0x28] sm:$0xff] %vm3731, %v3638
        %3737 = vst.msk [vmem:[#allocation5 + $0x30] sm:$0xff] %vm3729, %v3640
        %3738 = vst.msk [vmem:[#allocation5 + $0x38] sm:$0xff] %vm3731, %v3640
        %3739 = vst.msk [vmem:[#allocation5 + $0x40] sm:$0xff] %vm3729, %v3642
        %3740 = vst.msk [vmem:[#allocation5 + $0x48] sm:$0xff] %vm3731, %v3642
        %3741 = vst.msk [vmem:[#allocation5 + $0x50] sm:$0xff] %vm3729, %v3644
        %3742 = vst.msk [vmem:[#allocation5 + $0x58] sm:$0xff] %vm3731, %v3644
        %3743 = vst.msk [vmem:[#allocation5 + $0x60] sm:$0xff] %vm3729, %v3646
        %3744 = vst.msk [vmem:[#allocation5 + $0x68] sm:$0xff] %vm3731, %v3646
        %3745 = vst.msk [vmem:[#allocation5 + $0x70] sm:$0xff] %vm3729, %v3648
        %3746 = vst.msk [vmem:[#allocation5 + $0x78] sm:$0xff] %vm3731, %v3648
        %3747 = vst.msk [vmem:[#allocation5 + $0x80] sm:$0xff] %vm3729, %v3650
        %3748 = vst.msk [vmem:[#allocation5 + $0x88] sm:$0xff] %vm3731, %v3650
        %3749 = vst.msk [vmem:[#allocation5 + $0x90] sm:$0xff] %vm3729, %v3652
        %3750 = vst.msk [vmem:[#allocation5 + $0x98] sm:$0xff] %vm3731, %v3652
        %3751 = vst.msk [vmem:[#allocation5 + $0xa0] sm:$0xff] %vm3729, %v3654
        %3752 = vst.msk [vmem:[#allocation5 + $0xa8] sm:$0xff] %vm3731, %v3654
        %3753 = vst.msk [vmem:[#allocation5 + $0xb0] sm:$0xff] %vm3729, %v3656
        %3754 = vst.msk [vmem:[#allocation5 + $0xb8] sm:$0xff] %vm3731, %v3656
        %3755 = vst.msk [vmem:[#allocation5 + $0xc0] sm:$0xff] %vm3729, %v3658
        %3756 = vst.msk [vmem:[#allocation5 + $0xc8] sm:$0xff] %vm3731, %v3658
        %3757 = vst.msk [vmem:[#allocation5 + $0xd0] sm:$0xff] %vm3729, %v3660
        %3758 = vst.msk [vmem:[#allocation5 + $0xd8] sm:$0xff] %vm3731, %v3660
        %3759 = vst.msk [vmem:[#allocation5 + $0xe0] sm:$0xff] %vm3729, %v3662
        %3760 = vst.msk [vmem:[#allocation5 + $0xe8] sm:$0xff] %vm3731, %v3662
        %3761 = vst.msk [vmem:[#allocation5 + $0xf0] sm:$0xff] %vm3729, %v3664
        %3762 = vst.msk [vmem:[#allocation5 + $0xf8] sm:$0xff] %vm3731, %v3664
        %3763 = vst.msk [vmem:[#allocation5 + $0x100] sm:$0xff] %vm3729, %v3666
        %3764 = vst.msk [vmem:[#allocation5 + $0x108] sm:$0xff] %vm3731, %v3666
        %3765 = vst.msk [vmem:[#allocation5 + $0x110] sm:$0xff] %vm3729, %v3668
        %3766 = vst.msk [vmem:[#allocation5 + $0x118] sm:$0xff] %vm3731, %v3668
        %3767 = vst.msk [vmem:[#allocation5 + $0x120] sm:$0xff] %vm3729, %v3670
        %3768 = vst.msk [vmem:[#allocation5 + $0x128] sm:$0xff] %vm3731, %v3670
        %3769 = vst.msk [vmem:[#allocation5 + $0x130] sm:$0xff] %vm3729, %v3672
        %3770 = vst.msk [vmem:[#allocation5 + $0x138] sm:$0xff] %vm3731, %v3672
        %3771 = vst.msk [vmem:[#allocation5 + $0x140] sm:$0xff] %vm3729, %v3674
        %3772 = vst.msk [vmem:[#allocation5 + $0x148] sm:$0xff] %vm3731, %v3674
        %3773 = vst.msk [vmem:[#allocation5 + $0x150] sm:$0xff] %vm3729, %v3676
        %3774 = vst.msk [vmem:[#allocation5 + $0x158] sm:$0xff] %vm3731, %v3676
        %3775 = vst.msk [vmem:[#allocation5 + $0x160] sm:$0xff] %vm3729, %v3678
        %3776 = vst.msk [vmem:[#allocation5 + $0x168] sm:$0xff] %vm3731, %v3678
        %3777 = vst.msk [vmem:[#allocation5 + $0x170] sm:$0xff] %vm3729, %v3680
        %3778 = vst.msk [vmem:[#allocation5 + $0x178] sm:$0xff] %vm3731, %v3680
        %3779 = vst.msk [vmem:[#allocation5 + $0x180] sm:$0xff] %vm3729, %v3682
        %3780 = vst.msk [vmem:[#allocation5 + $0x188] sm:$0xff] %vm3731, %v3682
        %3781 = vst.msk [vmem:[#allocation5 + $0x190] sm:$0xff] %vm3729, %v3684
        %3782 = vst.msk [vmem:[#allocation5 + $0x198] sm:$0xff] %vm3731, %v3684
        %3783 = vst.msk [vmem:[#allocation5 + $0x1a0] sm:$0xff] %vm3729, %v3686
        %3784 = vst.msk [vmem:[#allocation5 + $0x1a8] sm:$0xff] %vm3731, %v3686
        %3785 = vst.msk [vmem:[#allocation5 + $0x1b0] sm:$0xff] %vm3729, %v3688
        %3786 = vst.msk [vmem:[#allocation5 + $0x1b8] sm:$0xff] %vm3731, %v3688
        %3787 = vst.msk [vmem:[#allocation5 + $0x1c0] sm:$0xff] %vm3729, %v3690
        %3788 = vst.msk [vmem:[#allocation5 + $0x1c8] sm:$0xff] %vm3731, %v3690
        %3789 = vst.msk [vmem:[#allocation5 + $0x1d0] sm:$0xff] %vm3729, %v3692
        %3790 = vst.msk [vmem:[#allocation5 + $0x1d8] sm:$0xff] %vm3731, %v3692
        %3791 = vst.msk [vmem:[#allocation5 + $0x1e0] sm:$0xff] %vm3729, %v3694
        %3792 = vst.msk [vmem:[#allocation5 + $0x1e8] sm:$0xff] %vm3731, %v3694
        %3793 = vst.msk [vmem:[#allocation5 + $0x1f0] sm:$0xff] %vm3729, %v3696
        %3794 = vst.msk [vmem:[#allocation5 + $0x1f8] sm:$0xff] %vm3731, %v3696
        %v3795 = vld [vmem:[#allocation5] sm:$0xff]
        %v3796 = vld [vmem:[#allocation5 + $0x8] sm:$0xff]
        %v3797 = vld [vmem:[#allocation5 + $0x10] sm:$0xff]
        %v3798 = vld [vmem:[#allocation5 + $0x18] sm:$0xff]
        %v3799 = vld [vmem:[#allocation5 + $0x20] sm:$0xff]
        %v3800 = vld [vmem:[#allocation5 + $0x28] sm:$0xff]
        %v3801 = vld [vmem:[#allocation5 + $0x30] sm:$0xff]
        %v3802 = vld [vmem:[#allocation5 + $0x38] sm:$0xff]
        %v3803 = vld [vmem:[#allocation5 + $0x40] sm:$0xff]
        %v3804 = vld [vmem:[#allocation5 + $0x48] sm:$0xff]
        %v3805 = vld [vmem:[#allocation5 + $0x50] sm:$0xff]
        %v3806 = vld [vmem:[#allocation5 + $0x58] sm:$0xff]
        %v3807 = vld [vmem:[#allocation5 + $0x60] sm:$0xff]
        %v3808 = vld [vmem:[#allocation5 + $0x68] sm:$0xff]
        %v3809 = vld [vmem:[#allocation5 + $0x70] sm:$0xff]
        %v3810 = vld [vmem:[#allocation5 + $0x78] sm:$0xff]
        %v3811 = vld [vmem:[#allocation5 + $0x80] sm:$0xff]
        %v3812 = vld [vmem:[#allocation5 + $0x88] sm:$0xff]
        %v3813 = vld [vmem:[#allocation5 + $0x90] sm:$0xff]
        %v3814 = vld [vmem:[#allocation5 + $0x98] sm:$0xff]
        %v3815 = vld [vmem:[#allocation5 + $0xa0] sm:$0xff]
        %v3816 = vld [vmem:[#allocation5 + $0xa8] sm:$0xff]
        %v3817 = vld [vmem:[#allocation5 + $0xb0] sm:$0xff]
        %v3818 = vld [vmem:[#allocation5 + $0xb8] sm:$0xff]
        %v3819 = vld [vmem:[#allocation5 + $0xc0] sm:$0xff]
        %v3820 = vld [vmem:[#allocation5 + $0xc8] sm:$0xff]
        %v3821 = vld [vmem:[#allocation5 + $0xd0] sm:$0xff]
        %v3822 = vld [vmem:[#allocation5 + $0xd8] sm:$0xff]
        %v3823 = vld [vmem:[#allocation5 + $0xe0] sm:$0xff]
        %v3824 = vld [vmem:[#allocation5 + $0xe8] sm:$0xff]
        %v3825 = vld [vmem:[#allocation5 + $0xf0] sm:$0xff]
        %v3826 = vld [vmem:[#allocation5 + $0xf8] sm:$0xff]
        %v3827 = vld [vmem:[#allocation5 + $0x100] sm:$0xff]
        %v3828 = vld [vmem:[#allocation5 + $0x108] sm:$0xff]
        %v3829 = vld [vmem:[#allocation5 + $0x110] sm:$0xff]
        %v3830 = vld [vmem:[#allocation5 + $0x118] sm:$0xff]
        %v3831 = vld [vmem:[#allocation5 + $0x120] sm:$0xff]
        %v3832 = vld [vmem:[#allocation5 + $0x128] sm:$0xff]
        %v3833 = vld [vmem:[#allocation5 + $0x130] sm:$0xff]
        %v3834 = vld [vmem:[#allocation5 + $0x138] sm:$0xff]
        %v3835 = vld [vmem:[#allocation5 + $0x140] sm:$0xff]
        %v3836 = vld [vmem:[#allocation5 + $0x148] sm:$0xff]
        %v3837 = vld [vmem:[#allocation5 + $0x150] sm:$0xff]
        %v3838 = vld [vmem:[#allocation5 + $0x158] sm:$0xff]
        %v3839 = vld [vmem:[#allocation5 + $0x160] sm:$0xff]
        %v3840 = vld [vmem:[#allocation5 + $0x168] sm:$0xff]
        %v3841 = vld [vmem:[#allocation5 + $0x170] sm:$0xff]
        %v3842 = vld [vmem:[#allocation5 + $0x178] sm:$0xff]
        %v3843 = vld [vmem:[#allocation5 + $0x180] sm:$0xff]
        %v3844 = vld [vmem:[#allocation5 + $0x188] sm:$0xff]
        %v3845 = vld [vmem:[#allocation5 + $0x190] sm:$0xff]
        %v3846 = vld [vmem:[#allocation5 + $0x198] sm:$0xff]
        %v3847 = vld [vmem:[#allocation5 + $0x1a0] sm:$0xff]
        %v3848 = vld [vmem:[#allocation5 + $0x1a8] sm:$0xff]
        %v3849 = vld [vmem:[#allocation5 + $0x1b0] sm:$0xff]
        %v3850 = vld [vmem:[#allocation5 + $0x1b8] sm:$0xff]
        %v3851 = vld [vmem:[#allocation5 + $0x1c0] sm:$0xff]
        %v3852 = vld [vmem:[#allocation5 + $0x1c8] sm:$0xff]
        %v3853 = vld [vmem:[#allocation5 + $0x1d0] sm:$0xff]
        %v3854 = vld [vmem:[#allocation5 + $0x1d8] sm:$0xff]
        %v3855 = vld [vmem:[#allocation5 + $0x1e0] sm:$0xff]
        %v3856 = vld [vmem:[#allocation5 + $0x1e8] sm:$0xff]
        %v3857 = vld [vmem:[#allocation5 + $0x1f0] sm:$0xff]
        %v3858 = vld [vmem:[#allocation5 + $0x1f8] sm:$0xff]
        %v3859 = vld [vmem:[%s4] sm:$0xff]
        %v3860 = vld [vmem:[%s4 + $0x8] sm:$0xff]
        %v3861 = vld [vmem:[%s4 + $0x10] sm:$0xff]
        %v3862 = vld [vmem:[%s4 + $0x18] sm:$0xff]
        %v3863 = vld [vmem:[%s4 + $0x20] sm:$0xff]
        %v3864 = vld [vmem:[%s4 + $0x28] sm:$0xff]
        %v3865 = vld [vmem:[%s4 + $0x30] sm:$0xff]
        %v3866 = vld [vmem:[%s4 + $0x38] sm:$0xff]
        %v3867 = vld [vmem:[%s4 + $0x40] sm:$0xff]
        %v3868 = vld [vmem:[%s4 + $0x48] sm:$0xff]
        %v3869 = vld [vmem:[%s4 + $0x50] sm:$0xff]
        %v3870 = vld [vmem:[%s4 + $0x58] sm:$0xff]
        %v3871 = vld [vmem:[%s4 + $0x60] sm:$0xff]
        %v3872 = vld [vmem:[%s4 + $0x68] sm:$0xff]
        %v3873 = vld [vmem:[%s4 + $0x70] sm:$0xff]
        %v3874 = vld [vmem:[%s4 + $0x78] sm:$0xff]
        %v3875 = vld [vmem:[%s4 + $0x80] sm:$0xff]
        %v3876 = vld [vmem:[%s4 + $0x88] sm:$0xff]
        %v3877 = vld [vmem:[%s4 + $0x90] sm:$0xff]
        %v3878 = vld [vmem:[%s4 + $0x98] sm:$0xff]
        %v3879 = vld [vmem:[%s4 + $0xa0] sm:$0xff]
        %v3880 = vld [vmem:[%s4 + $0xa8] sm:$0xff]
        %v3881 = vld [vmem:[%s4 + $0xb0] sm:$0xf]
        %v3883 = vsel %vm3731, %v3796, 0
        %v3886 = vsel %vm3731, %v3798, 0
        %v3889 = vsel %vm3731, %v3800, 0
        %v3892 = vsel %vm3731, %v3802, 0
        %v3895 = vsel %vm3731, %v3804, 0
        %v3898 = vsel %vm3731, %v3806, 0
        %v3901 = vsel %vm3731, %v3808, 0
        %v3904 = vsel %vm3731, %v3810, 0
        %v3907 = vsel %vm3731, %v3812, 0
        %v3910 = vsel %vm3731, %v3814, 0
        %v3913 = vsel %vm3731, %v3816, 0
        %v3916 = vsel %vm3731, %v3818, 0
        %v3919 = vsel %vm3731, %v3820, 0
        %v3922 = vsel %vm3731, %v3822, 0
        %v3925 = vsel %vm3731, %v3824, 0
        %v3928 = vsel %vm3731, %v3826, 0
        %v3931 = vsel %vm3731, %v3828, 0
        %v3934 = vsel %vm3731, %v3830, 0
        %v3937 = vsel %vm3731, %v3832, 0
        %v3940 = vsel %vm3731, %v3834, 0
        %v3943 = vsel %vm3731, %v3836, 0
        %v3946 = vsel %vm3731, %v3838, 0
        %v3949 = vsel %vm3731, %v3840, 0
        %v3952 = vsel %vm3731, %v3842, 0
        %v3955 = vsel %vm3731, %v3844, 0
        %v3958 = vsel %vm3731, %v3846, 0
        %v3961 = vsel %vm3731, %v3848, 0
        %v3964 = vsel %vm3731, %v3850, 0
        %v3967 = vsel %vm3731, %v3852, 0
        %v3970 = vsel %vm3731, %v3854, 0
        %v3973 = vsel %vm3731, %v3856, 0
        %v3976 = vsel %vm3731, %v3858, 0
        %v3979 = vsel %vm1030, %v3881, 0
        %3981 = vmatprep.subr.mxu0 0.0
        %3982 = vmatpush1.msra.mxu0 %v3859
        %3983 = vmatprep.subr.mxu0 0.0
        %3984 = vmatpush1.msra.mxu0 %v3860
        %3985 = vmatprep.subr.mxu0 0.0
        %3986 = vmatpush1.msra.mxu0 %v3861
        %3987 = vmatprep.subr.mxu0 0.0
        %3988 = vmatpush1.msra.mxu0 %v3862
        %3989 = vmatprep.subr.mxu0 0.0
        %3990 = vmatpush1.msra.mxu0 %v3863
        %3991 = vmatprep.subr.mxu0 0.0
        %3992 = vmatpush1.msra.mxu0 %v3864
        %3993 = vmatprep.subr.mxu0 0.0
        %3994 = vmatpush1.msra.mxu0 %v3865
        %3995 = vmatprep.subr.mxu0 0.0
        %3996 = vmatpush1.msra.mxu0 %v3866
        %3997 = vmatprep.subr.mxu0 0.0
        %3998 = vmatpush1.msra.mxu0 %v3867
        %3999 = vmatprep.subr.mxu0 0.0
        %4000 = vmatpush1.msra.mxu0 %v3868
        %4001 = vmatprep.subr.mxu0 0.0
        %4002 = vmatpush1.msra.mxu0 %v3869
        %4003 = vmatprep.subr.mxu0 0.0
        %4004 = vmatpush1.msra.mxu0 %v3870
        %4005 = vmatprep.subr.mxu0 0.0
        %4006 = vmatpush1.msra.mxu0 %v3871
        %4007 = vmatprep.subr.mxu0 0.0
        %4008 = vmatpush1.msra.mxu0 %v3872
        %4009 = vmatprep.subr.mxu0 0.0
        %4010 = vmatpush1.msra.mxu0 %v3873
        %4011 = vmatprep.subr.mxu0 0.0
        %4012 = vmatpush1.msra.mxu0 %v3874
        %4013 = vmatprep.subr.mxu0 0.0
        %4014 = vmatpush1.msra.mxu0 %v3875
        %4015 = vmatprep.subr.mxu0 0.0
        %4016 = vmatpush1.msra.mxu0 %v3876
        %4017 = vmatprep.subr.mxu0 0.0
        %4018 = vmatpush1.msra.mxu0 %v3877
        %4019 = vmatprep.subr.mxu0 0.0
        %4020 = vmatpush1.msra.mxu0 %v3878
        %4021 = vmatprep.subr.mxu0 0.0
        %4022 = vmatpush1.msra.mxu0 %v3879
        %4023 = vmatprep.subr.mxu0 0.0
        %4024 = vmatpush1.msra.mxu0 %v3880
        %4025 = vmatprep.subr.mxu0 0.0
        %4026 = vmatpush1.msra.mxu0 %v3979
        %4027 = vmatprep.subr.mxu0 0.0
        %4028 = vmatpush1.msra.mxu0 0.0
        %4029 = vmatprep.subr.mxu0 0.0
        %4030 = vmatpush1.msra.mxu0 0.0
        %4031 = vmatprep.subr.mxu0 0.0
        %4032 = vmatpush1.msra.mxu0 0.0
        %4033 = vmatprep.subr.mxu0 0.0
        %4034 = vmatpush1.msra.mxu0 0.0
        %4035 = vmatprep.subr.mxu0 0.0
        %4036 = vmatpush1.msra.mxu0 0.0
        %4037 = vmatprep.subr.mxu0 0.0
        %4038 = vmatpush1.msra.mxu0 0.0
        %4039 = vmatprep.subr.mxu0 0.0
        %4040 = vmatpush1.msra.mxu0 0.0
        %4041 = vmatprep.subr.mxu0 0.0
        %4042 = vmatpush1.msra.mxu0 0.0
        %4043 = vmatprep.subr.mxu0 0.0
        %4044 = vmatpush1.msra.mxu0 0.0
        %4045 = vmatprep.mubr.f32.mxu0 %v3883
        %4046 = vmatmul.mubr.f32.gmra.mrb[0].mxu0 %v3795
        %v4047 = vpop.f32.mrb[0].mxu0
        %v4048 = vadd.f32 0.0, %v4047
        %v4049 = vpop.f32.mrb[0].mxu0
        %4050 = vmatprep.mubr.f32.mxu0 %v3886
        %4051 = vmatmul.mubr.f32.gmra.mrb[0].mxu0 %v3797
        %v4052 = vpop.f32.mrb[0].mxu0
        %v4053 = vadd.f32 0.0, %v4052
        %v4054 = vpop.f32.mrb[0].mxu0
        %4055 = vmatprep.mubr.f32.mxu0 %v3889
        %4056 = vmatmul.mubr.f32.gmra.mrb[0].mxu0 %v3799
        %v4057 = vpop.f32.mrb[0].mxu0
        %v4058 = vadd.f32 0.0, %v4057
        %v4059 = vpop.f32.mrb[0].mxu0
        %4060 = vmatprep.mubr.f32.mxu0 %v3892
        %4061 = vmatmul.mubr.f32.gmra.mrb[0].mxu0 %v3801
        %v4062 = vpop.f32.mrb[0].mxu0
        %v4063 = vadd.f32 0.0, %v4062
        %v4064 = vpop.f32.mrb[0].mxu0
        %4065 = vmatprep.mubr.f32.mxu0 %v3895
        %4066 = vmatmul.mubr.f32.gmra.mrb[0].mxu0 %v3803
        %v4067 = vpop.f32.mrb[0].mxu0
        %v4068 = vadd.f32 0.0, %v4067
        %v4069 = vpop.f32.mrb[0].mxu0
        %4070 = vmatprep.mubr.f32.mxu0 %v3898
        %4071 = vmatmul.mubr.f32.gmra.mrb[0].mxu0 %v3805
        %v4072 = vpop.f32.mrb[0].mxu0
        %v4073 = vadd.f32 0.0, %v4072
        %v4074 = vpop.f32.mrb[0].mxu0
        %4075 = vmatprep.mubr.f32.mxu0 %v3901
        %4076 = vmatmul.mubr.f32.gmra.mrb[0].mxu0 %v3807
        %v4077 = vpop.f32.mrb[0].mxu0
        %v4078 = vadd.f32 0.0, %v4077
        %v4079 = vpop.f32.mrb[0].mxu0
        %4080 = vmatprep.mubr.f32.mxu0 %v3904
        %4081 = vmatmul.mubr.f32.gmra.mrb[0].mxu0 %v3809
        %v4082 = vpop.f32.mrb[0].mxu0
        %v4083 = vadd.f32 0.0, %v4082
        %v4084 = vpop.f32.mrb[0].mxu0
        %4085 = vmatprep.mubr.f32.mxu0 %v3907
        %4086 = vmatmul.mubr.f32.gmra.mrb[0].mxu0 %v3811
        %v4087 = vpop.f32.mrb[0].mxu0
        %v4088 = vadd.f32 0.0, %v4087
        %v4089 = vpop.f32.mrb[0].mxu0
        %4090 = vmatprep.mubr.f32.mxu0 %v3910
        %4091 = vmatmul.mubr.f32.gmra.mrb[0].mxu0 %v3813
        %v4092 = vpop.f32.mrb[0].mxu0
        %v4093 = vadd.f32 0.0, %v4092
        %v4094 = vpop.f32.mrb[0].mxu0
        %4095 = vmatprep.mubr.f32.mxu0 %v3913
        %4096 = vmatmul.mubr.f32.gmra.mrb[0].mxu0 %v3815
        %v4097 = vpop.f32.mrb[0].mxu0
        %v4098 = vadd.f32 0.0, %v4097
        %v4099 = vpop.f32.mrb[0].mxu0
        %4100 = vmatprep.mubr.f32.mxu0 %v3916
        %4101 = vmatmul.mubr.f32.gmra.mrb[0].mxu0 %v3817
        %v4102 = vpop.f32.mrb[0].mxu0
        %v4103 = vadd.f32 0.0, %v4102
        %v4104 = vpop.f32.mrb[0].mxu0
        %4105 = vmatprep.mubr.f32.mxu0 %v3919
        %4106 = vmatmul.mubr.f32.gmra.mrb[0].mxu0 %v3819
        %v4107 = vpop.f32.mrb[0].mxu0
        %v4108 = vadd.f32 0.0, %v4107
        %v4109 = vpop.f32.mrb[0].mxu0
        %4110 = vmatprep.mubr.f32.mxu0 %v3922
        %4111 = vmatmul.mubr.f32.gmra.mrb[0].mxu0 %v3821
        %v4112 = vpop.f32.mrb[0].mxu0
        %v4113 = vadd.f32 0.0, %v4112
        %v4114 = vpop.f32.mrb[0].mxu0
        %4115 = vmatprep.mubr.f32.mxu0 %v3925
        %4116 = vmatmul.mubr.f32.gmra.mrb[0].mxu0 %v3823
        %v4117 = vpop.f32.mrb[0].mxu0
        %v4118 = vadd.f32 0.0, %v4117
        %v4119 = vpop.f32.mrb[0].mxu0
        %4120 = vmatprep.mubr.f32.mxu0 %v3928
        %4121 = vmatmul.mubr.f32.gmra.mrb[0].mxu0 %v3825
        %v4122 = vpop.f32.mrb[0].mxu0
        %v4123 = vadd.f32 0.0, %v4122
        %v4124 = vpop.f32.mrb[0].mxu0
        %4125 = vmatprep.mubr.f32.mxu0 %v3931
        %4126 = vmatmul.mubr.f32.gmra.mrb[0].mxu0 %v3827
        %v4127 = vpop.f32.mrb[0].mxu0
        %v4128 = vadd.f32 0.0, %v4127
        %v4129 = vpop.f32.mrb[0].mxu0
        %4130 = vmatprep.mubr.f32.mxu0 %v3934
        %4131 = vmatmul.mubr.f32.gmra.mrb[0].mxu0 %v3829
        %v4132 = vpop.f32.mrb[0].mxu0
        %v4133 = vadd.f32 0.0, %v4132
        %v4134 = vpop.f32.mrb[0].mxu0
        %4135 = vmatprep.mubr.f32.mxu0 %v3937
        %4136 = vmatmul.mubr.f32.gmra.mrb[0].mxu0 %v3831
        %v4137 = vpop.f32.mrb[0].mxu0
        %v4138 = vadd.f32 0.0, %v4137
        %v4139 = vpop.f32.mrb[0].mxu0
        %4140 = vmatprep.mubr.f32.mxu0 %v3940
        %4141 = vmatmul.mubr.f32.gmra.mrb[0].mxu0 %v3833
        %v4142 = vpop.f32.mrb[0].mxu0
        %v4143 = vadd.f32 0.0, %v4142
        %v4144 = vpop.f32.mrb[0].mxu0
        %4145 = vmatprep.mubr.f32.mxu0 %v3943
        %4146 = vmatmul.mubr.f32.gmra.mrb[0].mxu0 %v3835
        %v4147 = vpop.f32.mrb[0].mxu0
        %v4148 = vadd.f32 0.0, %v4147
        %v4149 = vpop.f32.mrb[0].mxu0
        %4150 = vmatprep.mubr.f32.mxu0 %v3946
        %4151 = vmatmul.mubr.f32.gmra.mrb[0].mxu0 %v3837
        %v4152 = vpop.f32.mrb[0].mxu0
        %v4153 = vadd.f32 0.0, %v4152
        %v4154 = vpop.f32.mrb[0].mxu0
        %4155 = vmatprep.mubr.f32.mxu0 %v3949
        %4156 = vmatmul.mubr.f32.gmra.mrb[0].mxu0 %v3839
        %v4157 = vpop.f32.mrb[0].mxu0
        %v4158 = vadd.f32 0.0, %v4157
        %v4159 = vpop.f32.mrb[0].mxu0
        %4160 = vmatprep.mubr.f32.mxu0 %v3952
        %4161 = vmatmul.mubr.f32.gmra.mrb[0].mxu0 %v3841
        %v4162 = vpop.f32.mrb[0].mxu0
        %v4163 = vadd.f32 0.0, %v4162
        %v4164 = vpop.f32.mrb[0].mxu0
        %4165 = vmatprep.mubr.f32.mxu0 %v3955
        %4166 = vmatmul.mubr.f32.gmra.mrb[0].mxu0 %v3843
        %v4167 = vpop.f32.mrb[0].mxu0
        %v4168 = vadd.f32 0.0, %v4167
        %v4169 = vpop.f32.mrb[0].mxu0
        %4170 = vmatprep.mubr.f32.mxu0 %v3958
        %4171 = vmatmul.mubr.f32.gmra.mrb[0].mxu0 %v3845
        %v4172 = vpop.f32.mrb[0].mxu0
        %v4173 = vadd.f32 0.0, %v4172
        %v4174 = vpop.f32.mrb[0].mxu0
        %4175 = vmatprep.mubr.f32.mxu0 %v3961
        %4176 = vmatmul.mubr.f32.gmra.mrb[0].mxu0 %v3847
        %v4177 = vpop.f32.mrb[0].mxu0
        %v4178 = vadd.f32 0.0, %v4177
        %v4179 = vpop.f32.mrb[0].mxu0
        %4180 = vmatprep.mubr.f32.mxu0 %v3964
        %4181 = vmatmul.mubr.f32.gmra.mrb[0].mxu0 %v3849
        %v4182 = vpop.f32.mrb[0].mxu0
        %v4183 = vadd.f32 0.0, %v4182
        %v4184 = vpop.f32.mrb[0].mxu0
        %4185 = vmatprep.mubr.f32.mxu0 %v3967
        %4186 = vmatmul.mubr.f32.gmra.mrb[0].mxu0 %v3851
        %v4187 = vpop.f32.mrb[0].mxu0
        %v4188 = vadd.f32 0.0, %v4187
        %v4189 = vpop.f32.mrb[0].mxu0
        %4190 = vmatprep.mubr.f32.mxu0 %v3970
        %4191 = vmatmul.mubr.f32.gmra.mrb[0].mxu0 %v3853
        %v4192 = vpop.f32.mrb[0].mxu0
        %v4193 = vadd.f32 0.0, %v4192
        %v4194 = vpop.f32.mrb[0].mxu0
        %4195 = vmatprep.mubr.f32.mxu0 %v3973
        %4196 = vmatmul.mubr.f32.gmra.mrb[0].mxu0 %v3855
        %v4197 = vpop.f32.mrb[0].mxu0
        %v4198 = vadd.f32 0.0, %v4197
        %v4199 = vpop.f32.mrb[0].mxu0
        %4200 = vmatprep.mubr.f32.mxu0 %v3976
        %4201 = vmatmul.mubr.f32.gmra.mrb[0].mxu0 %v3857
        %v4202 = vpop.f32.mrb[0].mxu0
        %v4203 = vadd.f32 0.0, %v4202
        %v4204 = vpop.f32.mrb[0].mxu0
        %4205 = vdwg.mxu0
        %v4206 = vld [vmem:[%s5] sm:$0x1]
        %v4208 = vlaneseq
        %v4209 = vshrl.u32 %v4208, 7
        %v4210 = vsub.s32 0, %v4209
        %v4211 = vrot.slane %v4206, %v4210
        %v4213 = vmul.f32 %v4048, %v4211
        %v4214 = vmul.f32 %v4053, %v4211
        %v4215 = vmul.f32 %v4058, %v4211
        %v4216 = vmul.f32 %v4063, %v4211
        %v4217 = vmul.f32 %v4068, %v4211
        %v4218 = vmul.f32 %v4073, %v4211
        %v4219 = vmul.f32 %v4078, %v4211
        %v4220 = vmul.f32 %v4083, %v4211
        %v4221 = vmul.f32 %v4088, %v4211
        %v4222 = vmul.f32 %v4093, %v4211
        %v4223 = vmul.f32 %v4098, %v4211
        %v4224 = vmul.f32 %v4103, %v4211
        %v4225 = vmul.f32 %v4108, %v4211
        %v4226 = vmul.f32 %v4113, %v4211
        %v4227 = vmul.f32 %v4118, %v4211
        %v4228 = vmul.f32 %v4123, %v4211
        %v4229 = vmul.f32 %v4128, %v4211
        %v4230 = vmul.f32 %v4133, %v4211
        %v4231 = vmul.f32 %v4138, %v4211
        %v4232 = vmul.f32 %v4143, %v4211
        %v4233 = vmul.f32 %v4148, %v4211
        %v4234 = vmul.f32 %v4153, %v4211
        %v4235 = vmul.f32 %v4158, %v4211
        %v4236 = vmul.f32 %v4163, %v4211
        %v4237 = vmul.f32 %v4168, %v4211
        %v4238 = vmul.f32 %v4173, %v4211
        %v4239 = vmul.f32 %v4178, %v4211
        %v4240 = vmul.f32 %v4183, %v4211
        %v4241 = vmul.f32 %v4188, %v4211
        %v4242 = vmul.f32 %v4193, %v4211
        %v4243 = vmul.f32 %v4198, %v4211
        %v4244 = vmul.f32 %v4203, %v4211
        %v4245 = vld [vmem:[%s6] sm:$0x1]
        %v4247 = vlaneseq
        %v4248 = vshrl.u32 %v4247, 7
        %v4249 = vsub.s32 0, %v4248
        %v4250 = vrot.slane %v4245, %v4249
        %v4252 = vadd.f32 %v4213, %v4250
        %v4253 = vadd.f32 %v4214, %v4250
        %v4254 = vadd.f32 %v4215, %v4250
        %v4255 = vadd.f32 %v4216, %v4250
        %v4256 = vadd.f32 %v4217, %v4250
        %v4257 = vadd.f32 %v4218, %v4250
        %v4258 = vadd.f32 %v4219, %v4250
        %v4259 = vadd.f32 %v4220, %v4250
        %v4260 = vadd.f32 %v4221, %v4250
        %v4261 = vadd.f32 %v4222, %v4250
        %v4262 = vadd.f32 %v4223, %v4250
        %v4263 = vadd.f32 %v4224, %v4250
        %v4264 = vadd.f32 %v4225, %v4250
        %v4265 = vadd.f32 %v4226, %v4250
        %v4266 = vadd.f32 %v4227, %v4250
        %v4267 = vadd.f32 %v4228, %v4250
        %v4268 = vadd.f32 %v4229, %v4250
        %v4269 = vadd.f32 %v4230, %v4250
        %v4270 = vadd.f32 %v4231, %v4250
        %v4271 = vadd.f32 %v4232, %v4250
        %v4272 = vadd.f32 %v4233, %v4250
        %v4273 = vadd.f32 %v4234, %v4250
        %v4274 = vadd.f32 %v4235, %v4250
        %v4275 = vadd.f32 %v4236, %v4250
        %v4276 = vadd.f32 %v4237, %v4250
        %v4277 = vadd.f32 %v4238, %v4250
        %v4278 = vadd.f32 %v4239, %v4250
        %v4279 = vadd.f32 %v4240, %v4250
        %v4280 = vadd.f32 %v4241, %v4250
        %v4281 = vadd.f32 %v4242, %v4250
        %v4282 = vadd.f32 %v4243, %v4250
        %v4283 = vadd.f32 %v4244, %v4250
        %v4284 = vmax.f32 %v4252, 0.0
        %v4285 = vmax.f32 %v4253, 0.0
        %v4286 = vmax.f32 %v4254, 0.0
        %v4287 = vmax.f32 %v4255, 0.0
        %v4288 = vmax.f32 %v4256, 0.0
        %v4289 = vmax.f32 %v4257, 0.0
        %v4290 = vmax.f32 %v4258, 0.0
        %v4291 = vmax.f32 %v4259, 0.0
        %v4292 = vmax.f32 %v4260, 0.0
        %v4293 = vmax.f32 %v4261, 0.0
        %v4294 = vmax.f32 %v4262, 0.0
        %v4295 = vmax.f32 %v4263, 0.0
        %v4296 = vmax.f32 %v4264, 0.0
        %v4297 = vmax.f32 %v4265, 0.0
        %v4298 = vmax.f32 %v4266, 0.0
        %v4299 = vmax.f32 %v4267, 0.0
        %v4300 = vmax.f32 %v4268, 0.0
        %v4301 = vmax.f32 %v4269, 0.0
        %v4302 = vmax.f32 %v4270, 0.0
        %v4303 = vmax.f32 %v4271, 0.0
        %v4304 = vmax.f32 %v4272, 0.0
        %v4305 = vmax.f32 %v4273, 0.0
        %v4306 = vmax.f32 %v4274, 0.0
        %v4307 = vmax.f32 %v4275, 0.0
        %v4308 = vmax.f32 %v4276, 0.0
        %v4309 = vmax.f32 %v4277, 0.0
        %v4310 = vmax.f32 %v4278, 0.0
        %v4311 = vmax.f32 %v4279, 0.0
        %v4312 = vmax.f32 %v4280, 0.0
        %v4313 = vmax.f32 %v4281, 0.0
        %v4314 = vmax.f32 %v4282, 0.0
        %v4315 = vmax.f32 %v4283, 0.0
        %4348 = vrot.lane.b32.xlu0 %v2593, 16
        %v4349 = vpop.permute.xlu0 %4348
        %4350 = vrot.lane.b32.xlu0 %v2594, 16
        %v4351 = vpop.permute.xlu0 %4350
        %4352 = vrot.lane.b32.xlu0 %v2595, 16
        %v4353 = vpop.permute.xlu0 %4352
        %4354 = vrot.lane.b32.xlu0 %v2596, 16
        %v4355 = vpop.permute.xlu0 %4354
        %4356 = vrot.lane.b32.xlu0 %v2597, 16
        %v4357 = vpop.permute.xlu0 %4356
        %4358 = vrot.lane.b32.xlu0 %v2598, 16
        %v4359 = vpop.permute.xlu0 %4358
        %4360 = vrot.lane.b32.xlu0 %v2599, 16
        %v4361 = vpop.permute.xlu0 %4360
        %4362 = vrot.lane.b32.xlu0 %v2600, 16
        %v4363 = vpop.permute.xlu0 %4362
        %4364 = vrot.lane.b32.xlu0 %v2601, 16
        %v4365 = vpop.permute.xlu0 %4364
        %4366 = vrot.lane.b32.xlu0 %v2602, 16
        %v4367 = vpop.permute.xlu0 %4366
        %4368 = vrot.lane.b32.xlu0 %v2603, 16
        %v4369 = vpop.permute.xlu0 %4368
        %4370 = vrot.lane.b32.xlu0 %v2604, 16
        %v4371 = vpop.permute.xlu0 %4370
        %4372 = vrot.lane.b32.xlu0 %v2605, 16
        %v4373 = vpop.permute.xlu0 %4372
        %4374 = vrot.lane.b32.xlu0 %v2606, 16
        %v4375 = vpop.permute.xlu0 %4374
        %4376 = vrot.lane.b32.xlu0 %v2607, 16
        %v4377 = vpop.permute.xlu0 %4376
        %4378 = vrot.lane.b32.xlu0 %v2608, 16
        %v4379 = vpop.permute.xlu0 %4378
        %4380 = vrot.lane.b32.xlu0 %v2609, 16
        %v4381 = vpop.permute.xlu0 %4380
        %4382 = vrot.lane.b32.xlu0 %v2610, 16
        %v4383 = vpop.permute.xlu0 %4382
        %4384 = vrot.lane.b32.xlu0 %v2611, 16
        %v4385 = vpop.permute.xlu0 %4384
        %4386 = vrot.lane.b32.xlu0 %v2612, 16
        %v4387 = vpop.permute.xlu0 %4386
        %4388 = vrot.lane.b32.xlu0 %v2613, 16
        %v4389 = vpop.permute.xlu0 %4388
        %4390 = vrot.lane.b32.xlu0 %v2614, 16
        %v4391 = vpop.permute.xlu0 %4390
        %4392 = vrot.lane.b32.xlu0 %v2615, 16
        %v4393 = vpop.permute.xlu0 %4392
        %4394 = vrot.lane.b32.xlu0 %v2616, 16
        %v4395 = vpop.permute.xlu0 %4394
        %4396 = vrot.lane.b32.xlu0 %v2617, 16
        %v4397 = vpop.permute.xlu0 %4396
        %4398 = vrot.lane.b32.xlu0 %v2618, 16
        %v4399 = vpop.permute.xlu0 %4398
        %4400 = vrot.lane.b32.xlu0 %v2619, 16
        %v4401 = vpop.permute.xlu0 %4400
        %4402 = vrot.lane.b32.xlu0 %v2620, 16
        %v4403 = vpop.permute.xlu0 %4402
        %4404 = vrot.lane.b32.xlu0 %v2621, 16
        %v4405 = vpop.permute.xlu0 %4404
        %4406 = vrot.lane.b32.xlu0 %v2622, 16
        %v4407 = vpop.permute.xlu0 %4406
        %4408 = vrot.lane.b32.xlu0 %v2623, 16
        %v4409 = vpop.permute.xlu0 %4408
        %4410 = vrot.lane.b32.xlu0 %v2624, 16
        %v4411 = vpop.permute.xlu0 %4410
        %4476 = vrot.lane.b32.xlu0 %v4284, 16
        %v4477 = vpop.permute.xlu0 %4476
        %4478 = vrot.lane.b32.xlu0 %v4285, 16
        %v4479 = vpop.permute.xlu0 %4478
        %4480 = vrot.lane.b32.xlu0 %v4286, 16
        %v4481 = vpop.permute.xlu0 %4480
        %4482 = vrot.lane.b32.xlu0 %v4287, 16
        %v4483 = vpop.permute.xlu0 %4482
        %4484 = vrot.lane.b32.xlu0 %v4288, 16
        %v4485 = vpop.permute.xlu0 %4484
        %4486 = vrot.lane.b32.xlu0 %v4289, 16
        %v4487 = vpop.permute.xlu0 %4486
        %4488 = vrot.lane.b32.xlu0 %v4290, 16
        %v4489 = vpop.permute.xlu0 %4488
        %4490 = vrot.lane.b32.xlu0 %v4291, 16
        %v4491 = vpop.permute.xlu0 %4490
        %4492 = vrot.lane.b32.xlu0 %v4292, 16
        %v4493 = vpop.permute.xlu0 %4492
        %4494 = vrot.lane.b32.xlu0 %v4293, 16
        %v4495 = vpop.permute.xlu0 %4494
        %4496 = vrot.lane.b32.xlu0 %v4294, 16
        %v4497 = vpop.permute.xlu0 %4496
        %4498 = vrot.lane.b32.xlu0 %v4295, 16
        %v4499 = vpop.permute.xlu0 %4498
        %4500 = vrot.lane.b32.xlu0 %v4296, 16
        %v4501 = vpop.permute.xlu0 %4500
        %4502 = vrot.lane.b32.xlu0 %v4297, 16
        %v4503 = vpop.permute.xlu0 %4502
        %4504 = vrot.lane.b32.xlu0 %v4298, 16
        %v4505 = vpop.permute.xlu0 %4504
        %4506 = vrot.lane.b32.xlu0 %v4299, 16
        %v4507 = vpop.permute.xlu0 %4506
        %4508 = vrot.lane.b32.xlu0 %v4300, 16
        %v4509 = vpop.permute.xlu0 %4508
        %4510 = vrot.lane.b32.xlu0 %v4301, 16
        %v4511 = vpop.permute.xlu0 %4510
        %4512 = vrot.lane.b32.xlu0 %v4302, 16
        %v4513 = vpop.permute.xlu0 %4512
        %4514 = vrot.lane.b32.xlu0 %v4303, 16
        %v4515 = vpop.permute.xlu0 %4514
        %4516 = vrot.lane.b32.xlu0 %v4304, 16
        %v4517 = vpop.permute.xlu0 %4516
        %4518 = vrot.lane.b32.xlu0 %v4305, 16
        %v4519 = vpop.permute.xlu0 %4518
        %4520 = vrot.lane.b32.xlu0 %v4306, 16
        %v4521 = vpop.permute.xlu0 %4520
        %4522 = vrot.lane.b32.xlu0 %v4307, 16
        %v4523 = vpop.permute.xlu0 %4522
        %4524 = vrot.lane.b32.xlu0 %v4308, 16
        %v4525 = vpop.permute.xlu0 %4524
        %4526 = vrot.lane.b32.xlu0 %v4309, 16
        %v4527 = vpop.permute.xlu0 %4526
        %4528 = vrot.lane.b32.xlu0 %v4310, 16
        %v4529 = vpop.permute.xlu0 %4528
        %4530 = vrot.lane.b32.xlu0 %v4311, 16
        %v4531 = vpop.permute.xlu0 %4530
        %4532 = vrot.lane.b32.xlu0 %v4312, 16
        %v4533 = vpop.permute.xlu0 %4532
        %4534 = vrot.lane.b32.xlu0 %v4313, 16
        %v4535 = vpop.permute.xlu0 %4534
        %4536 = vrot.lane.b32.xlu0 %v4314, 16
        %v4537 = vpop.permute.xlu0 %4536
        %4538 = vrot.lane.b32.xlu0 %v4315, 16
        %v4539 = vpop.permute.xlu0 %4538
        %vm4572 = vcmask 261120
        %v4573 = vsel %vm4572, %v4284, %v4349
        %v4574 = vsel %vm4572, %v4285, %v4351
        %v4575 = vsel %vm4572, %v4286, %v4353
        %v4576 = vsel %vm4572, %v4287, %v4355
        %v4577 = vsel %vm4572, %v4288, %v4357
        %v4578 = vsel %vm4572, %v4289, %v4359
        %v4579 = vsel %vm4572, %v4290, %v4361
        %v4580 = vsel %vm4572, %v4291, %v4363
        %v4581 = vsel %vm4572, %v4292, %v4365
        %v4582 = vsel %vm4572, %v4293, %v4367
        %v4583 = vsel %vm4572, %v4294, %v4369
        %v4584 = vsel %vm4572, %v4295, %v4371
        %v4585 = vsel %vm4572, %v4296, %v4373
        %v4586 = vsel %vm4572, %v4297, %v4375
        %v4587 = vsel %vm4572, %v4298, %v4377
        %v4588 = vsel %vm4572, %v4299, %v4379
        %v4589 = vsel %vm4572, %v4300, %v4381
        %v4590 = vsel %vm4572, %v4301, %v4383
        %v4591 = vsel %vm4572, %v4302, %v4385
        %v4592 = vsel %vm4572, %v4303, %v4387
        %v4593 = vsel %vm4572, %v4304, %v4389
        %v4594 = vsel %vm4572, %v4305, %v4391
        %v4595 = vsel %vm4572, %v4306, %v4393
        %v4596 = vsel %vm4572, %v4307, %v4395
        %v4597 = vsel %vm4572, %v4308, %v4397
        %v4598 = vsel %vm4572, %v4309, %v4399
        %v4599 = vsel %vm4572, %v4310, %v4401
        %v4600 = vsel %vm4572, %v4311, %v4403
        %v4601 = vsel %vm4572, %v4312, %v4405
        %v4602 = vsel %vm4572, %v4313, %v4407
        %v4603 = vsel %vm4572, %v4314, %v4409
        %v4604 = vsel %vm4572, %v4315, %v4411
        %vm4605 = vcmask 392192
        %v4606 = vsel %vm4605, %v4573, %v4477
        %v4607 = vsel %vm4605, %v4574, %v4479
        %v4608 = vsel %vm4605, %v4575, %v4481
        %v4609 = vsel %vm4605, %v4576, %v4483
        %v4610 = vsel %vm4605, %v4577, %v4485
        %v4611 = vsel %vm4605, %v4578, %v4487
        %v4612 = vsel %vm4605, %v4579, %v4489
        %v4613 = vsel %vm4605, %v4580, %v4491
        %v4614 = vsel %vm4605, %v4581, %v4493
        %v4615 = vsel %vm4605, %v4582, %v4495
        %v4616 = vsel %vm4605, %v4583, %v4497
        %v4617 = vsel %vm4605, %v4584, %v4499
        %v4618 = vsel %vm4605, %v4585, %v4501
        %v4619 = vsel %vm4605, %v4586, %v4503
        %v4620 = vsel %vm4605, %v4587, %v4505
        %v4621 = vsel %vm4605, %v4588, %v4507
        %v4622 = vsel %vm4605, %v4589, %v4509
        %v4623 = vsel %vm4605, %v4590, %v4511
        %v4624 = vsel %vm4605, %v4591, %v4513
        %v4625 = vsel %vm4605, %v4592, %v4515
        %v4626 = vsel %vm4605, %v4593, %v4517
        %v4627 = vsel %vm4605, %v4594, %v4519
        %v4628 = vsel %vm4605, %v4595, %v4521
        %v4629 = vsel %vm4605, %v4596, %v4523
        %v4630 = vsel %vm4605, %v4597, %v4525
        %v4631 = vsel %vm4605, %v4598, %v4527
        %v4632 = vsel %vm4605, %v4599, %v4529
        %v4633 = vsel %vm4605, %v4600, %v4531
        %v4634 = vsel %vm4605, %v4601, %v4533
        %v4635 = vsel %vm4605, %v4602, %v4535
        %v4636 = vsel %vm4605, %v4603, %v4537
        %v4637 = vsel %vm4605, %v4604, %v4539
        %vm4638 = vcmask 457728
        %4639 = vst.msk [vmem:[%s271] sm:$0xff] %vm4638, %v4606
        %4640 = vst.msk [vmem:[%s271 + $0x8] sm:$0xff] %vm4638, %v4607
        %4641 = vst.msk [vmem:[%s271 + $0x10] sm:$0xff] %vm4638, %v4608
        %4642 = vst.msk [vmem:[%s271 + $0x18] sm:$0xff] %vm4638, %v4609
        %4643 = vst.msk [vmem:[%s271 + $0x20] sm:$0xff] %vm4638, %v4610
        %4644 = vst.msk [vmem:[%s271 + $0x28] sm:$0xff] %vm4638, %v4611
        %4645 = vst.msk [vmem:[%s271 + $0x30] sm:$0xff] %vm4638, %v4612
        %4646 = vst.msk [vmem:[%s271 + $0x38] sm:$0xff] %vm4638, %v4613
        %4647 = vst.msk [vmem:[%s271 + $0x40] sm:$0xff] %vm4638, %v4614
        %4648 = vst.msk [vmem:[%s271 + $0x48] sm:$0xff] %vm4638, %v4615
        %4649 = vst.msk [vmem:[%s271 + $0x50] sm:$0xff] %vm4638, %v4616
        %4650 = vst.msk [vmem:[%s271 + $0x58] sm:$0xff] %vm4638, %v4617
        %4651 = vst.msk [vmem:[%s271 + $0x60] sm:$0xff] %vm4638, %v4618
        %4652 = vst.msk [vmem:[%s271 + $0x68] sm:$0xff] %vm4638, %v4619
        %4653 = vst.msk [vmem:[%s271 + $0x70] sm:$0xff] %vm4638, %v4620
        %4654 = vst.msk [vmem:[%s271 + $0x78] sm:$0xff] %vm4638, %v4621
        %4655 = vst.msk [vmem:[%s271 + $0x80] sm:$0xff] %vm4638, %v4622
        %4656 = vst.msk [vmem:[%s271 + $0x88] sm:$0xff] %vm4638, %v4623
        %4657 = vst.msk [vmem:[%s271 + $0x90] sm:$0xff] %vm4638, %v4624
        %4658 = vst.msk [vmem:[%s271 + $0x98] sm:$0xff] %vm4638, %v4625
        %4659 = vst.msk [vmem:[%s271 + $0xa0] sm:$0xff] %vm4638, %v4626
        %4660 = vst.msk [vmem:[%s271 + $0xa8] sm:$0xff] %vm4638, %v4627
        %4661 = vst.msk [vmem:[%s271 + $0xb0] sm:$0xff] %vm4638, %v4628
        %4662 = vst.msk [vmem:[%s271 + $0xb8] sm:$0xff] %vm4638, %v4629
        %4663 = vst.msk [vmem:[%s271 + $0xc0] sm:$0xff] %vm4638, %v4630
        %4664 = vst.msk [vmem:[%s271 + $0xc8] sm:$0xff] %vm4638, %v4631
        %4665 = vst.msk [vmem:[%s271 + $0xd0] sm:$0xff] %vm4638, %v4632
        %4666 = vst.msk [vmem:[%s271 + $0xd8] sm:$0xff] %vm4638, %v4633
        %4667 = vst.msk [vmem:[%s271 + $0xe0] sm:$0xff] %vm4638, %v4634
        %4668 = vst.msk [vmem:[%s271 + $0xe8] sm:$0xff] %vm4638, %v4635
        %4669 = vst.msk [vmem:[%s271 + $0xf0] sm:$0xff] %vm4638, %v4636
        %4670 = vst.msk [vmem:[%s271 + $0xf8] sm:$0xff] %vm4638, %v4637
        %s4671 = sand.u32 %s181, 1
        %s4672 = scalar_lea.sflag [#allocation7], %s4671
        %s4673 = sand.u32 %s181, 1
        %s4674 = smul.addr %s4673, 256
        %s4675 = scalar_lea.vmem [#allocation6], %s4674
        // Predicated region
        $region49: #{inception_x.1} parent=47 // pred_check
          %p4676 = pneg %p191
        $region50: #{inception_x.1} parent=47 // pred_check_branch
          %4678 = sbr.rel (%p4676) target = $region52
        $region51: #{inception_x.1} parent=47 // pred_region
          %s4679 = smul.u32 32, %s21
          %s4681 = ssub.s32 4096, 4096
          %4682 = vsyncadd %s4672, %s4681
          %s4683 = smul.addr %s4679, 128
          %s4684 = scalar_lea.hbm %s7, %s4683
          %s4685 = sshll.u32 %s4675, 4
          %s4686 = int_to_ptr.vmem [resolvable:$true] %s4685
          %4691 = dma.vmem_to_hbm [thread:$0]  %s4686, 4096, %s4684, %s4672, 128, 128, 8
        $region52: #{inception_x.1} parent=47 // pred_fallthru
          _
      $region48: #{inception_x.1} parent=5 // pred_fallthru
        _
      %p4692 = scmp.le.s32.totalorder 2, %s16
      // Predicated region
      $region53: #{inception_x.1} parent=5 // pred_check
        %p4693 = pneg %p4692
      $region54: #{inception_x.1} parent=5 // pred_check_branch
        %4695 = sbr.rel (%p4693) target = $region56
      $region55: #{inception_x.1} parent=5 // pred_region
        %s4696 = ssub.s32 %s16, 2
        // Predicated region
        $region57: #{inception_x.1} parent=55 // pred_check
          %p4697 = pneg %p197
        $region58: #{inception_x.1} parent=55 // pred_check_branch
          %4699 = sbr.rel (%p4697) target = $region60
        $region59: #{inception_x.1} parent=55 // pred_region
          %s4700 = sand.u32 %s182, 1
          %s4701 = scalar_lea.sflag [#allocation7], %s4700
          %s4702 = sand.u32 %s182, 1
          %s4703 = smul.addr %s4702, 256
          %s4704 = scalar_lea.vmem [#allocation6], %s4703
          %4705 = dma.done %s4701, 4096
        $region60: #{inception_x.1} parent=55 // pred_fallthru
          _
      $region56: #{inception_x.1} parent=5 // pred_fallthru
        _
    $region6: #{inception_x.1} parent=1 // loop_footer
      %s20 = sadd.s32 1, %s16
    $region7: #{inception_x.1} parent=1 // loop_footer_branch
      %15 = sbr.rel target = $region3
    $region8: #{inception_x.1} parent=1 // loop_exit
      _
    %4706 = vsyncpa [#allocation7], 1
    %s4707 = scalar_lea.sflag [#allocation7], 1
    %4708 = vsyncpa %s4707, 1

</llo_original>
